<compile_context>
chip_gen: v7x
topology: tpu7x:2x2x1
jax: 0.10.0
libtpu: 0.0.40
codegen_flags: <defaults>
</compile_context>

<pallas_src>
import jax
import jax.numpy as jnp
from jax.experimental import pallas as pl
from jax.experimental.pallas import tpu as pltpu

# ----- small, self-consistent config (mirrors the module's hyper-parameter structure) -----
VOCAB_SIZE = 64
VOCAB_PAD  = 128         # lm_head output padded to a full 128-lane width
N_EMBD     = 32
N_HEAD     = 4
HEAD_SIZE  = N_EMBD // N_HEAD
N_LAYER    = 2
BLOCK_SIZE = 16          # max context length (positional table size)
EPS        = 1e-5        # nn.LayerNorm default


def _layernorm(x, w, b):
    mu  = jnp.mean(x, axis=-1, keepdims=True)
    var = jnp.mean((x - mu) ** 2, axis=-1, keepdims=True)
    return (x - mu) * jax.lax.rsqrt(var + EPS) * w + b


# ---------------------------------------------------------------------------
# Single fused Pallas kernel: all N_LAYER transformer blocks + final LN + lm_head
# (one batch element per grid step; everything stays resident in VMEM)
# ---------------------------------------------------------------------------
def fused_forward_kernel(x_ref,
                         ln1w_ref, ln1b_ref, wqkv_ref, wproj_ref, bproj_ref,
                         ln2w_ref, ln2b_ref, w1_ref, b1_ref, w2_ref, b2_ref,
                         lnfw_ref, lnfb_ref, wlm_ref, blm_ref,
                         out_ref):
    T, C = x_ref.shape[1], x_ref.shape[2]
    x = x_ref[...].reshape(T, C)                      # (rows, C) f32

    # constant masks (built once, reused across layers/heads)
    row = jax.lax.broadcasted_iota(jnp.int32, (T, T), 0)
    col = jax.lax.broadcasted_iota(jnp.int32, (T, T), 1)
    causal = col <= row                               # tril
    lane = jax.lax.broadcasted_iota(jnp.int32, (1, C), 1)
    # NOTE: reference scales by C**-0.5 with C = n_embd (not head_size) — kept intentionally.
    scale = jnp.float32(1.0) / jnp.sqrt(jnp.float32(C))

    for l in range(N_LAYER):                          # static unroll; weights resident in VMEM
        # ---- multi-head causal self-attention on LN1(x) ----
        xn = _layernorm(x, ln1w_ref[l], ln1b_ref[l])
        qkv = jnp.dot(xn.astype(jnp.bfloat16), wqkv_ref[l],
                      preferred_element_type=jnp.float32)          # (T, 3C), fused Q|K|V
        q = qkv[:, 0:C]
        k = qkv[:, C:2 * C]
        v = qkv[:, 2 * C:3 * C]
        k_bf = k.astype(jnp.bfloat16)

        # Per-head compute via lane masks: head-h lanes of q/v are kept, the rest zeroed.
        # P_h @ (v * mask_h) lands head h's output directly in its final lane positions,
        # so the summed result is already the "concatenated" multi-head output.
        sa = jnp.zeros((T, C), jnp.float32)
        for h in range(N_HEAD):
            head_mask = jnp.logical_and(lane >= h * HEAD_SIZE,
                                        lane < (h + 1) * HEAD_SIZE)      # (1, C)
            qm = jnp.where(head_mask, q, 0.0).astype(jnp.bfloat16)
            vm = jnp.where(head_mask, v, 0.0).astype(jnp.bfloat16)
            s = jnp.einsum('td,sd->ts', qm, k_bf,
                           preferred_element_type=jnp.float32) * scale  # (T, T)
            s = jnp.where(causal, s, -jnp.inf)
            p = jnp.exp(s - jnp.max(s, axis=-1, keepdims=True))
            p = p * pl.reciprocal(jnp.sum(p, axis=-1, keepdims=True), approx=True)
            # dropout(p) is identity in eval mode
            sa = sa + jnp.dot(p.astype(jnp.bfloat16), vm,
                              preferred_element_type=jnp.float32)
        sa = jnp.dot(sa.astype(jnp.bfloat16), wproj_ref[l],
                     preferred_element_type=jnp.float32) + bproj_ref[l]
        x = x + sa

        # ---- feed-forward on LN2(x) ----
        xn2 = _layernorm(x, ln2w_ref[l], ln2b_ref[l])
        h1 = jnp.dot(xn2.astype(jnp.bfloat16), w1_ref[l],
                     preferred_element_type=jnp.float32) + b1_ref[l]
        h1 = jnp.maximum(h1, 0.0)                                       # ReLU
        ff = jnp.dot(h1.astype(jnp.bfloat16), w2_ref[l],
                     preferred_element_type=jnp.float32) + b2_ref[l]
        # dropout(ff) is identity in eval mode
        x = x + ff

    # ---- final LayerNorm + lm_head (lane-padded to 128 outputs) ----
    xn = _layernorm(x, lnfw_ref[0], lnfb_ref[0])
    logits = jnp.dot(xn.astype(jnp.bfloat16), wlm_ref[...],
                     preferred_element_type=jnp.float32) + blm_ref[0]
    out_ref[...] = logits.reshape(1, T, VOCAB_PAD)


# ---------------------------------------------------------------------------
# pallas_call wrapper: grid over batch ("parallel" => both TCs on v7x)
# ---------------------------------------------------------------------------
def _rep_spec(shape):
    # full-array block, replicated across the batch grid
    n = len(shape)
    return pl.BlockSpec(shape, lambda b, _n=n: (0,) * _n)


def bigram_forward_fused(params, x):
    B, T, C = x.shape
    blk = params["blocks_stacked"]
    args = (x,
            blk["ln1_w"], blk["ln1_b"], blk["wqkv"], blk["wproj"], blk["bproj"],
            blk["ln2_w"], blk["ln2_b"], blk["w1"], blk["b1"], blk["w2"], blk["b2"],
            params["ln_f_w"], params["ln_f_b"], params["lm_w_pad"], params["lm_b_pad"])

    in_specs = [pl.BlockSpec((1, T, C), lambda b: (b, 0, 0))]
    in_specs += [_rep_spec(a.shape) for a in args[1:]]

    logits_pad = pl.pallas_call(
        fused_forward_kernel,
        grid=(B,),
        in_specs=in_specs,
        out_specs=pl.BlockSpec((1, T, VOCAB_PAD), lambda b: (b, 0, 0)),
        out_shape=jax.ShapeDtypeStruct((B, T, VOCAB_PAD), jnp.float32),
        compiler_params=pltpu.CompilerParams(dimension_semantics=("parallel",)),
    )(*args)
    return logits_pad[:, :, :VOCAB_SIZE]


# ---------------------------------------------------------------------------
# Parameter init (deterministic) and model forward
# ---------------------------------------------------------------------------
def init_params(key):
    def normal(k, shape, std=0.02):
        return (std * jax.random.normal(k, shape)).astype(jnp.float32)

    keys = iter(jax.random.split(key, 3 + N_LAYER * 6))
    tok = normal(next(keys), (VOCAB_SIZE, N_EMBD))
    pos = normal(next(keys), (BLOCK_SIZE, N_EMBD))
    lm_w = normal(next(keys), (N_EMBD, VOCAB_SIZE))
    lm_b = jnp.zeros((VOCAB_SIZE,), jnp.float32)

    ln1_w, ln1_b, wqkv, wproj, bproj = [], [], [], [], []
    ln2_w, ln2_b, w1, b1, w2, b2 = [], [], [], [], [], []
    for _ in range(N_LAYER):
        wq = normal(next(keys), (N_EMBD, N_EMBD))
        wk = normal(next(keys), (N_EMBD, N_EMBD))
        wv = normal(next(keys), (N_EMBD, N_EMBD))
        wqkv.append(jnp.concatenate([wq, wk, wv], axis=1))     # fused (C, 3C)
        wproj.append(normal(next(keys), (N_EMBD, N_EMBD)))
        bproj.append(jnp.zeros((N_EMBD,), jnp.float32))
        ln1_w.append(jnp.ones((N_EMBD,), jnp.float32))
        ln1_b.append(jnp.zeros((N_EMBD,), jnp.float32))
        ln2_w.append(jnp.ones((N_EMBD,), jnp.float32))
        ln2_b.append(jnp.zeros((N_EMBD,), jnp.float32))
        w1.append(normal(next(keys), (N_EMBD, 4 * N_EMBD)))
        b1.append(jnp.zeros((4 * N_EMBD,), jnp.float32))
        w2.append(normal(next(keys), (4 * N_EMBD, N_EMBD)))
        b2.append(jnp.zeros((N_EMBD,), jnp.float32))

    stack = lambda xs: jnp.stack(xs, axis=0)
    pad_cols = VOCAB_PAD - VOCAB_SIZE
    return {
        "tok_emb": tok,
        "pos_emb": pos,
        "ln_f_w": jnp.ones((1, N_EMBD), jnp.float32),
        "ln_f_b": jnp.zeros((1, N_EMBD), jnp.float32),
        # lane-dense lm_head: pad vocab dim 64 -> 128 with zeros (sliced off in JAX)
        "lm_w_pad": jnp.pad(lm_w, ((0, 0), (0, pad_cols))).astype(jnp.bfloat16),
        "lm_b_pad": jnp.pad(lm_b, (0, pad_cols)).reshape(1, VOCAB_PAD),
        "blocks_stacked": {
            "ln1_w": stack(ln1_w), "ln1_b": stack(ln1_b),
            "wqkv": stack(wqkv).astype(jnp.bfloat16),
            "wproj": stack(wproj).astype(jnp.bfloat16),
            "bproj": stack(bproj),
            "ln2_w": stack(ln2_w), "ln2_b": stack(ln2_b),
            "w1": stack(w1).astype(jnp.bfloat16), "b1": stack(b1),
            "w2": stack(w2).astype(jnp.bfloat16), "b2": stack(b2),
        },
    }


def bigram_lm_forward(params, idx, targets=None):
    B, T = idx.shape
    tok_emb = params["tok_emb"][idx]                 # (B, T, C) gather (plain-JAX glue)
    pos_emb = params["pos_emb"][:T]                  # (T, C)
    x = (tok_emb + pos_emb[None, :, :]).astype(jnp.float32)

    logits = bigram_forward_fused(params, x)         # (B, T, vocab)

    if targets is None:
        loss = None
    else:
        flat_logits = logits.reshape(B * T, VOCAB_SIZE)
        flat_tgt = targets.reshape(B * T)
        logz = jax.nn.logsumexp(flat_logits, axis=-1)
        picked = jnp.take_along_axis(flat_logits, flat_tgt[:, None], axis=-1)[:, 0]
        loss = jnp.mean(logz - picked)
    return logits, loss


if __name__ == "__main__":
    key = jax.random.PRNGKey(0)
    pkey, ikey = jax.random.split(key)
    params = init_params(pkey)

    B, T = 2, 8
    idx = jax.random.randint(ikey, (B, T), 0, VOCAB_SIZE, dtype=jnp.int32)

    logits, loss = bigram_lm_forward(params, idx, targets=None)
    logits = jax.block_until_ready(logits)
    assert logits.shape == (B, T, VOCAB_SIZE)
    assert jnp.all(jnp.isfinite(logits))
    print("KERNEL_OK")
</pallas_src>

<mosaic_0001>
module attributes {stable_mosaic.version = 11 : i64} {
  func.func @fused_forward_kernel(%arg0: i32, %arg1: memref<1x8x32xf32, #tpu.memory_space<vmem>>, %arg2: memref<2x32xf32, #tpu.memory_space<vmem>>, %arg3: memref<2x32xf32, #tpu.memory_space<vmem>>, %arg4: memref<2x32x96xbf16, #tpu.memory_space<vmem>>, %arg5: memref<2x32x32xbf16, #tpu.memory_space<vmem>>, %arg6: memref<2x32xf32, #tpu.memory_space<vmem>>, %arg7: memref<2x32xf32, #tpu.memory_space<vmem>>, %arg8: memref<2x32xf32, #tpu.memory_space<vmem>>, %arg9: memref<2x32x128xbf16, #tpu.memory_space<vmem>>, %arg10: memref<2x128xf32, #tpu.memory_space<vmem>>, %arg11: memref<2x128x32xbf16, #tpu.memory_space<vmem>>, %arg12: memref<2x32xf32, #tpu.memory_space<vmem>>, %arg13: memref<1x32xf32, #tpu.memory_space<vmem>>, %arg14: memref<1x32xf32, #tpu.memory_space<vmem>>, %arg15: memref<32x128xbf16, #tpu.memory_space<vmem>>, %arg16: memref<1x128xf32, #tpu.memory_space<vmem>>, %arg17: memref<1x8x128xf32, #tpu.memory_space<vmem>>) attributes {dimension_semantics = [#tpu.dimension_semantics<parallel>], iteration_bounds = array<i64: 2>, scalar_prefetch = 0 : i64, scratch_operands = 0 : i64, tpu.core_type = #tpu.core_type<tc>, window_params = [{transform_indices = @transform_0, window_bounds = array<i64: 1, 8, 32>}, {pipeline_mode = #tpu.pipeline_mode<synchronous>, transform_indices = @transform_1, window_bounds = array<i64: 2, 32>}, {pipeline_mode = #tpu.pipeline_mode<synchronous>, transform_indices = @transform_2, window_bounds = array<i64: 2, 32>}, {pipeline_mode = #tpu.pipeline_mode<synchronous>, transform_indices = @transform_3, window_bounds = array<i64: 2, 32, 96>}, {pipeline_mode = #tpu.pipeline_mode<synchronous>, transform_indices = @transform_4, window_bounds = array<i64: 2, 32, 32>}, {pipeline_mode = #tpu.pipeline_mode<synchronous>, transform_indices = @transform_5, window_bounds = array<i64: 2, 32>}, {pipeline_mode = #tpu.pipeline_mode<synchronous>, transform_indices = @transform_6, window_bounds = array<i64: 2, 32>}, {pipeline_mode = #tpu.pipeline_mode<synchronous>, transform_indices = @transform_7, window_bounds = array<i64: 2, 32>}, {pipeline_mode = #tpu.pipeline_mode<synchronous>, transform_indices = @transform_8, window_bounds = array<i64: 2, 32, 128>}, {pipeline_mode = #tpu.pipeline_mode<synchronous>, transform_indices = @transform_9, window_bounds = array<i64: 2, 128>}, {pipeline_mode = #tpu.pipeline_mode<synchronous>, transform_indices = @transform_10, window_bounds = array<i64: 2, 128, 32>}, {pipeline_mode = #tpu.pipeline_mode<synchronous>, transform_indices = @transform_11, window_bounds = array<i64: 2, 32>}, {pipeline_mode = #tpu.pipeline_mode<synchronous>, transform_indices = @transform_12, window_bounds = array<i64: 1, 32>}, {pipeline_mode = #tpu.pipeline_mode<synchronous>, transform_indices = @transform_13, window_bounds = array<i64: 1, 32>}, {pipeline_mode = #tpu.pipeline_mode<synchronous>, transform_indices = @transform_14, window_bounds = array<i64: 32, 128>}, {pipeline_mode = #tpu.pipeline_mode<synchronous>, transform_indices = @transform_15, window_bounds = array<i64: 1, 128>}, {transform_indices = @transform_16, window_bounds = array<i64: 1, 8, 128>}]} {
    %c0 = arith.constant 0 : index
    %c0_0 = arith.constant 0 : index
    %c0_1 = arith.constant 0 : index
    %0 = vector.load %arg1[%c0, %c0_0, %c0_1] : memref<1x8x32xf32, #tpu.memory_space<vmem>>, vector<1x8x32xf32>
    %1 = vector.shape_cast %0 : vector<1x8x32xf32> to vector<8x32xf32>
    %2 = tpu.iota {dimensions = array<i32: 0>} : vector<8x8xi32>
    %3 = tpu.iota {dimensions = array<i32: 1>} : vector<8x8xi32>
    %4 = arith.cmpi sle, %3, %2 : vector<8x8xi32>
    %5 = tpu.iota {dimensions = array<i32: 1>} : vector<1x32xi32>
    %cst = arith.constant 3.200000e+01 : f32
    %6 = math.sqrt %cst : f32
    %cst_2 = arith.constant 1.000000e+00 : f32
    %7 = arith.divf %cst_2, %6 : f32
    %c0_3 = arith.constant 0 : index
    %c0_4 = arith.constant 0 : index
    %8 = vector.load %arg2[%c0_3, %c0_4] : memref<2x32xf32, #tpu.memory_space<vmem>>, vector<1x32xf32>
    %9 = vector.shape_cast %8 : vector<1x32xf32> to vector<32xf32>
    %c0_5 = arith.constant 0 : index
    %c0_6 = arith.constant 0 : index
    %10 = vector.load %arg3[%c0_5, %c0_6] : memref<2x32xf32, #tpu.memory_space<vmem>>, vector<1x32xf32>
    %11 = vector.shape_cast %10 : vector<1x32xf32> to vector<32xf32>
    %cst_7 = arith.constant dense<0.000000e+00> : vector<8xf32>
    %12 = vector.multi_reduction <add>, %1, %cst_7 [1] : vector<8x32xf32> to vector<8xf32>
    %13 = vector.shape_cast %12 : vector<8xf32> to vector<8x1xf32>
    %cst_8 = arith.constant 3.200000e+01 : f32
    %14 = vector.broadcast %cst_8 : f32 to vector<8x1xf32>
    %15 = arith.divf %13, %14 : vector<8x1xf32>
    %16 = vector.broadcast %15 : vector<8x1xf32> to vector<8x32xf32>
    %17 = arith.subf %1, %16 : vector<8x32xf32>
    %18 = arith.mulf %17, %17 : vector<8x32xf32>
    %cst_9 = arith.constant dense<0.000000e+00> : vector<8xf32>
    %19 = vector.multi_reduction <add>, %18, %cst_9 [1] : vector<8x32xf32> to vector<8xf32>
    %20 = vector.shape_cast %19 : vector<8xf32> to vector<8x1xf32>
    %cst_10 = arith.constant 3.200000e+01 : f32
    %21 = vector.broadcast %cst_10 : f32 to vector<8x1xf32>
    %22 = arith.divf %20, %21 : vector<8x1xf32>
    %23 = vector.broadcast %15 : vector<8x1xf32> to vector<8x32xf32>
    %24 = arith.subf %1, %23 : vector<8x32xf32>
    %cst_11 = arith.constant 9.99999974E-6 : f32
    %25 = vector.broadcast %cst_11 : f32 to vector<8x1xf32>
    %26 = arith.addf %22, %25 : vector<8x1xf32>
    %27 = math.rsqrt %26 : vector<8x1xf32>
    %28 = vector.broadcast %27 : vector<8x1xf32> to vector<8x32xf32>
    %29 = arith.mulf %24, %28 : vector<8x32xf32>
    %30 = vector.shape_cast %9 : vector<32xf32> to vector<1x32xf32>
    %31 = vector.broadcast %30 : vector<1x32xf32> to vector<8x32xf32>
    %32 = arith.mulf %29, %31 : vector<8x32xf32>
    %33 = vector.shape_cast %11 : vector<32xf32> to vector<1x32xf32>
    %34 = vector.broadcast %33 : vector<1x32xf32> to vector<8x32xf32>
    %35 = arith.addf %32, %34 : vector<8x32xf32>
    %36 = arith.truncf %35 : vector<8x32xf32> to vector<8x32xbf16>
    %c0_12 = arith.constant 0 : index
    %c0_13 = arith.constant 0 : index
    %c0_14 = arith.constant 0 : index
    %37 = vector.load %arg4[%c0_12, %c0_13, %c0_14] : memref<2x32x96xbf16, #tpu.memory_space<vmem>>, vector<1x32x96xbf16>
    %38 = vector.shape_cast %37 : vector<1x32x96xbf16> to vector<32x96xbf16>
    %cst_15 = arith.constant dense<0.000000e+00> : vector<8x96xf32>
    %39 = tpu.matmul %36, %38, %cst_15 {dimension_numbers = #tpu.dot_dimension_numbers<[1], [0], [0], [1], [0, 0, 1, 1], [], []>} : vector<8x32xbf16>, vector<32x96xbf16>, vector<8x96xf32> -> vector<8x96xf32>
    %40 = vector.extract_strided_slice %39 {offsets = [0, 0], sizes = [8, 32], strides = [1, 1]} : vector<8x96xf32> to vector<8x32xf32>
    %41 = vector.extract_strided_slice %39 {offsets = [0, 32], sizes = [8, 32], strides = [1, 1]} : vector<8x96xf32> to vector<8x32xf32>
    %42 = vector.extract_strided_slice %39 {offsets = [0, 64], sizes = [8, 32], strides = [1, 1]} : vector<8x96xf32> to vector<8x32xf32>
    %43 = arith.truncf %41 : vector<8x32xf32> to vector<8x32xbf16>
    %cst_16 = arith.constant 0.000000e+00 : f32
    %44 = vector.broadcast %cst_16 : f32 to vector<8x32xf32>
    %c0_i32 = arith.constant 0 : i32
    %45 = vector.broadcast %c0_i32 : i32 to vector<1x32xi32>
    %46 = arith.cmpi sge, %5, %45 : vector<1x32xi32>
    %c8_i32 = arith.constant 8 : i32
    %47 = vector.broadcast %c8_i32 : i32 to vector<1x32xi32>
    %48 = arith.cmpi slt, %5, %47 : vector<1x32xi32>
    %49 = arith.andi %46, %48 : vector<1x32xi1>
    %cst_17 = arith.constant 0.000000e+00 : f32
    %50 = vector.shape_cast %49 : vector<1x32xi1> to vector<1x32xi1>
    %51 = vector.broadcast %50 : vector<1x32xi1> to vector<8x32xi1>
    %52 = vector.broadcast %cst_17 : f32 to vector<8x32xf32>
    %53 = arith.select %51, %40, %52 : vector<8x32xi1>, vector<8x32xf32>
    %54 = arith.truncf %53 : vector<8x32xf32> to vector<8x32xbf16>
    %cst_18 = arith.constant 0.000000e+00 : f32
    %55 = vector.shape_cast %49 : vector<1x32xi1> to vector<1x32xi1>
    %56 = vector.broadcast %55 : vector<1x32xi1> to vector<8x32xi1>
    %57 = vector.broadcast %cst_18 : f32 to vector<8x32xf32>
    %58 = arith.select %56, %42, %57 : vector<8x32xi1>, vector<8x32xf32>
    %59 = arith.truncf %58 : vector<8x32xf32> to vector<8x32xbf16>
    "tpu.trace_start"() <{level = 10 : i32, message = "td,sd->ts"}> : () -> ()
    %cst_19 = arith.constant dense<0.000000e+00> : vector<8x8xf32>
    %60 = tpu.matmul %54, %43, %cst_19 {dimension_numbers = #tpu.dot_dimension_numbers<[1], [1], [0], [0], [0, 0, 1, 0], [], []>} : vector<8x32xbf16>, vector<8x32xbf16>, vector<8x8xf32> -> vector<8x8xf32>
    "tpu.trace_stop"() : () -> ()
    %61 = vector.broadcast %7 : f32 to vector<8x8xf32>
    %62 = arith.mulf %60, %61 : vector<8x8xf32>
    %cst_20 = arith.constant 0xFF800000 : f32
    %63 = vector.broadcast %cst_20 : f32 to vector<8x8xf32>
    %64 = arith.select %4, %62, %63 : vector<8x8xi1>, vector<8x8xf32>
    %cst_21 = arith.constant dense<0xFF800000> : vector<8xf32>
    %65 = vector.multi_reduction <maximumf>, %64, %cst_21 [1] : vector<8x8xf32> to vector<8xf32>
    %66 = vector.shape_cast %65 : vector<8xf32> to vector<8x1xf32>
    %67 = vector.broadcast %66 : vector<8x1xf32> to vector<8x8xf32>
    %68 = arith.subf %64, %67 : vector<8x8xf32>
    %69 = math.exp %68 : vector<8x8xf32>
    %cst_22 = arith.constant dense<0.000000e+00> : vector<8xf32>
    %70 = vector.multi_reduction <add>, %69, %cst_22 [1] : vector<8x8xf32> to vector<8xf32>
    %71 = vector.shape_cast %70 : vector<8xf32> to vector<8x1xf32>
    %72 = tpu.reciprocal %71 {approx = true} : vector<8x1xf32> -> vector<8x1xf32>
    %73 = vector.broadcast %72 : vector<8x1xf32> to vector<8x8xf32>
    %74 = arith.mulf %69, %73 : vector<8x8xf32>
    %75 = arith.truncf %74 : vector<8x8xf32> to vector<8x8xbf16>
    %cst_23 = arith.constant dense<0.000000e+00> : vector<8x32xf32>
    %76 = tpu.matmul %75, %59, %cst_23 {dimension_numbers = #tpu.dot_dimension_numbers<[1], [0], [0], [1], [0, 0, 1, 1], [], []>} : vector<8x8xbf16>, vector<8x32xbf16>, vector<8x32xf32> -> vector<8x32xf32>
    %77 = arith.addf %44, %76 : vector<8x32xf32>
    %c8_i32_24 = arith.constant 8 : i32
    %78 = vector.broadcast %c8_i32_24 : i32 to vector<1x32xi32>
    %79 = arith.cmpi sge, %5, %78 : vector<1x32xi32>
    %c16_i32 = arith.constant 16 : i32
    %80 = vector.broadcast %c16_i32 : i32 to vector<1x32xi32>
    %81 = arith.cmpi slt, %5, %80 : vector<1x32xi32>
    %82 = arith.andi %79, %81 : vector<1x32xi1>
    %cst_25 = arith.constant 0.000000e+00 : f32
    %83 = vector.shape_cast %82 : vector<1x32xi1> to vector<1x32xi1>
    %84 = vector.broadcast %83 : vector<1x32xi1> to vector<8x32xi1>
    %85 = vector.broadcast %cst_25 : f32 to vector<8x32xf32>
    %86 = arith.select %84, %40, %85 : vector<8x32xi1>, vector<8x32xf32>
    %87 = arith.truncf %86 : vector<8x32xf32> to vector<8x32xbf16>
    %cst_26 = arith.constant 0.000000e+00 : f32
    %88 = vector.shape_cast %82 : vector<1x32xi1> to vector<1x32xi1>
    %89 = vector.broadcast %88 : vector<1x32xi1> to vector<8x32xi1>
    %90 = vector.broadcast %cst_26 : f32 to vector<8x32xf32>
    %91 = arith.select %89, %42, %90 : vector<8x32xi1>, vector<8x32xf32>
    %92 = arith.truncf %91 : vector<8x32xf32> to vector<8x32xbf16>
    "tpu.trace_start"() <{level = 10 : i32, message = "td,sd->ts"}> : () -> ()
    %cst_27 = arith.constant dense<0.000000e+00> : vector<8x8xf32>
    %93 = tpu.matmul %87, %43, %cst_27 {dimension_numbers = #tpu.dot_dimension_numbers<[1], [1], [0], [0], [0, 0, 1, 0], [], []>} : vector<8x32xbf16>, vector<8x32xbf16>, vector<8x8xf32> -> vector<8x8xf32>
    "tpu.trace_stop"() : () -> ()
    %94 = vector.broadcast %7 : f32 to vector<8x8xf32>
    %95 = arith.mulf %93, %94 : vector<8x8xf32>
    %cst_28 = arith.constant 0xFF800000 : f32
    %96 = vector.broadcast %cst_28 : f32 to vector<8x8xf32>
    %97 = arith.select %4, %95, %96 : vector<8x8xi1>, vector<8x8xf32>
    %cst_29 = arith.constant dense<0xFF800000> : vector<8xf32>
    %98 = vector.multi_reduction <maximumf>, %97, %cst_29 [1] : vector<8x8xf32> to vector<8xf32>
    %99 = vector.shape_cast %98 : vector<8xf32> to vector<8x1xf32>
    %100 = vector.broadcast %99 : vector<8x1xf32> to vector<8x8xf32>
    %101 = arith.subf %97, %100 : vector<8x8xf32>
    %102 = math.exp %101 : vector<8x8xf32>
    %cst_30 = arith.constant dense<0.000000e+00> : vector<8xf32>
    %103 = vector.multi_reduction <add>, %102, %cst_30 [1] : vector<8x8xf32> to vector<8xf32>
    %104 = vector.shape_cast %103 : vector<8xf32> to vector<8x1xf32>
    %105 = tpu.reciprocal %104 {approx = true} : vector<8x1xf32> -> vector<8x1xf32>
    %106 = vector.broadcast %105 : vector<8x1xf32> to vector<8x8xf32>
    %107 = arith.mulf %102, %106 : vector<8x8xf32>
    %108 = arith.truncf %107 : vector<8x8xf32> to vector<8x8xbf16>
    %cst_31 = arith.constant dense<0.000000e+00> : vector<8x32xf32>
    %109 = tpu.matmul %108, %92, %cst_31 {dimension_numbers = #tpu.dot_dimension_numbers<[1], [0], [0], [1], [0, 0, 1, 1], [], []>} : vector<8x8xbf16>, vector<8x32xbf16>, vector<8x32xf32> -> vector<8x32xf32>
    %110 = arith.addf %77, %109 : vector<8x32xf32>
    %c16_i32_32 = arith.constant 16 : i32
    %111 = vector.broadcast %c16_i32_32 : i32 to vector<1x32xi32>
    %112 = arith.cmpi sge, %5, %111 : vector<1x32xi32>
    %c24_i32 = arith.constant 24 : i32
    %113 = vector.broadcast %c24_i32 : i32 to vector<1x32xi32>
    %114 = arith.cmpi slt, %5, %113 : vector<1x32xi32>
    %115 = arith.andi %112, %114 : vector<1x32xi1>
    %cst_33 = arith.constant 0.000000e+00 : f32
    %116 = vector.shape_cast %115 : vector<1x32xi1> to vector<1x32xi1>
    %117 = vector.broadcast %116 : vector<1x32xi1> to vector<8x32xi1>
    %118 = vector.broadcast %cst_33 : f32 to vector<8x32xf32>
    %119 = arith.select %117, %40, %118 : vector<8x32xi1>, vector<8x32xf32>
    %120 = arith.truncf %119 : vector<8x32xf32> to vector<8x32xbf16>
    %cst_34 = arith.constant 0.000000e+00 : f32
    %121 = vector.shape_cast %115 : vector<1x32xi1> to vector<1x32xi1>
    %122 = vector.broadcast %121 : vector<1x32xi1> to vector<8x32xi1>
    %123 = vector.broadcast %cst_34 : f32 to vector<8x32xf32>
    %124 = arith.select %122, %42, %123 : vector<8x32xi1>, vector<8x32xf32>
    %125 = arith.truncf %124 : vector<8x32xf32> to vector<8x32xbf16>
    "tpu.trace_start"() <{level = 10 : i32, message = "td,sd->ts"}> : () -> ()
    %cst_35 = arith.constant dense<0.000000e+00> : vector<8x8xf32>
    %126 = tpu.matmul %120, %43, %cst_35 {dimension_numbers = #tpu.dot_dimension_numbers<[1], [1], [0], [0], [0, 0, 1, 0], [], []>} : vector<8x32xbf16>, vector<8x32xbf16>, vector<8x8xf32> -> vector<8x8xf32>
    "tpu.trace_stop"() : () -> ()
    %127 = vector.broadcast %7 : f32 to vector<8x8xf32>
    %128 = arith.mulf %126, %127 : vector<8x8xf32>
    %cst_36 = arith.constant 0xFF800000 : f32
    %129 = vector.broadcast %cst_36 : f32 to vector<8x8xf32>
    %130 = arith.select %4, %128, %129 : vector<8x8xi1>, vector<8x8xf32>
    %cst_37 = arith.constant dense<0xFF800000> : vector<8xf32>
    %131 = vector.multi_reduction <maximumf>, %130, %cst_37 [1] : vector<8x8xf32> to vector<8xf32>
    %132 = vector.shape_cast %131 : vector<8xf32> to vector<8x1xf32>
    %133 = vector.broadcast %132 : vector<8x1xf32> to vector<8x8xf32>
    %134 = arith.subf %130, %133 : vector<8x8xf32>
    %135 = math.exp %134 : vector<8x8xf32>
    %cst_38 = arith.constant dense<0.000000e+00> : vector<8xf32>
    %136 = vector.multi_reduction <add>, %135, %cst_38 [1] : vector<8x8xf32> to vector<8xf32>
    %137 = vector.shape_cast %136 : vector<8xf32> to vector<8x1xf32>
    %138 = tpu.reciprocal %137 {approx = true} : vector<8x1xf32> -> vector<8x1xf32>
    %139 = vector.broadcast %138 : vector<8x1xf32> to vector<8x8xf32>
    %140 = arith.mulf %135, %139 : vector<8x8xf32>
    %141 = arith.truncf %140 : vector<8x8xf32> to vector<8x8xbf16>
    %cst_39 = arith.constant dense<0.000000e+00> : vector<8x32xf32>
    %142 = tpu.matmul %141, %125, %cst_39 {dimension_numbers = #tpu.dot_dimension_numbers<[1], [0], [0], [1], [0, 0, 1, 1], [], []>} : vector<8x8xbf16>, vector<8x32xbf16>, vector<8x32xf32> -> vector<8x32xf32>
    %143 = arith.addf %110, %142 : vector<8x32xf32>
    %c24_i32_40 = arith.constant 24 : i32
    %144 = vector.broadcast %c24_i32_40 : i32 to vector<1x32xi32>
    %145 = arith.cmpi sge, %5, %144 : vector<1x32xi32>
    %c32_i32 = arith.constant 32 : i32
    %146 = vector.broadcast %c32_i32 : i32 to vector<1x32xi32>
    %147 = arith.cmpi slt, %5, %146 : vector<1x32xi32>
    %148 = arith.andi %145, %147 : vector<1x32xi1>
    %cst_41 = arith.constant 0.000000e+00 : f32
    %149 = vector.shape_cast %148 : vector<1x32xi1> to vector<1x32xi1>
    %150 = vector.broadcast %149 : vector<1x32xi1> to vector<8x32xi1>
    %151 = vector.broadcast %cst_41 : f32 to vector<8x32xf32>
    %152 = arith.select %150, %40, %151 : vector<8x32xi1>, vector<8x32xf32>
    %153 = arith.truncf %152 : vector<8x32xf32> to vector<8x32xbf16>
    %cst_42 = arith.constant 0.000000e+00 : f32
    %154 = vector.shape_cast %148 : vector<1x32xi1> to vector<1x32xi1>
    %155 = vector.broadcast %154 : vector<1x32xi1> to vector<8x32xi1>
    %156 = vector.broadcast %cst_42 : f32 to vector<8x32xf32>
    %157 = arith.select %155, %42, %156 : vector<8x32xi1>, vector<8x32xf32>
    %158 = arith.truncf %157 : vector<8x32xf32> to vector<8x32xbf16>
    "tpu.trace_start"() <{level = 10 : i32, message = "td,sd->ts"}> : () -> ()
    %cst_43 = arith.constant dense<0.000000e+00> : vector<8x8xf32>
    %159 = tpu.matmul %153, %43, %cst_43 {dimension_numbers = #tpu.dot_dimension_numbers<[1], [1], [0], [0], [0, 0, 1, 0], [], []>} : vector<8x32xbf16>, vector<8x32xbf16>, vector<8x8xf32> -> vector<8x8xf32>
    "tpu.trace_stop"() : () -> ()
    %160 = vector.broadcast %7 : f32 to vector<8x8xf32>
    %161 = arith.mulf %159, %160 : vector<8x8xf32>
    %cst_44 = arith.constant 0xFF800000 : f32
    %162 = vector.broadcast %cst_44 : f32 to vector<8x8xf32>
    %163 = arith.select %4, %161, %162 : vector<8x8xi1>, vector<8x8xf32>
    %cst_45 = arith.constant dense<0xFF800000> : vector<8xf32>
    %164 = vector.multi_reduction <maximumf>, %163, %cst_45 [1] : vector<8x8xf32> to vector<8xf32>
    %165 = vector.shape_cast %164 : vector<8xf32> to vector<8x1xf32>
    %166 = vector.broadcast %165 : vector<8x1xf32> to vector<8x8xf32>
    %167 = arith.subf %163, %166 : vector<8x8xf32>
    %168 = math.exp %167 : vector<8x8xf32>
    %cst_46 = arith.constant dense<0.000000e+00> : vector<8xf32>
    %169 = vector.multi_reduction <add>, %168, %cst_46 [1] : vector<8x8xf32> to vector<8xf32>
    %170 = vector.shape_cast %169 : vector<8xf32> to vector<8x1xf32>
    %171 = tpu.reciprocal %170 {approx = true} : vector<8x1xf32> -> vector<8x1xf32>
    %172 = vector.broadcast %171 : vector<8x1xf32> to vector<8x8xf32>
    %173 = arith.mulf %168, %172 : vector<8x8xf32>
    %174 = arith.truncf %173 : vector<8x8xf32> to vector<8x8xbf16>
    %cst_47 = arith.constant dense<0.000000e+00> : vector<8x32xf32>
    %175 = tpu.matmul %174, %158, %cst_47 {dimension_numbers = #tpu.dot_dimension_numbers<[1], [0], [0], [1], [0, 0, 1, 1], [], []>} : vector<8x8xbf16>, vector<8x32xbf16>, vector<8x32xf32> -> vector<8x32xf32>
    %176 = arith.addf %143, %175 : vector<8x32xf32>
    %177 = arith.truncf %176 : vector<8x32xf32> to vector<8x32xbf16>
    %c0_48 = arith.constant 0 : index
    %c0_49 = arith.constant 0 : index
    %c0_50 = arith.constant 0 : index
    %178 = vector.load %arg5[%c0_48, %c0_49, %c0_50] : memref<2x32x32xbf16, #tpu.memory_space<vmem>>, vector<1x32x32xbf16>
    %179 = vector.shape_cast %178 : vector<1x32x32xbf16> to vector<32x32xbf16>
    %cst_51 = arith.constant dense<0.000000e+00> : vector<8x32xf32>
    %180 = tpu.matmul %177, %179, %cst_51 {dimension_numbers = #tpu.dot_dimension_numbers<[1], [0], [0], [1], [0, 0, 1, 1], [], []>} : vector<8x32xbf16>, vector<32x32xbf16>, vector<8x32xf32> -> vector<8x32xf32>
    %c0_52 = arith.constant 0 : index
    %c0_53 = arith.constant 0 : index
    %181 = vector.load %arg6[%c0_52, %c0_53] : memref<2x32xf32, #tpu.memory_space<vmem>>, vector<1x32xf32>
    %182 = vector.shape_cast %181 : vector<1x32xf32> to vector<32xf32>
    %183 = vector.shape_cast %182 : vector<32xf32> to vector<1x32xf32>
    %184 = vector.broadcast %183 : vector<1x32xf32> to vector<8x32xf32>
    %185 = arith.addf %180, %184 : vector<8x32xf32>
    %186 = arith.addf %1, %185 : vector<8x32xf32>
    %c0_54 = arith.constant 0 : index
    %c0_55 = arith.constant 0 : index
    %187 = vector.load %arg7[%c0_54, %c0_55] : memref<2x32xf32, #tpu.memory_space<vmem>>, vector<1x32xf32>
    %188 = vector.shape_cast %187 : vector<1x32xf32> to vector<32xf32>
    %c0_56 = arith.constant 0 : index
    %c0_57 = arith.constant 0 : index
    %189 = vector.load %arg8[%c0_56, %c0_57] : memref<2x32xf32, #tpu.memory_space<vmem>>, vector<1x32xf32>
    %190 = vector.shape_cast %189 : vector<1x32xf32> to vector<32xf32>
    %cst_58 = arith.constant dense<0.000000e+00> : vector<8xf32>
    %191 = vector.multi_reduction <add>, %186, %cst_58 [1] : vector<8x32xf32> to vector<8xf32>
    %192 = vector.shape_cast %191 : vector<8xf32> to vector<8x1xf32>
    %cst_59 = arith.constant 3.200000e+01 : f32
    %193 = vector.broadcast %cst_59 : f32 to vector<8x1xf32>
    %194 = arith.divf %192, %193 : vector<8x1xf32>
    %195 = vector.broadcast %194 : vector<8x1xf32> to vector<8x32xf32>
    %196 = arith.subf %186, %195 : vector<8x32xf32>
    %197 = arith.mulf %196, %196 : vector<8x32xf32>
    %cst_60 = arith.constant dense<0.000000e+00> : vector<8xf32>
    %198 = vector.multi_reduction <add>, %197, %cst_60 [1] : vector<8x32xf32> to vector<8xf32>
    %199 = vector.shape_cast %198 : vector<8xf32> to vector<8x1xf32>
    %cst_61 = arith.constant 3.200000e+01 : f32
    %200 = vector.broadcast %cst_61 : f32 to vector<8x1xf32>
    %201 = arith.divf %199, %200 : vector<8x1xf32>
    %202 = vector.broadcast %194 : vector<8x1xf32> to vector<8x32xf32>
    %203 = arith.subf %186, %202 : vector<8x32xf32>
    %cst_62 = arith.constant 9.99999974E-6 : f32
    %204 = vector.broadcast %cst_62 : f32 to vector<8x1xf32>
    %205 = arith.addf %201, %204 : vector<8x1xf32>
    %206 = math.rsqrt %205 : vector<8x1xf32>
    %207 = vector.broadcast %206 : vector<8x1xf32> to vector<8x32xf32>
    %208 = arith.mulf %203, %207 : vector<8x32xf32>
    %209 = vector.shape_cast %188 : vector<32xf32> to vector<1x32xf32>
    %210 = vector.broadcast %209 : vector<1x32xf32> to vector<8x32xf32>
    %211 = arith.mulf %208, %210 : vector<8x32xf32>
    %212 = vector.shape_cast %190 : vector<32xf32> to vector<1x32xf32>
    %213 = vector.broadcast %212 : vector<1x32xf32> to vector<8x32xf32>
    %214 = arith.addf %211, %213 : vector<8x32xf32>
    %215 = arith.truncf %214 : vector<8x32xf32> to vector<8x32xbf16>
    %c0_63 = arith.constant 0 : index
    %c0_64 = arith.constant 0 : index
    %c0_65 = arith.constant 0 : index
    %216 = vector.load %arg9[%c0_63, %c0_64, %c0_65] : memref<2x32x128xbf16, #tpu.memory_space<vmem>>, vector<1x32x128xbf16>
    %217 = vector.shape_cast %216 : vector<1x32x128xbf16> to vector<32x128xbf16>
    %cst_66 = arith.constant dense<0.000000e+00> : vector<8x128xf32>
    %218 = tpu.matmul %215, %217, %cst_66 {dimension_numbers = #tpu.dot_dimension_numbers<[1], [0], [0], [1], [0, 0, 1, 1], [], []>} : vector<8x32xbf16>, vector<32x128xbf16>, vector<8x128xf32> -> vector<8x128xf32>
    %c0_67 = arith.constant 0 : index
    %c0_68 = arith.constant 0 : index
    %219 = vector.load %arg10[%c0_67, %c0_68] : memref<2x128xf32, #tpu.memory_space<vmem>>, vector<1x128xf32>
    %220 = vector.shape_cast %219 : vector<1x128xf32> to vector<128xf32>
    %221 = vector.shape_cast %220 : vector<128xf32> to vector<1x128xf32>
    %222 = vector.broadcast %221 : vector<1x128xf32> to vector<8x128xf32>
    %223 = arith.addf %218, %222 : vector<8x128xf32>
    %cst_69 = arith.constant 0.000000e+00 : f32
    %224 = vector.broadcast %cst_69 : f32 to vector<8x128xf32>
    %225 = arith.maximumf %223, %224 : vector<8x128xf32>
    %226 = arith.truncf %225 : vector<8x128xf32> to vector<8x128xbf16>
    %c0_70 = arith.constant 0 : index
    %c0_71 = arith.constant 0 : index
    %c0_72 = arith.constant 0 : index
    %227 = vector.load %arg11[%c0_70, %c0_71, %c0_72] : memref<2x128x32xbf16, #tpu.memory_space<vmem>>, vector<1x128x32xbf16>
    %228 = vector.shape_cast %227 : vector<1x128x32xbf16> to vector<128x32xbf16>
    %cst_73 = arith.constant dense<0.000000e+00> : vector<8x32xf32>
    %229 = tpu.matmul %226, %228, %cst_73 {dimension_numbers = #tpu.dot_dimension_numbers<[1], [0], [0], [1], [0, 0, 1, 1], [], []>} : vector<8x128xbf16>, vector<128x32xbf16>, vector<8x32xf32> -> vector<8x32xf32>
    %c0_74 = arith.constant 0 : index
    %c0_75 = arith.constant 0 : index
    %230 = vector.load %arg12[%c0_74, %c0_75] : memref<2x32xf32, #tpu.memory_space<vmem>>, vector<1x32xf32>
    %231 = vector.shape_cast %230 : vector<1x32xf32> to vector<32xf32>
    %232 = vector.shape_cast %231 : vector<32xf32> to vector<1x32xf32>
    %233 = vector.broadcast %232 : vector<1x32xf32> to vector<8x32xf32>
    %234 = arith.addf %229, %233 : vector<8x32xf32>
    %235 = arith.addf %186, %234 : vector<8x32xf32>
    %c1 = arith.constant 1 : index
    %c0_76 = arith.constant 0 : index
    %236 = vector.load %arg2[%c1, %c0_76] : memref<2x32xf32, #tpu.memory_space<vmem>>, vector<1x32xf32>
    %237 = vector.shape_cast %236 : vector<1x32xf32> to vector<32xf32>
    %c1_77 = arith.constant 1 : index
    %c0_78 = arith.constant 0 : index
    %238 = vector.load %arg3[%c1_77, %c0_78] : memref<2x32xf32, #tpu.memory_space<vmem>>, vector<1x32xf32>
    %239 = vector.shape_cast %238 : vector<1x32xf32> to vector<32xf32>
    %cst_79 = arith.constant dense<0.000000e+00> : vector<8xf32>
    %240 = vector.multi_reduction <add>, %235, %cst_79 [1] : vector<8x32xf32> to vector<8xf32>
    %241 = vector.shape_cast %240 : vector<8xf32> to vector<8x1xf32>
    %cst_80 = arith.constant 3.200000e+01 : f32
    %242 = vector.broadcast %cst_80 : f32 to vector<8x1xf32>
    %243 = arith.divf %241, %242 : vector<8x1xf32>
    %244 = vector.broadcast %243 : vector<8x1xf32> to vector<8x32xf32>
    %245 = arith.subf %235, %244 : vector<8x32xf32>
    %246 = arith.mulf %245, %245 : vector<8x32xf32>
    %cst_81 = arith.constant dense<0.000000e+00> : vector<8xf32>
    %247 = vector.multi_reduction <add>, %246, %cst_81 [1] : vector<8x32xf32> to vector<8xf32>
    %248 = vector.shape_cast %247 : vector<8xf32> to vector<8x1xf32>
    %cst_82 = arith.constant 3.200000e+01 : f32
    %249 = vector.broadcast %cst_82 : f32 to vector<8x1xf32>
    %250 = arith.divf %248, %249 : vector<8x1xf32>
    %251 = vector.broadcast %243 : vector<8x1xf32> to vector<8x32xf32>
    %252 = arith.subf %235, %251 : vector<8x32xf32>
    %cst_83 = arith.constant 9.99999974E-6 : f32
    %253 = vector.broadcast %cst_83 : f32 to vector<8x1xf32>
    %254 = arith.addf %250, %253 : vector<8x1xf32>
    %255 = math.rsqrt %254 : vector<8x1xf32>
    %256 = vector.broadcast %255 : vector<8x1xf32> to vector<8x32xf32>
    %257 = arith.mulf %252, %256 : vector<8x32xf32>
    %258 = vector.shape_cast %237 : vector<32xf32> to vector<1x32xf32>
    %259 = vector.broadcast %258 : vector<1x32xf32> to vector<8x32xf32>
    %260 = arith.mulf %257, %259 : vector<8x32xf32>
    %261 = vector.shape_cast %239 : vector<32xf32> to vector<1x32xf32>
    %262 = vector.broadcast %261 : vector<1x32xf32> to vector<8x32xf32>
    %263 = arith.addf %260, %262 : vector<8x32xf32>
    %264 = arith.truncf %263 : vector<8x32xf32> to vector<8x32xbf16>
    %c1_84 = arith.constant 1 : index
    %c0_85 = arith.constant 0 : index
    %c0_86 = arith.constant 0 : index
    %265 = vector.load %arg4[%c1_84, %c0_85, %c0_86] : memref<2x32x96xbf16, #tpu.memory_space<vmem>>, vector<1x32x96xbf16>
    %266 = vector.shape_cast %265 : vector<1x32x96xbf16> to vector<32x96xbf16>
    %cst_87 = arith.constant dense<0.000000e+00> : vector<8x96xf32>
    %267 = tpu.matmul %264, %266, %cst_87 {dimension_numbers = #tpu.dot_dimension_numbers<[1], [0], [0], [1], [0, 0, 1, 1], [], []>} : vector<8x32xbf16>, vector<32x96xbf16>, vector<8x96xf32> -> vector<8x96xf32>
    %268 = vector.extract_strided_slice %267 {offsets = [0, 0], sizes = [8, 32], strides = [1, 1]} : vector<8x96xf32> to vector<8x32xf32>
    %269 = vector.extract_strided_slice %267 {offsets = [0, 32], sizes = [8, 32], strides = [1, 1]} : vector<8x96xf32> to vector<8x32xf32>
    %270 = vector.extract_strided_slice %267 {offsets = [0, 64], sizes = [8, 32], strides = [1, 1]} : vector<8x96xf32> to vector<8x32xf32>
    %271 = arith.truncf %269 : vector<8x32xf32> to vector<8x32xbf16>
    %cst_88 = arith.constant 0.000000e+00 : f32
    %272 = vector.broadcast %cst_88 : f32 to vector<8x32xf32>
    %c0_i32_89 = arith.constant 0 : i32
    %273 = vector.broadcast %c0_i32_89 : i32 to vector<1x32xi32>
    %274 = arith.cmpi sge, %5, %273 : vector<1x32xi32>
    %c8_i32_90 = arith.constant 8 : i32
    %275 = vector.broadcast %c8_i32_90 : i32 to vector<1x32xi32>
    %276 = arith.cmpi slt, %5, %275 : vector<1x32xi32>
    %277 = arith.andi %274, %276 : vector<1x32xi1>
    %cst_91 = arith.constant 0.000000e+00 : f32
    %278 = vector.shape_cast %277 : vector<1x32xi1> to vector<1x32xi1>
    %279 = vector.broadcast %278 : vector<1x32xi1> to vector<8x32xi1>
    %280 = vector.broadcast %cst_91 : f32 to vector<8x32xf32>
    %281 = arith.select %279, %268, %280 : vector<8x32xi1>, vector<8x32xf32>
    %282 = arith.truncf %281 : vector<8x32xf32> to vector<8x32xbf16>
    %cst_92 = arith.constant 0.000000e+00 : f32
    %283 = vector.shape_cast %277 : vector<1x32xi1> to vector<1x32xi1>
    %284 = vector.broadcast %283 : vector<1x32xi1> to vector<8x32xi1>
    %285 = vector.broadcast %cst_92 : f32 to vector<8x32xf32>
    %286 = arith.select %284, %270, %285 : vector<8x32xi1>, vector<8x32xf32>
    %287 = arith.truncf %286 : vector<8x32xf32> to vector<8x32xbf16>
    "tpu.trace_start"() <{level = 10 : i32, message = "td,sd->ts"}> : () -> ()
    %cst_93 = arith.constant dense<0.000000e+00> : vector<8x8xf32>
    %288 = tpu.matmul %282, %271, %cst_93 {dimension_numbers = #tpu.dot_dimension_numbers<[1], [1], [0], [0], [0, 0, 1, 0], [], []>} : vector<8x32xbf16>, vector<8x32xbf16>, vector<8x8xf32> -> vector<8x8xf32>
    "tpu.trace_stop"() : () -> ()
    %289 = vector.broadcast %7 : f32 to vector<8x8xf32>
    %290 = arith.mulf %288, %289 : vector<8x8xf32>
    %cst_94 = arith.constant 0xFF800000 : f32
    %291 = vector.broadcast %cst_94 : f32 to vector<8x8xf32>
    %292 = arith.select %4, %290, %291 : vector<8x8xi1>, vector<8x8xf32>
    %cst_95 = arith.constant dense<0xFF800000> : vector<8xf32>
    %293 = vector.multi_reduction <maximumf>, %292, %cst_95 [1] : vector<8x8xf32> to vector<8xf32>
    %294 = vector.shape_cast %293 : vector<8xf32> to vector<8x1xf32>
    %295 = vector.broadcast %294 : vector<8x1xf32> to vector<8x8xf32>
    %296 = arith.subf %292, %295 : vector<8x8xf32>
    %297 = math.exp %296 : vector<8x8xf32>
    %cst_96 = arith.constant dense<0.000000e+00> : vector<8xf32>
    %298 = vector.multi_reduction <add>, %297, %cst_96 [1] : vector<8x8xf32> to vector<8xf32>
    %299 = vector.shape_cast %298 : vector<8xf32> to vector<8x1xf32>
    %300 = tpu.reciprocal %299 {approx = true} : vector<8x1xf32> -> vector<8x1xf32>
    %301 = vector.broadcast %300 : vector<8x1xf32> to vector<8x8xf32>
    %302 = arith.mulf %297, %301 : vector<8x8xf32>
    %303 = arith.truncf %302 : vector<8x8xf32> to vector<8x8xbf16>
    %cst_97 = arith.constant dense<0.000000e+00> : vector<8x32xf32>
    %304 = tpu.matmul %303, %287, %cst_97 {dimension_numbers = #tpu.dot_dimension_numbers<[1], [0], [0], [1], [0, 0, 1, 1], [], []>} : vector<8x8xbf16>, vector<8x32xbf16>, vector<8x32xf32> -> vector<8x32xf32>
    %305 = arith.addf %272, %304 : vector<8x32xf32>
    %c8_i32_98 = arith.constant 8 : i32
    %306 = vector.broadcast %c8_i32_98 : i32 to vector<1x32xi32>
    %307 = arith.cmpi sge, %5, %306 : vector<1x32xi32>
    %c16_i32_99 = arith.constant 16 : i32
    %308 = vector.broadcast %c16_i32_99 : i32 to vector<1x32xi32>
    %309 = arith.cmpi slt, %5, %308 : vector<1x32xi32>
    %310 = arith.andi %307, %309 : vector<1x32xi1>
    %cst_100 = arith.constant 0.000000e+00 : f32
    %311 = vector.shape_cast %310 : vector<1x32xi1> to vector<1x32xi1>
    %312 = vector.broadcast %311 : vector<1x32xi1> to vector<8x32xi1>
    %313 = vector.broadcast %cst_100 : f32 to vector<8x32xf32>
    %314 = arith.select %312, %268, %313 : vector<8x32xi1>, vector<8x32xf32>
    %315 = arith.truncf %314 : vector<8x32xf32> to vector<8x32xbf16>
    %cst_101 = arith.constant 0.000000e+00 : f32
    %316 = vector.shape_cast %310 : vector<1x32xi1> to vector<1x32xi1>
    %317 = vector.broadcast %316 : vector<1x32xi1> to vector<8x32xi1>
    %318 = vector.broadcast %cst_101 : f32 to vector<8x32xf32>
    %319 = arith.select %317, %270, %318 : vector<8x32xi1>, vector<8x32xf32>
    %320 = arith.truncf %319 : vector<8x32xf32> to vector<8x32xbf16>
    "tpu.trace_start"() <{level = 10 : i32, message = "td,sd->ts"}> : () -> ()
    %cst_102 = arith.constant dense<0.000000e+00> : vector<8x8xf32>
    %321 = tpu.matmul %315, %271, %cst_102 {dimension_numbers = #tpu.dot_dimension_numbers<[1], [1], [0], [0], [0, 0, 1, 0], [], []>} : vector<8x32xbf16>, vector<8x32xbf16>, vector<8x8xf32> -> vector<8x8xf32>
    "tpu.trace_stop"() : () -> ()
    %322 = vector.broadcast %7 : f32 to vector<8x8xf32>
    %323 = arith.mulf %321, %322 : vector<8x8xf32>
    %cst_103 = arith.constant 0xFF800000 : f32
    %324 = vector.broadcast %cst_103 : f32 to vector<8x8xf32>
    %325 = arith.select %4, %323, %324 : vector<8x8xi1>, vector<8x8xf32>
    %cst_104 = arith.constant dense<0xFF800000> : vector<8xf32>
    %326 = vector.multi_reduction <maximumf>, %325, %cst_104 [1] : vector<8x8xf32> to vector<8xf32>
    %327 = vector.shape_cast %326 : vector<8xf32> to vector<8x1xf32>
    %328 = vector.broadcast %327 : vector<8x1xf32> to vector<8x8xf32>
    %329 = arith.subf %325, %328 : vector<8x8xf32>
    %330 = math.exp %329 : vector<8x8xf32>
    %cst_105 = arith.constant dense<0.000000e+00> : vector<8xf32>
    %331 = vector.multi_reduction <add>, %330, %cst_105 [1] : vector<8x8xf32> to vector<8xf32>
    %332 = vector.shape_cast %331 : vector<8xf32> to vector<8x1xf32>
    %333 = tpu.reciprocal %332 {approx = true} : vector<8x1xf32> -> vector<8x1xf32>
    %334 = vector.broadcast %333 : vector<8x1xf32> to vector<8x8xf32>
    %335 = arith.mulf %330, %334 : vector<8x8xf32>
    %336 = arith.truncf %335 : vector<8x8xf32> to vector<8x8xbf16>
    %cst_106 = arith.constant dense<0.000000e+00> : vector<8x32xf32>
    %337 = tpu.matmul %336, %320, %cst_106 {dimension_numbers = #tpu.dot_dimension_numbers<[1], [0], [0], [1], [0, 0, 1, 1], [], []>} : vector<8x8xbf16>, vector<8x32xbf16>, vector<8x32xf32> -> vector<8x32xf32>
    %338 = arith.addf %305, %337 : vector<8x32xf32>
    %c16_i32_107 = arith.constant 16 : i32
    %339 = vector.broadcast %c16_i32_107 : i32 to vector<1x32xi32>
    %340 = arith.cmpi sge, %5, %339 : vector<1x32xi32>
    %c24_i32_108 = arith.constant 24 : i32
    %341 = vector.broadcast %c24_i32_108 : i32 to vector<1x32xi32>
    %342 = arith.cmpi slt, %5, %341 : vector<1x32xi32>
    %343 = arith.andi %340, %342 : vector<1x32xi1>
    %cst_109 = arith.constant 0.000000e+00 : f32
    %344 = vector.shape_cast %343 : vector<1x32xi1> to vector<1x32xi1>
    %345 = vector.broadcast %344 : vector<1x32xi1> to vector<8x32xi1>
    %346 = vector.broadcast %cst_109 : f32 to vector<8x32xf32>
    %347 = arith.select %345, %268, %346 : vector<8x32xi1>, vector<8x32xf32>
    %348 = arith.truncf %347 : vector<8x32xf32> to vector<8x32xbf16>
    %cst_110 = arith.constant 0.000000e+00 : f32
    %349 = vector.shape_cast %343 : vector<1x32xi1> to vector<1x32xi1>
    %350 = vector.broadcast %349 : vector<1x32xi1> to vector<8x32xi1>
    %351 = vector.broadcast %cst_110 : f32 to vector<8x32xf32>
    %352 = arith.select %350, %270, %351 : vector<8x32xi1>, vector<8x32xf32>
    %353 = arith.truncf %352 : vector<8x32xf32> to vector<8x32xbf16>
    "tpu.trace_start"() <{level = 10 : i32, message = "td,sd->ts"}> : () -> ()
    %cst_111 = arith.constant dense<0.000000e+00> : vector<8x8xf32>
    %354 = tpu.matmul %348, %271, %cst_111 {dimension_numbers = #tpu.dot_dimension_numbers<[1], [1], [0], [0], [0, 0, 1, 0], [], []>} : vector<8x32xbf16>, vector<8x32xbf16>, vector<8x8xf32> -> vector<8x8xf32>
    "tpu.trace_stop"() : () -> ()
    %355 = vector.broadcast %7 : f32 to vector<8x8xf32>
    %356 = arith.mulf %354, %355 : vector<8x8xf32>
    %cst_112 = arith.constant 0xFF800000 : f32
    %357 = vector.broadcast %cst_112 : f32 to vector<8x8xf32>
    %358 = arith.select %4, %356, %357 : vector<8x8xi1>, vector<8x8xf32>
    %cst_113 = arith.constant dense<0xFF800000> : vector<8xf32>
    %359 = vector.multi_reduction <maximumf>, %358, %cst_113 [1] : vector<8x8xf32> to vector<8xf32>
    %360 = vector.shape_cast %359 : vector<8xf32> to vector<8x1xf32>
    %361 = vector.broadcast %360 : vector<8x1xf32> to vector<8x8xf32>
    %362 = arith.subf %358, %361 : vector<8x8xf32>
    %363 = math.exp %362 : vector<8x8xf32>
    %cst_114 = arith.constant dense<0.000000e+00> : vector<8xf32>
    %364 = vector.multi_reduction <add>, %363, %cst_114 [1] : vector<8x8xf32> to vector<8xf32>
    %365 = vector.shape_cast %364 : vector<8xf32> to vector<8x1xf32>
    %366 = tpu.reciprocal %365 {approx = true} : vector<8x1xf32> -> vector<8x1xf32>
    %367 = vector.broadcast %366 : vector<8x1xf32> to vector<8x8xf32>
    %368 = arith.mulf %363, %367 : vector<8x8xf32>
    %369 = arith.truncf %368 : vector<8x8xf32> to vector<8x8xbf16>
    %cst_115 = arith.constant dense<0.000000e+00> : vector<8x32xf32>
    %370 = tpu.matmul %369, %353, %cst_115 {dimension_numbers = #tpu.dot_dimension_numbers<[1], [0], [0], [1], [0, 0, 1, 1], [], []>} : vector<8x8xbf16>, vector<8x32xbf16>, vector<8x32xf32> -> vector<8x32xf32>
    %371 = arith.addf %338, %370 : vector<8x32xf32>
    %c24_i32_116 = arith.constant 24 : i32
    %372 = vector.broadcast %c24_i32_116 : i32 to vector<1x32xi32>
    %373 = arith.cmpi sge, %5, %372 : vector<1x32xi32>
    %c32_i32_117 = arith.constant 32 : i32
    %374 = vector.broadcast %c32_i32_117 : i32 to vector<1x32xi32>
    %375 = arith.cmpi slt, %5, %374 : vector<1x32xi32>
    %376 = arith.andi %373, %375 : vector<1x32xi1>
    %cst_118 = arith.constant 0.000000e+00 : f32
    %377 = vector.shape_cast %376 : vector<1x32xi1> to vector<1x32xi1>
    %378 = vector.broadcast %377 : vector<1x32xi1> to vector<8x32xi1>
    %379 = vector.broadcast %cst_118 : f32 to vector<8x32xf32>
    %380 = arith.select %378, %268, %379 : vector<8x32xi1>, vector<8x32xf32>
    %381 = arith.truncf %380 : vector<8x32xf32> to vector<8x32xbf16>
    %cst_119 = arith.constant 0.000000e+00 : f32
    %382 = vector.shape_cast %376 : vector<1x32xi1> to vector<1x32xi1>
    %383 = vector.broadcast %382 : vector<1x32xi1> to vector<8x32xi1>
    %384 = vector.broadcast %cst_119 : f32 to vector<8x32xf32>
    %385 = arith.select %383, %270, %384 : vector<8x32xi1>, vector<8x32xf32>
    %386 = arith.truncf %385 : vector<8x32xf32> to vector<8x32xbf16>
    "tpu.trace_start"() <{level = 10 : i32, message = "td,sd->ts"}> : () -> ()
    %cst_120 = arith.constant dense<0.000000e+00> : vector<8x8xf32>
    %387 = tpu.matmul %381, %271, %cst_120 {dimension_numbers = #tpu.dot_dimension_numbers<[1], [1], [0], [0], [0, 0, 1, 0], [], []>} : vector<8x32xbf16>, vector<8x32xbf16>, vector<8x8xf32> -> vector<8x8xf32>
    "tpu.trace_stop"() : () -> ()
    %388 = vector.broadcast %7 : f32 to vector<8x8xf32>
    %389 = arith.mulf %387, %388 : vector<8x8xf32>
    %cst_121 = arith.constant 0xFF800000 : f32
    %390 = vector.broadcast %cst_121 : f32 to vector<8x8xf32>
    %391 = arith.select %4, %389, %390 : vector<8x8xi1>, vector<8x8xf32>
    %cst_122 = arith.constant dense<0xFF800000> : vector<8xf32>
    %392 = vector.multi_reduction <maximumf>, %391, %cst_122 [1] : vector<8x8xf32> to vector<8xf32>
    %393 = vector.shape_cast %392 : vector<8xf32> to vector<8x1xf32>
    %394 = vector.broadcast %393 : vector<8x1xf32> to vector<8x8xf32>
    %395 = arith.subf %391, %394 : vector<8x8xf32>
    %396 = math.exp %395 : vector<8x8xf32>
    %cst_123 = arith.constant dense<0.000000e+00> : vector<8xf32>
    %397 = vector.multi_reduction <add>, %396, %cst_123 [1] : vector<8x8xf32> to vector<8xf32>
    %398 = vector.shape_cast %397 : vector<8xf32> to vector<8x1xf32>
    %399 = tpu.reciprocal %398 {approx = true} : vector<8x1xf32> -> vector<8x1xf32>
    %400 = vector.broadcast %399 : vector<8x1xf32> to vector<8x8xf32>
    %401 = arith.mulf %396, %400 : vector<8x8xf32>
    %402 = arith.truncf %401 : vector<8x8xf32> to vector<8x8xbf16>
    %cst_124 = arith.constant dense<0.000000e+00> : vector<8x32xf32>
    %403 = tpu.matmul %402, %386, %cst_124 {dimension_numbers = #tpu.dot_dimension_numbers<[1], [0], [0], [1], [0, 0, 1, 1], [], []>} : vector<8x8xbf16>, vector<8x32xbf16>, vector<8x32xf32> -> vector<8x32xf32>
    %404 = arith.addf %371, %403 : vector<8x32xf32>
    %405 = arith.truncf %404 : vector<8x32xf32> to vector<8x32xbf16>
    %c1_125 = arith.constant 1 : index
    %c0_126 = arith.constant 0 : index
    %c0_127 = arith.constant 0 : index
    %406 = vector.load %arg5[%c1_125, %c0_126, %c0_127] : memref<2x32x32xbf16, #tpu.memory_space<vmem>>, vector<1x32x32xbf16>
    %407 = vector.shape_cast %406 : vector<1x32x32xbf16> to vector<32x32xbf16>
    %cst_128 = arith.constant dense<0.000000e+00> : vector<8x32xf32>
    %408 = tpu.matmul %405, %407, %cst_128 {dimension_numbers = #tpu.dot_dimension_numbers<[1], [0], [0], [1], [0, 0, 1, 1], [], []>} : vector<8x32xbf16>, vector<32x32xbf16>, vector<8x32xf32> -> vector<8x32xf32>
    %c1_129 = arith.constant 1 : index
    %c0_130 = arith.constant 0 : index
    %409 = vector.load %arg6[%c1_129, %c0_130] : memref<2x32xf32, #tpu.memory_space<vmem>>, vector<1x32xf32>
    %410 = vector.shape_cast %409 : vector<1x32xf32> to vector<32xf32>
    %411 = vector.shape_cast %410 : vector<32xf32> to vector<1x32xf32>
    %412 = vector.broadcast %411 : vector<1x32xf32> to vector<8x32xf32>
    %413 = arith.addf %408, %412 : vector<8x32xf32>
    %414 = arith.addf %235, %413 : vector<8x32xf32>
    %c1_131 = arith.constant 1 : index
    %c0_132 = arith.constant 0 : index
    %415 = vector.load %arg7[%c1_131, %c0_132] : memref<2x32xf32, #tpu.memory_space<vmem>>, vector<1x32xf32>
    %416 = vector.shape_cast %415 : vector<1x32xf32> to vector<32xf32>
    %c1_133 = arith.constant 1 : index
    %c0_134 = arith.constant 0 : index
    %417 = vector.load %arg8[%c1_133, %c0_134] : memref<2x32xf32, #tpu.memory_space<vmem>>, vector<1x32xf32>
    %418 = vector.shape_cast %417 : vector<1x32xf32> to vector<32xf32>
    %cst_135 = arith.constant dense<0.000000e+00> : vector<8xf32>
    %419 = vector.multi_reduction <add>, %414, %cst_135 [1] : vector<8x32xf32> to vector<8xf32>
    %420 = vector.shape_cast %419 : vector<8xf32> to vector<8x1xf32>
    %cst_136 = arith.constant 3.200000e+01 : f32
    %421 = vector.broadcast %cst_136 : f32 to vector<8x1xf32>
    %422 = arith.divf %420, %421 : vector<8x1xf32>
    %423 = vector.broadcast %422 : vector<8x1xf32> to vector<8x32xf32>
    %424 = arith.subf %414, %423 : vector<8x32xf32>
    %425 = arith.mulf %424, %424 : vector<8x32xf32>
    %cst_137 = arith.constant dense<0.000000e+00> : vector<8xf32>
    %426 = vector.multi_reduction <add>, %425, %cst_137 [1] : vector<8x32xf32> to vector<8xf32>
    %427 = vector.shape_cast %426 : vector<8xf32> to vector<8x1xf32>
    %cst_138 = arith.constant 3.200000e+01 : f32
    %428 = vector.broadcast %cst_138 : f32 to vector<8x1xf32>
    %429 = arith.divf %427, %428 : vector<8x1xf32>
    %430 = vector.broadcast %422 : vector<8x1xf32> to vector<8x32xf32>
    %431 = arith.subf %414, %430 : vector<8x32xf32>
    %cst_139 = arith.constant 9.99999974E-6 : f32
    %432 = vector.broadcast %cst_139 : f32 to vector<8x1xf32>
    %433 = arith.addf %429, %432 : vector<8x1xf32>
    %434 = math.rsqrt %433 : vector<8x1xf32>
    %435 = vector.broadcast %434 : vector<8x1xf32> to vector<8x32xf32>
    %436 = arith.mulf %431, %435 : vector<8x32xf32>
    %437 = vector.shape_cast %416 : vector<32xf32> to vector<1x32xf32>
    %438 = vector.broadcast %437 : vector<1x32xf32> to vector<8x32xf32>
    %439 = arith.mulf %436, %438 : vector<8x32xf32>
    %440 = vector.shape_cast %418 : vector<32xf32> to vector<1x32xf32>
    %441 = vector.broadcast %440 : vector<1x32xf32> to vector<8x32xf32>
    %442 = arith.addf %439, %441 : vector<8x32xf32>
    %443 = arith.truncf %442 : vector<8x32xf32> to vector<8x32xbf16>
    %c1_140 = arith.constant 1 : index
    %c0_141 = arith.constant 0 : index
    %c0_142 = arith.constant 0 : index
    %444 = vector.load %arg9[%c1_140, %c0_141, %c0_142] : memref<2x32x128xbf16, #tpu.memory_space<vmem>>, vector<1x32x128xbf16>
    %445 = vector.shape_cast %444 : vector<1x32x128xbf16> to vector<32x128xbf16>
    %cst_143 = arith.constant dense<0.000000e+00> : vector<8x128xf32>
    %446 = tpu.matmul %443, %445, %cst_143 {dimension_numbers = #tpu.dot_dimension_numbers<[1], [0], [0], [1], [0, 0, 1, 1], [], []>} : vector<8x32xbf16>, vector<32x128xbf16>, vector<8x128xf32> -> vector<8x128xf32>
    %c1_144 = arith.constant 1 : index
    %c0_145 = arith.constant 0 : index
    %447 = vector.load %arg10[%c1_144, %c0_145] : memref<2x128xf32, #tpu.memory_space<vmem>>, vector<1x128xf32>
    %448 = vector.shape_cast %447 : vector<1x128xf32> to vector<128xf32>
    %449 = vector.shape_cast %448 : vector<128xf32> to vector<1x128xf32>
    %450 = vector.broadcast %449 : vector<1x128xf32> to vector<8x128xf32>
    %451 = arith.addf %446, %450 : vector<8x128xf32>
    %cst_146 = arith.constant 0.000000e+00 : f32
    %452 = vector.broadcast %cst_146 : f32 to vector<8x128xf32>
    %453 = arith.maximumf %451, %452 : vector<8x128xf32>
    %454 = arith.truncf %453 : vector<8x128xf32> to vector<8x128xbf16>
    %c1_147 = arith.constant 1 : index
    %c0_148 = arith.constant 0 : index
    %c0_149 = arith.constant 0 : index
    %455 = vector.load %arg11[%c1_147, %c0_148, %c0_149] : memref<2x128x32xbf16, #tpu.memory_space<vmem>>, vector<1x128x32xbf16>
    %456 = vector.shape_cast %455 : vector<1x128x32xbf16> to vector<128x32xbf16>
    %cst_150 = arith.constant dense<0.000000e+00> : vector<8x32xf32>
    %457 = tpu.matmul %454, %456, %cst_150 {dimension_numbers = #tpu.dot_dimension_numbers<[1], [0], [0], [1], [0, 0, 1, 1], [], []>} : vector<8x128xbf16>, vector<128x32xbf16>, vector<8x32xf32> -> vector<8x32xf32>
    %c1_151 = arith.constant 1 : index
    %c0_152 = arith.constant 0 : index
    %458 = vector.load %arg12[%c1_151, %c0_152] : memref<2x32xf32, #tpu.memory_space<vmem>>, vector<1x32xf32>
    %459 = vector.shape_cast %458 : vector<1x32xf32> to vector<32xf32>
    %460 = vector.shape_cast %459 : vector<32xf32> to vector<1x32xf32>
    %461 = vector.broadcast %460 : vector<1x32xf32> to vector<8x32xf32>
    %462 = arith.addf %457, %461 : vector<8x32xf32>
    %463 = arith.addf %414, %462 : vector<8x32xf32>
    %c0_153 = arith.constant 0 : index
    %c0_154 = arith.constant 0 : index
    %464 = vector.load %arg13[%c0_153, %c0_154] : memref<1x32xf32, #tpu.memory_space<vmem>>, vector<1x32xf32>
    %465 = vector.shape_cast %464 : vector<1x32xf32> to vector<32xf32>
    %c0_155 = arith.constant 0 : index
    %c0_156 = arith.constant 0 : index
    %466 = vector.load %arg14[%c0_155, %c0_156] : memref<1x32xf32, #tpu.memory_space<vmem>>, vector<1x32xf32>
    %467 = vector.shape_cast %466 : vector<1x32xf32> to vector<32xf32>
    %cst_157 = arith.constant dense<0.000000e+00> : vector<8xf32>
    %468 = vector.multi_reduction <add>, %463, %cst_157 [1] : vector<8x32xf32> to vector<8xf32>
    %469 = vector.shape_cast %468 : vector<8xf32> to vector<8x1xf32>
    %cst_158 = arith.constant 3.200000e+01 : f32
    %470 = vector.broadcast %cst_158 : f32 to vector<8x1xf32>
    %471 = arith.divf %469, %470 : vector<8x1xf32>
    %472 = vector.broadcast %471 : vector<8x1xf32> to vector<8x32xf32>
    %473 = arith.subf %463, %472 : vector<8x32xf32>
    %474 = arith.mulf %473, %473 : vector<8x32xf32>
    %cst_159 = arith.constant dense<0.000000e+00> : vector<8xf32>
    %475 = vector.multi_reduction <add>, %474, %cst_159 [1] : vector<8x32xf32> to vector<8xf32>
    %476 = vector.shape_cast %475 : vector<8xf32> to vector<8x1xf32>
    %cst_160 = arith.constant 3.200000e+01 : f32
    %477 = vector.broadcast %cst_160 : f32 to vector<8x1xf32>
    %478 = arith.divf %476, %477 : vector<8x1xf32>
    %479 = vector.broadcast %471 : vector<8x1xf32> to vector<8x32xf32>
    %480 = arith.subf %463, %479 : vector<8x32xf32>
    %cst_161 = arith.constant 9.99999974E-6 : f32
    %481 = vector.broadcast %cst_161 : f32 to vector<8x1xf32>
    %482 = arith.addf %478, %481 : vector<8x1xf32>
    %483 = math.rsqrt %482 : vector<8x1xf32>
    %484 = vector.broadcast %483 : vector<8x1xf32> to vector<8x32xf32>
    %485 = arith.mulf %480, %484 : vector<8x32xf32>
    %486 = vector.shape_cast %465 : vector<32xf32> to vector<1x32xf32>
    %487 = vector.broadcast %486 : vector<1x32xf32> to vector<8x32xf32>
    %488 = arith.mulf %485, %487 : vector<8x32xf32>
    %489 = vector.shape_cast %467 : vector<32xf32> to vector<1x32xf32>
    %490 = vector.broadcast %489 : vector<1x32xf32> to vector<8x32xf32>
    %491 = arith.addf %488, %490 : vector<8x32xf32>
    %492 = arith.truncf %491 : vector<8x32xf32> to vector<8x32xbf16>
    %c0_162 = arith.constant 0 : index
    %c0_163 = arith.constant 0 : index
    %493 = vector.load %arg15[%c0_162, %c0_163] : memref<32x128xbf16, #tpu.memory_space<vmem>>, vector<32x128xbf16>
    %cst_164 = arith.constant dense<0.000000e+00> : vector<8x128xf32>
    %494 = tpu.matmul %492, %493, %cst_164 {dimension_numbers = #tpu.dot_dimension_numbers<[1], [0], [0], [1], [0, 0, 1, 1], [], []>} : vector<8x32xbf16>, vector<32x128xbf16>, vector<8x128xf32> -> vector<8x128xf32>
    %c0_165 = arith.constant 0 : index
    %c0_166 = arith.constant 0 : index
    %495 = vector.load %arg16[%c0_165, %c0_166] : memref<1x128xf32, #tpu.memory_space<vmem>>, vector<1x128xf32>
    %496 = vector.shape_cast %495 : vector<1x128xf32> to vector<128xf32>
    %497 = vector.shape_cast %496 : vector<128xf32> to vector<1x128xf32>
    %498 = vector.broadcast %497 : vector<1x128xf32> to vector<8x128xf32>
    %499 = arith.addf %494, %498 : vector<8x128xf32>
    %500 = vector.shape_cast %499 : vector<8x128xf32> to vector<1x8x128xf32>
    %c0_167 = arith.constant 0 : index
    %c0_168 = arith.constant 0 : index
    %c0_169 = arith.constant 0 : index
    %501 = vector.load %arg17[%c0_167, %c0_168, %c0_169] : memref<1x8x128xf32, #tpu.memory_space<vmem>>, vector<1x8x128xf32>
    tpu.vector_store %arg17[%c0_167, %c0_168, %c0_169], %500 {strides = array<i32>} : memref<1x8x128xf32, #tpu.memory_space<vmem>>, vector<1x8x128xf32>,
    return
  }
  func.func @transform_0(%arg0: i32) -> (i32, i32, i32) {
    %c0_i32 = arith.constant 0 : i32
    %c0_i32_0 = arith.constant 0 : i32
    %c0_i32_1 = arith.constant 0 : i32
    return %arg0, %c0_i32, %c0_i32_0 : i32, i32, i32
  }
  func.func @transform_1(%arg0: i32) -> (i32, i32) {
    %c0_i32 = arith.constant 0 : i32
    %c0_i32_0 = arith.constant 0 : i32
    %c0_i32_1 = arith.constant 0 : i32
    return %c0_i32, %c0_i32_0 : i32, i32
  }
  func.func @transform_2(%arg0: i32) -> (i32, i32) {
    %c0_i32 = arith.constant 0 : i32
    %c0_i32_0 = arith.constant 0 : i32
    %c0_i32_1 = arith.constant 0 : i32
    return %c0_i32, %c0_i32_0 : i32, i32
  }
  func.func @transform_3(%arg0: i32) -> (i32, i32, i32) {
    %c0_i32 = arith.constant 0 : i32
    %c0_i32_0 = arith.constant 0 : i32
    %c0_i32_1 = arith.constant 0 : i32
    %c0_i32_2 = arith.constant 0 : i32
    return %c0_i32, %c0_i32_0, %c0_i32_1 : i32, i32, i32
  }
  func.func @transform_4(%arg0: i32) -> (i32, i32, i32) {
    %c0_i32 = arith.constant 0 : i32
    %c0_i32_0 = arith.constant 0 : i32
    %c0_i32_1 = arith.constant 0 : i32
    %c0_i32_2 = arith.constant 0 : i32
    return %c0_i32, %c0_i32_0, %c0_i32_1 : i32, i32, i32
  }
  func.func @transform_5(%arg0: i32) -> (i32, i32) {
    %c0_i32 = arith.constant 0 : i32
    %c0_i32_0 = arith.constant 0 : i32
    %c0_i32_1 = arith.constant 0 : i32
    return %c0_i32, %c0_i32_0 : i32, i32
  }
  func.func @transform_6(%arg0: i32) -> (i32, i32) {
    %c0_i32 = arith.constant 0 : i32
    %c0_i32_0 = arith.constant 0 : i32
    %c0_i32_1 = arith.constant 0 : i32
    return %c0_i32, %c0_i32_0 : i32, i32
  }
  func.func @transform_7(%arg0: i32) -> (i32, i32) {
    %c0_i32 = arith.constant 0 : i32
    %c0_i32_0 = arith.constant 0 : i32
    %c0_i32_1 = arith.constant 0 : i32
    return %c0_i32, %c0_i32_0 : i32, i32
  }
  func.func @transform_8(%arg0: i32) -> (i32, i32, i32) {
    %c0_i32 = arith.constant 0 : i32
    %c0_i32_0 = arith.constant 0 : i32
    %c0_i32_1 = arith.constant 0 : i32
    %c0_i32_2 = arith.constant 0 : i32
    return %c0_i32, %c0_i32_0, %c0_i32_1 : i32, i32, i32
  }
  func.func @transform_9(%arg0: i32) -> (i32, i32) {
    %c0_i32 = arith.constant 0 : i32
    %c0_i32_0 = arith.constant 0 : i32
    %c0_i32_1 = arith.constant 0 : i32
    return %c0_i32, %c0_i32_0 : i32, i32
  }
  func.func @transform_10(%arg0: i32) -> (i32, i32, i32) {
    %c0_i32 = arith.constant 0 : i32
    %c0_i32_0 = arith.constant 0 : i32
    %c0_i32_1 = arith.constant 0 : i32
    %c0_i32_2 = arith.constant 0 : i32
    return %c0_i32, %c0_i32_0, %c0_i32_1 : i32, i32, i32
  }
  func.func @transform_11(%arg0: i32) -> (i32, i32) {
    %c0_i32 = arith.constant 0 : i32
    %c0_i32_0 = arith.constant 0 : i32
    %c0_i32_1 = arith.constant 0 : i32
    return %c0_i32, %c0_i32_0 : i32, i32
  }
  func.func @transform_12(%arg0: i32) -> (i32, i32) {
    %c0_i32 = arith.constant 0 : i32
    %c0_i32_0 = arith.constant 0 : i32
    %c0_i32_1 = arith.constant 0 : i32
    return %c0_i32, %c0_i32_0 : i32, i32
  }
  func.func @transform_13(%arg0: i32) -> (i32, i32) {
    %c0_i32 = arith.constant 0 : i32
    %c0_i32_0 = arith.constant 0 : i32
    %c0_i32_1 = arith.constant 0 : i32
    return %c0_i32, %c0_i32_0 : i32, i32
  }
  func.func @transform_14(%arg0: i32) -> (i32, i32) {
    %c0_i32 = arith.constant 0 : i32
    %c0_i32_0 = arith.constant 0 : i32
    %c0_i32_1 = arith.constant 0 : i32
    return %c0_i32, %c0_i32_0 : i32, i32
  }
  func.func @transform_15(%arg0: i32) -> (i32, i32) {
    %c0_i32 = arith.constant 0 : i32
    %c0_i32_0 = arith.constant 0 : i32
    %c0_i32_1 = arith.constant 0 : i32
    return %c0_i32, %c0_i32_0 : i32, i32
  }
  func.func @transform_16(%arg0: i32) -> (i32, i32, i32) {
    %c0_i32 = arith.constant 0 : i32
    %c0_i32_0 = arith.constant 0 : i32
    %c0_i32_1 = arith.constant 0 : i32
    return %arg0, %c0_i32, %c0_i32_0 : i32, i32, i32
  }
}

</mosaic_0001>

<llo_original>
// kernel: tpu_custom_call.1
$region0: #{tpu_custom_call.1}
  #allocation0 [shape = 'u32[]', space=smem, size = 0x4, offset = 0x4, fixed_abs, tag = 'smem constant byte address 0x4 - core index']
  #allocation1 [shape = 'u32[144,128]{1,0:T(1,128)}', space=vmem, size = 0x12000, scoped, tag = 'internal scratch']
  %s0 = inlined_call_operand.vmem [shape: f32[2,8,32], index: 0, kind: input, shape index: {}]
  %s1 = inlined_call_operand.vmem [shape: f32[2,32], index: 1, kind: input, shape index: {}]
  %s2 = inlined_call_operand.vmem [shape: f32[2,32], index: 2, kind: input, shape index: {}]
  %s3 = inlined_call_operand.vmem [shape: bf16[2,32,96], index: 3, kind: input, shape index: {}]
  %s4 = inlined_call_operand.vmem [shape: bf16[2,32,32], index: 4, kind: input, shape index: {}]
  %s5 = inlined_call_operand.vmem [shape: f32[2,32], index: 5, kind: input, shape index: {}]
  %s6 = inlined_call_operand.vmem [shape: f32[2,32], index: 6, kind: input, shape index: {}]
  %s7 = inlined_call_operand.vmem [shape: f32[2,32], index: 7, kind: input, shape index: {}]
  %s8 = inlined_call_operand.vmem [shape: bf16[2,32,128], index: 8, kind: input, shape index: {}]
  %s9 = inlined_call_operand.vmem [shape: f32[2,128], index: 9, kind: input, shape index: {}]
  %s10 = inlined_call_operand.vmem [shape: bf16[2,128,32], index: 10, kind: input, shape index: {}]
  %s11 = inlined_call_operand.vmem [shape: f32[2,32], index: 11, kind: input, shape index: {}]
  %s12 = inlined_call_operand.vmem [shape: f32[1,32], index: 12, kind: input, shape index: {}]
  %s13 = inlined_call_operand.vmem [shape: f32[1,32], index: 13, kind: input, shape index: {}]
  %s14 = inlined_call_operand.vmem [shape: bf16[32,128], index: 14, kind: input, shape index: {}]
  %s15 = inlined_call_operand.vmem [shape: f32[1,128], index: 15, kind: input, shape index: {}]
  %s16 = inlined_call_operand.hbm [shape: f32[2,8,128], index: 16, kind: output, shape index: {}]
  %s17 = sld [smem:[#allocation0]]
  $region97: #{tpu_custom_call.1} parent=0
    _
  %s19 = ssub.s32 1, %s17
  %s20 = scalar_select 0, %s19, %s17
  $region1: #{tpu_custom_call.1} parent=0
    #allocation2 [shape = 'u8[8192]{0}', space=vmem, size = 0x2000, scoped, tag = 'output window, operand 0']
    #allocation3 [shape = 's32[2]{0}', space=sflag, size = 0x8, scoped, tag = 'scoped memory for tpu_custom_call.1']
    %21 = vsyncpa [#allocation3], 0
    %s22 = scalar_lea.sflag [#allocation3], 1
    %23 = vsyncpa %s22, 0
    loop: start=0, step=1, limit=4
    $region2: #{tpu_custom_call.1} parent=1 // loop_pre_header
      _
    $region3: #{tpu_custom_call.1} parent=1 // loop_header
      %s25 = sphi 0, %s29
      %p26 = scmp.ge.s32.totalorder %s25, 4
      %s35 = sphi 0, %s37
      %s38 = sphi 0, %s35
      %s39 = sphi 0, %s38
      %s55 = sphi 0, %s39
      %s59 = sphi 0, %s59
      %s61 = sphi 0, %s59
      %s62 = sphi 0, %s61
      %s76 = sphi 0, %s62
      %s80 = sphi 0, %s80
      %s82 = sphi 0, %s80
      %s83 = sphi 0, %s82
      %s97 = sphi 0, %s83
      %s101 = sphi 0, %s101
      %s103 = sphi 0, %s101
      %s104 = sphi 0, %s103
      %s118 = sphi 0, %s104
      %s122 = sphi 0, %s122
      %s124 = sphi 0, %s122
      %s125 = sphi 0, %s124
      %s139 = sphi 0, %s125
      %s143 = sphi 0, %s143
      %s145 = sphi 0, %s143
      %s146 = sphi 0, %s145
      %s160 = sphi 0, %s146
      %s164 = sphi 0, %s164
      %s166 = sphi 0, %s164
      %s167 = sphi 0, %s166
      %s181 = sphi 0, %s167
      %s185 = sphi 0, %s185
      %s187 = sphi 0, %s185
      %s188 = sphi 0, %s187
      %s202 = sphi 0, %s188
      %s206 = sphi 0, %s206
      %s208 = sphi 0, %s206
      %s209 = sphi 0, %s208
      %s223 = sphi 0, %s209
      %s227 = sphi 0, %s227
      %s229 = sphi 0, %s227
      %s230 = sphi 0, %s229
      %s244 = sphi 0, %s230
      %s248 = sphi 0, %s248
      %s250 = sphi 0, %s248
      %s251 = sphi 0, %s250
      %s265 = sphi 0, %s251
      %s269 = sphi 0, %s269
      %s271 = sphi 0, %s269
      %s272 = sphi 0, %s271
      %s286 = sphi 0, %s272
      %s290 = sphi 0, %s290
      %s292 = sphi 0, %s290
      %s293 = sphi 0, %s292
      %s307 = sphi 0, %s293
      %s311 = sphi 0, %s311
      %s313 = sphi 0, %s311
      %s314 = sphi 0, %s313
      %s328 = sphi 0, %s314
      %s332 = sphi 0, %s332
      %s334 = sphi 0, %s332
      %s335 = sphi 0, %s334
      %s349 = sphi 0, %s335
      %s353 = sphi 0, %s353
      %s355 = sphi 0, %s353
      %s356 = sphi 0, %s355
      %s370 = sphi 0, %s356
      %s376 = sphi 0, %s378
      %s379 = sphi 0, %s376
      %s380 = sphi 0, %s379
      %s396 = sphi 0, %s380
    $region4: #{tpu_custom_call.1} parent=1 // loop_header_branch
      %28 = sbr.rel (%p26) target = $region8
    $region5: #{tpu_custom_call.1} parent=1 // loop_body
      %s30 = ssub.s32 %s25, 1
      %s31 = ssub.s32 %s25, 2
      %s32 = sadd.s32 %s25, 1
      %s33 = ssub.s32 %s25, %s32
      %p34 = scmp.eq.s32.totalorder %s33, 0
      %s36 = sadd.s32 %s35, 1
      %s37 = scalar_select %p34, %s35, %s36
      %p40 = pneg %p34
      %p41 = scmp.eq.s32.totalorder %s25, 1
      %p42 = por %p40, %p41
      %p43 = scmp.ne.s32.totalorder %s35, %s38
      %p44 = scmp.eq.s32.totalorder %s25, 0
      %p45 = por %p43, %p44
      %p46 = scmp.ne.s32.totalorder %s35, %s38
      %p47 = scmp.eq.s32.totalorder %s30, 1
      %p48 = por %p46, %p47
      %p49 = scmp.ne.s32.totalorder %s38, %s39
      %p50 = scmp.eq.s32.totalorder %s30, 0
      %p51 = por %p49, %p50
      %p52 = scmp.ne.s32.totalorder %s38, %s39
      %p53 = scmp.eq.s32.totalorder %s31, 1
      %p54 = por %p52, %p53
      %p56 = scmp.ne.s32.totalorder %s39, %s55
      %p57 = scmp.eq.s32.totalorder %s31, 0
      %p58 = por %p56, %p57
      %s60 = sadd.s32 %s59, 1
      %p63 = scmp.eq.s32.totalorder %s25, 1
      %p64 = scmp.ne.s32.totalorder %s59, %s61
      %p65 = scmp.eq.s32.totalorder %s25, 0
      %p66 = por %p64, %p65
      %p67 = scmp.ne.s32.totalorder %s59, %s61
      %p68 = scmp.eq.s32.totalorder %s30, 1
      %p69 = por %p67, %p68
      %p70 = scmp.ne.s32.totalorder %s61, %s62
      %p71 = scmp.eq.s32.totalorder %s30, 0
      %p72 = por %p70, %p71
      %p73 = scmp.ne.s32.totalorder %s61, %s62
      %p74 = scmp.eq.s32.totalorder %s31, 1
      %p75 = por %p73, %p74
      %p77 = scmp.ne.s32.totalorder %s62, %s76
      %p78 = scmp.eq.s32.totalorder %s31, 0
      %p79 = por %p77, %p78
      %s81 = sadd.s32 %s80, 1
      %p84 = scmp.eq.s32.totalorder %s25, 1
      %p85 = scmp.ne.s32.totalorder %s80, %s82
      %p86 = scmp.eq.s32.totalorder %s25, 0
      %p87 = por %p85, %p86
      %p88 = scmp.ne.s32.totalorder %s80, %s82
      %p89 = scmp.eq.s32.totalorder %s30, 1
      %p90 = por %p88, %p89
      %p91 = scmp.ne.s32.totalorder %s82, %s83
      %p92 = scmp.eq.s32.totalorder %s30, 0
      %p93 = por %p91, %p92
      %p94 = scmp.ne.s32.totalorder %s82, %s83
      %p95 = scmp.eq.s32.totalorder %s31, 1
      %p96 = por %p94, %p95
      %p98 = scmp.ne.s32.totalorder %s83, %s97
      %p99 = scmp.eq.s32.totalorder %s31, 0
      %p100 = por %p98, %p99
      %s102 = sadd.s32 %s101, 1
      %p105 = scmp.eq.s32.totalorder %s25, 1
      %p106 = scmp.ne.s32.totalorder %s101, %s103
      %p107 = scmp.eq.s32.totalorder %s25, 0
      %p108 = por %p106, %p107
      %p109 = scmp.ne.s32.totalorder %s101, %s103
      %p110 = scmp.eq.s32.totalorder %s30, 1
      %p111 = por %p109, %p110
      %p112 = scmp.ne.s32.totalorder %s103, %s104
      %p113 = scmp.eq.s32.totalorder %s30, 0
      %p114 = por %p112, %p113
      %p115 = scmp.ne.s32.totalorder %s103, %s104
      %p116 = scmp.eq.s32.totalorder %s31, 1
      %p117 = por %p115, %p116
      %p119 = scmp.ne.s32.totalorder %s104, %s118
      %p120 = scmp.eq.s32.totalorder %s31, 0
      %p121 = por %p119, %p120
      %s123 = sadd.s32 %s122, 1
      %p126 = scmp.eq.s32.totalorder %s25, 1
      %p127 = scmp.ne.s32.totalorder %s122, %s124
      %p128 = scmp.eq.s32.totalorder %s25, 0
      %p129 = por %p127, %p128
      %p130 = scmp.ne.s32.totalorder %s122, %s124
      %p131 = scmp.eq.s32.totalorder %s30, 1
      %p132 = por %p130, %p131
      %p133 = scmp.ne.s32.totalorder %s124, %s125
      %p134 = scmp.eq.s32.totalorder %s30, 0
      %p135 = por %p133, %p134
      %p136 = scmp.ne.s32.totalorder %s124, %s125
      %p137 = scmp.eq.s32.totalorder %s31, 1
      %p138 = por %p136, %p137
      %p140 = scmp.ne.s32.totalorder %s125, %s139
      %p141 = scmp.eq.s32.totalorder %s31, 0
      %p142 = por %p140, %p141
      %s144 = sadd.s32 %s143, 1
      %p147 = scmp.eq.s32.totalorder %s25, 1
      %p148 = scmp.ne.s32.totalorder %s143, %s145
      %p149 = scmp.eq.s32.totalorder %s25, 0
      %p150 = por %p148, %p149
      %p151 = scmp.ne.s32.totalorder %s143, %s145
      %p152 = scmp.eq.s32.totalorder %s30, 1
      %p153 = por %p151, %p152
      %p154 = scmp.ne.s32.totalorder %s145, %s146
      %p155 = scmp.eq.s32.totalorder %s30, 0
      %p156 = por %p154, %p155
      %p157 = scmp.ne.s32.totalorder %s145, %s146
      %p158 = scmp.eq.s32.totalorder %s31, 1
      %p159 = por %p157, %p158
      %p161 = scmp.ne.s32.totalorder %s146, %s160
      %p162 = scmp.eq.s32.totalorder %s31, 0
      %p163 = por %p161, %p162
      %s165 = sadd.s32 %s164, 1
      %p168 = scmp.eq.s32.totalorder %s25, 1
      %p169 = scmp.ne.s32.totalorder %s164, %s166
      %p170 = scmp.eq.s32.totalorder %s25, 0
      %p171 = por %p169, %p170
      %p172 = scmp.ne.s32.totalorder %s164, %s166
      %p173 = scmp.eq.s32.totalorder %s30, 1
      %p174 = por %p172, %p173
      %p175 = scmp.ne.s32.totalorder %s166, %s167
      %p176 = scmp.eq.s32.totalorder %s30, 0
      %p177 = por %p175, %p176
      %p178 = scmp.ne.s32.totalorder %s166, %s167
      %p179 = scmp.eq.s32.totalorder %s31, 1
      %p180 = por %p178, %p179
      %p182 = scmp.ne.s32.totalorder %s167, %s181
      %p183 = scmp.eq.s32.totalorder %s31, 0
      %p184 = por %p182, %p183
      %s186 = sadd.s32 %s185, 1
      %p189 = scmp.eq.s32.totalorder %s25, 1
      %p190 = scmp.ne.s32.totalorder %s185, %s187
      %p191 = scmp.eq.s32.totalorder %s25, 0
      %p192 = por %p190, %p191
      %p193 = scmp.ne.s32.totalorder %s185, %s187
      %p194 = scmp.eq.s32.totalorder %s30, 1
      %p195 = por %p193, %p194
      %p196 = scmp.ne.s32.totalorder %s187, %s188
      %p197 = scmp.eq.s32.totalorder %s30, 0
      %p198 = por %p196, %p197
      %p199 = scmp.ne.s32.totalorder %s187, %s188
      %p200 = scmp.eq.s32.totalorder %s31, 1
      %p201 = por %p199, %p200
      %p203 = scmp.ne.s32.totalorder %s188, %s202
      %p204 = scmp.eq.s32.totalorder %s31, 0
      %p205 = por %p203, %p204
      %s207 = sadd.s32 %s206, 1
      %p210 = scmp.eq.s32.totalorder %s25, 1
      %p211 = scmp.ne.s32.totalorder %s206, %s208
      %p212 = scmp.eq.s32.totalorder %s25, 0
      %p213 = por %p211, %p212
      %p214 = scmp.ne.s32.totalorder %s206, %s208
      %p215 = scmp.eq.s32.totalorder %s30, 1
      %p216 = por %p214, %p215
      %p217 = scmp.ne.s32.totalorder %s208, %s209
      %p218 = scmp.eq.s32.totalorder %s30, 0
      %p219 = por %p217, %p218
      %p220 = scmp.ne.s32.totalorder %s208, %s209
      %p221 = scmp.eq.s32.totalorder %s31, 1
      %p222 = por %p220, %p221
      %p224 = scmp.ne.s32.totalorder %s209, %s223
      %p225 = scmp.eq.s32.totalorder %s31, 0
      %p226 = por %p224, %p225
      %s228 = sadd.s32 %s227, 1
      %p231 = scmp.eq.s32.totalorder %s25, 1
      %p232 = scmp.ne.s32.totalorder %s227, %s229
      %p233 = scmp.eq.s32.totalorder %s25, 0
      %p234 = por %p232, %p233
      %p235 = scmp.ne.s32.totalorder %s227, %s229
      %p236 = scmp.eq.s32.totalorder %s30, 1
      %p237 = por %p235, %p236
      %p238 = scmp.ne.s32.totalorder %s229, %s230
      %p239 = scmp.eq.s32.totalorder %s30, 0
      %p240 = por %p238, %p239
      %p241 = scmp.ne.s32.totalorder %s229, %s230
      %p242 = scmp.eq.s32.totalorder %s31, 1
      %p243 = por %p241, %p242
      %p245 = scmp.ne.s32.totalorder %s230, %s244
      %p246 = scmp.eq.s32.totalorder %s31, 0
      %p247 = por %p245, %p246
      %s249 = sadd.s32 %s248, 1
      %p252 = scmp.eq.s32.totalorder %s25, 1
      %p253 = scmp.ne.s32.totalorder %s248, %s250
      %p254 = scmp.eq.s32.totalorder %s25, 0
      %p255 = por %p253, %p254
      %p256 = scmp.ne.s32.totalorder %s248, %s250
      %p257 = scmp.eq.s32.totalorder %s30, 1
      %p258 = por %p256, %p257
      %p259 = scmp.ne.s32.totalorder %s250, %s251
      %p260 = scmp.eq.s32.totalorder %s30, 0
      %p261 = por %p259, %p260
      %p262 = scmp.ne.s32.totalorder %s250, %s251
      %p263 = scmp.eq.s32.totalorder %s31, 1
      %p264 = por %p262, %p263
      %p266 = scmp.ne.s32.totalorder %s251, %s265
      %p267 = scmp.eq.s32.totalorder %s31, 0
      %p268 = por %p266, %p267
      %s270 = sadd.s32 %s269, 1
      %p273 = scmp.eq.s32.totalorder %s25, 1
      %p274 = scmp.ne.s32.totalorder %s269, %s271
      %p275 = scmp.eq.s32.totalorder %s25, 0
      %p276 = por %p274, %p275
      %p277 = scmp.ne.s32.totalorder %s269, %s271
      %p278 = scmp.eq.s32.totalorder %s30, 1
      %p279 = por %p277, %p278
      %p280 = scmp.ne.s32.totalorder %s271, %s272
      %p281 = scmp.eq.s32.totalorder %s30, 0
      %p282 = por %p280, %p281
      %p283 = scmp.ne.s32.totalorder %s271, %s272
      %p284 = scmp.eq.s32.totalorder %s31, 1
      %p285 = por %p283, %p284
      %p287 = scmp.ne.s32.totalorder %s272, %s286
      %p288 = scmp.eq.s32.totalorder %s31, 0
      %p289 = por %p287, %p288
      %s291 = sadd.s32 %s290, 1
      %p294 = scmp.eq.s32.totalorder %s25, 1
      %p295 = scmp.ne.s32.totalorder %s290, %s292
      %p296 = scmp.eq.s32.totalorder %s25, 0
      %p297 = por %p295, %p296
      %p298 = scmp.ne.s32.totalorder %s290, %s292
      %p299 = scmp.eq.s32.totalorder %s30, 1
      %p300 = por %p298, %p299
      %p301 = scmp.ne.s32.totalorder %s292, %s293
      %p302 = scmp.eq.s32.totalorder %s30, 0
      %p303 = por %p301, %p302
      %p304 = scmp.ne.s32.totalorder %s292, %s293
      %p305 = scmp.eq.s32.totalorder %s31, 1
      %p306 = por %p304, %p305
      %p308 = scmp.ne.s32.totalorder %s293, %s307
      %p309 = scmp.eq.s32.totalorder %s31, 0
      %p310 = por %p308, %p309
      %s312 = sadd.s32 %s311, 1
      %p315 = scmp.eq.s32.totalorder %s25, 1
      %p316 = scmp.ne.s32.totalorder %s311, %s313
      %p317 = scmp.eq.s32.totalorder %s25, 0
      %p318 = por %p316, %p317
      %p319 = scmp.ne.s32.totalorder %s311, %s313
      %p320 = scmp.eq.s32.totalorder %s30, 1
      %p321 = por %p319, %p320
      %p322 = scmp.ne.s32.totalorder %s313, %s314
      %p323 = scmp.eq.s32.totalorder %s30, 0
      %p324 = por %p322, %p323
      %p325 = scmp.ne.s32.totalorder %s313, %s314
      %p326 = scmp.eq.s32.totalorder %s31, 1
      %p327 = por %p325, %p326
      %p329 = scmp.ne.s32.totalorder %s314, %s328
      %p330 = scmp.eq.s32.totalorder %s31, 0
      %p331 = por %p329, %p330
      %s333 = sadd.s32 %s332, 1
      %p336 = scmp.eq.s32.totalorder %s25, 1
      %p337 = scmp.ne.s32.totalorder %s332, %s334
      %p338 = scmp.eq.s32.totalorder %s25, 0
      %p339 = por %p337, %p338
      %p340 = scmp.ne.s32.totalorder %s332, %s334
      %p341 = scmp.eq.s32.totalorder %s30, 1
      %p342 = por %p340, %p341
      %p343 = scmp.ne.s32.totalorder %s334, %s335
      %p344 = scmp.eq.s32.totalorder %s30, 0
      %p345 = por %p343, %p344
      %p346 = scmp.ne.s32.totalorder %s334, %s335
      %p347 = scmp.eq.s32.totalorder %s31, 1
      %p348 = por %p346, %p347
      %p350 = scmp.ne.s32.totalorder %s335, %s349
      %p351 = scmp.eq.s32.totalorder %s31, 0
      %p352 = por %p350, %p351
      %s354 = sadd.s32 %s353, 1
      %p357 = scmp.eq.s32.totalorder %s25, 1
      %p358 = scmp.ne.s32.totalorder %s353, %s355
      %p359 = scmp.eq.s32.totalorder %s25, 0
      %p360 = por %p358, %p359
      %p361 = scmp.ne.s32.totalorder %s353, %s355
      %p362 = scmp.eq.s32.totalorder %s30, 1
      %p363 = por %p361, %p362
      %p364 = scmp.ne.s32.totalorder %s355, %s356
      %p365 = scmp.eq.s32.totalorder %s30, 0
      %p366 = por %p364, %p365
      %p367 = scmp.ne.s32.totalorder %s355, %s356
      %p368 = scmp.eq.s32.totalorder %s31, 1
      %p369 = por %p367, %p368
      %p371 = scmp.ne.s32.totalorder %s356, %s370
      %p372 = scmp.eq.s32.totalorder %s31, 0
      %p373 = por %p371, %p372
      %s374 = ssub.s32 %s25, %s32
      %p375 = scmp.eq.s32.totalorder %s374, 0
      %s377 = sadd.s32 %s376, 1
      %s378 = scalar_select %p375, %s376, %s377
      %p381 = pneg %p375
      %p382 = scmp.eq.s32.totalorder %s25, 1
      %p383 = por %p381, %p382
      %p384 = scmp.ne.s32.totalorder %s376, %s379
      %p385 = scmp.eq.s32.totalorder %s25, 0
      %p386 = por %p384, %p385
      %p387 = scmp.ne.s32.totalorder %s376, %s379
      %p388 = scmp.eq.s32.totalorder %s30, 1
      %p389 = por %p387, %p388
      %p390 = scmp.ne.s32.totalorder %s379, %s380
      %p391 = scmp.eq.s32.totalorder %s30, 0
      %p392 = por %p390, %p391
      %p393 = scmp.ne.s32.totalorder %s379, %s380
      %p394 = scmp.eq.s32.totalorder %s31, 1
      %p395 = por %p393, %p394
      %p397 = scmp.ne.s32.totalorder %s380, %s396
      %p398 = scmp.eq.s32.totalorder %s31, 0
      %p399 = por %p397, %p398
      %p400 = scmp.le.s32.totalorder 1, %s25
      %p401 = scmp.lt.s32.totalorder %s25, 3
      %p402 = pnand %p400, %p401
      %p403 = pneg %p402
      // Predicated region
      $region9: #{tpu_custom_call.1} parent=5 // pred_check
        _
      $region10: #{tpu_custom_call.1} parent=5 // pred_check_branch
        %405 = sbr.rel (%p402) target = $region12
      $region11: #{tpu_custom_call.1} parent=5 // pred_region
        %s406 = ssub.s32 %s25, 1
        // Predicated region
        $region13: #{tpu_custom_call.1} parent=11 // pred_check
          %p407 = pneg %p72
        $region14: #{tpu_custom_call.1} parent=11 // pred_check_branch
          %409 = sbr.rel (%p407) target = $region16
        $region15: #{tpu_custom_call.1} parent=11 // pred_region
          _
        $region16: #{tpu_custom_call.1} parent=11 // pred_fallthru
          _
        // Predicated region
        $region17: #{tpu_custom_call.1} parent=11 // pred_check
          %p410 = pneg %p93
        $region18: #{tpu_custom_call.1} parent=11 // pred_check_branch
          %412 = sbr.rel (%p410) target = $region20
        $region19: #{tpu_custom_call.1} parent=11 // pred_region
          _
        $region20: #{tpu_custom_call.1} parent=11 // pred_fallthru
          _
        // Predicated region
        $region21: #{tpu_custom_call.1} parent=11 // pred_check
          %p413 = pneg %p114
        $region22: #{tpu_custom_call.1} parent=11 // pred_check_branch
          %415 = sbr.rel (%p413) target = $region24
        $region23: #{tpu_custom_call.1} parent=11 // pred_region
          _
        $region24: #{tpu_custom_call.1} parent=11 // pred_fallthru
          _
        // Predicated region
        $region25: #{tpu_custom_call.1} parent=11 // pred_check
          %p416 = pneg %p135
        $region26: #{tpu_custom_call.1} parent=11 // pred_check_branch
          %418 = sbr.rel (%p416) target = $region28
        $region27: #{tpu_custom_call.1} parent=11 // pred_region
          _
        $region28: #{tpu_custom_call.1} parent=11 // pred_fallthru
          _
        // Predicated region
        $region29: #{tpu_custom_call.1} parent=11 // pred_check
          %p419 = pneg %p156
        $region30: #{tpu_custom_call.1} parent=11 // pred_check_branch
          %421 = sbr.rel (%p419) target = $region32
        $region31: #{tpu_custom_call.1} parent=11 // pred_region
          _
        $region32: #{tpu_custom_call.1} parent=11 // pred_fallthru
          _
        // Predicated region
        $region33: #{tpu_custom_call.1} parent=11 // pred_check
          %p422 = pneg %p177
        $region34: #{tpu_custom_call.1} parent=11 // pred_check_branch
          %424 = sbr.rel (%p422) target = $region36
        $region35: #{tpu_custom_call.1} parent=11 // pred_region
          _
        $region36: #{tpu_custom_call.1} parent=11 // pred_fallthru
          _
        // Predicated region
        $region37: #{tpu_custom_call.1} parent=11 // pred_check
          %p425 = pneg %p198
        $region38: #{tpu_custom_call.1} parent=11 // pred_check_branch
          %427 = sbr.rel (%p425) target = $region40
        $region39: #{tpu_custom_call.1} parent=11 // pred_region
          _
        $region40: #{tpu_custom_call.1} parent=11 // pred_fallthru
          _
        // Predicated region
        $region41: #{tpu_custom_call.1} parent=11 // pred_check
          %p428 = pneg %p219
        $region42: #{tpu_custom_call.1} parent=11 // pred_check_branch
          %430 = sbr.rel (%p428) target = $region44
        $region43: #{tpu_custom_call.1} parent=11 // pred_region
          _
        $region44: #{tpu_custom_call.1} parent=11 // pred_fallthru
          _
        // Predicated region
        $region45: #{tpu_custom_call.1} parent=11 // pred_check
          %p431 = pneg %p240
        $region46: #{tpu_custom_call.1} parent=11 // pred_check_branch
          %433 = sbr.rel (%p431) target = $region48
        $region47: #{tpu_custom_call.1} parent=11 // pred_region
          _
        $region48: #{tpu_custom_call.1} parent=11 // pred_fallthru
          _
        // Predicated region
        $region49: #{tpu_custom_call.1} parent=11 // pred_check
          %p434 = pneg %p261
        $region50: #{tpu_custom_call.1} parent=11 // pred_check_branch
          %436 = sbr.rel (%p434) target = $region52
        $region51: #{tpu_custom_call.1} parent=11 // pred_region
          _
        $region52: #{tpu_custom_call.1} parent=11 // pred_fallthru
          _
        // Predicated region
        $region53: #{tpu_custom_call.1} parent=11 // pred_check
          %p437 = pneg %p282
        $region54: #{tpu_custom_call.1} parent=11 // pred_check_branch
          %439 = sbr.rel (%p437) target = $region56
        $region55: #{tpu_custom_call.1} parent=11 // pred_region
          _
        $region56: #{tpu_custom_call.1} parent=11 // pred_fallthru
          _
        // Predicated region
        $region57: #{tpu_custom_call.1} parent=11 // pred_check
          %p440 = pneg %p303
        $region58: #{tpu_custom_call.1} parent=11 // pred_check_branch
          %442 = sbr.rel (%p440) target = $region60
        $region59: #{tpu_custom_call.1} parent=11 // pred_region
          _
        $region60: #{tpu_custom_call.1} parent=11 // pred_fallthru
          _
        // Predicated region
        $region61: #{tpu_custom_call.1} parent=11 // pred_check
          %p443 = pneg %p324
        $region62: #{tpu_custom_call.1} parent=11 // pred_check_branch
          %445 = sbr.rel (%p443) target = $region64
        $region63: #{tpu_custom_call.1} parent=11 // pred_region
          _
        $region64: #{tpu_custom_call.1} parent=11 // pred_fallthru
          _
        // Predicated region
        $region65: #{tpu_custom_call.1} parent=11 // pred_check
          %p446 = pneg %p345
        $region66: #{tpu_custom_call.1} parent=11 // pred_check_branch
          %448 = sbr.rel (%p446) target = $region68
        $region67: #{tpu_custom_call.1} parent=11 // pred_region
          _
        $region68: #{tpu_custom_call.1} parent=11 // pred_fallthru
          _
        // Predicated region
        $region69: #{tpu_custom_call.1} parent=11 // pred_check
          %p449 = pneg %p366
        $region70: #{tpu_custom_call.1} parent=11 // pred_check_branch
          %451 = sbr.rel (%p449) target = $region72
        $region71: #{tpu_custom_call.1} parent=11 // pred_region
          _
        $region72: #{tpu_custom_call.1} parent=11 // pred_fallthru
          _
      $region12: #{tpu_custom_call.1} parent=5 // pred_fallthru
        _
      %p452 = scmp.lt.s32.totalorder %s25, 2
      // Predicated region
      $region73: #{tpu_custom_call.1} parent=5 // pred_check
        %p453 = pneg %p452
      $region74: #{tpu_custom_call.1} parent=5 // pred_check_branch
        %455 = sbr.rel (%p453) target = $region76
      $region75: #{tpu_custom_call.1} parent=5 // pred_region
        // Predicated region
        $region77: #{tpu_custom_call.1} parent=75 // pred_check
          %p456 = pneg %p45
        $region78: #{tpu_custom_call.1} parent=75 // pred_check_branch
          %458 = sbr.rel (%p456) target = $region80
        $region79: #{tpu_custom_call.1} parent=75 // pred_region
          %p459 = scmp.lt.s32.totalorder %s25, 1
          %s460 = scalar_select %p459, %s25, 1
          %s461 = smul.addr %s460, 8
          %s462 = scalar_lea.vmem %s0, %s461
        $region80: #{tpu_custom_call.1} parent=75 // pred_fallthru
          _
      $region76: #{tpu_custom_call.1} parent=5 // pred_fallthru
        _
      %p463 = scmp.le.s32.totalorder 1, %s25
      %p464 = scmp.lt.s32.totalorder %s25, 3
      %p465 = pnand %p463, %p464
      %p466 = pneg %p465
      // Predicated region
      $region81: #{tpu_custom_call.1} parent=5 // pred_check
        _
      $region82: #{tpu_custom_call.1} parent=5 // pred_check_branch
        %468 = sbr.rel (%p465) target = $region84
      $region83: #{tpu_custom_call.1} parent=5 // pred_region
        %s469 = ssub.s32 %s25, 1
        %p470 = scmp.lt.s32.totalorder %s30, 1
        %s471 = scalar_select %p470, %s30, 1
        %s472 = smul.addr %s471, 8
        %s473 = scalar_lea.vmem %s0, %s472
        %p474 = pneg %p51
        %p475 = pneg %p48
        %p476 = pneg %p72
        %p477 = pneg %p69
        %p478 = pneg %p93
        %p479 = pneg %p90
        %p480 = pneg %p114
        %p481 = pneg %p111
        %p482 = pneg %p135
        %p483 = pneg %p132
        %p484 = pneg %p156
        %p485 = pneg %p153
        %p486 = pneg %p177
        %p487 = pneg %p174
        %p488 = pneg %p198
        %p489 = pneg %p195
        %p490 = pneg %p219
        %p491 = pneg %p216
        %p492 = pneg %p240
        %p493 = pneg %p237
        %p494 = pneg %p261
        %p495 = pneg %p258
        %p496 = pneg %p282
        %p497 = pneg %p279
        %p498 = pneg %p303
        %p499 = pneg %p300
        %p500 = pneg %p324
        %p501 = pneg %p321
        %p502 = pneg %p345
        %p503 = pneg %p342
        %p504 = pneg %p366
        %p505 = pneg %p363
        %p506 = pneg %p392
        %p507 = pneg %p389
        %s508 = sand.u32 %s379, 1
        %s509 = scalar_lea.sflag [#allocation3], %s508
        %s510 = sand.u32 %s379, 1
        %s511 = smul.addr %s510, 8
        %s512 = scalar_lea.vmem [#allocation2], %s511
        %p513 = scmp.lt.s32.totalorder %s30, 1
        %s514 = scalar_select %p513, %s30, 1
        %s515 = smul.addr %s514, 8
        %s516 = scalar_lea.vmem %s0, %s515
        %v518 = vld [vmem:[%s516] sm:$0xff]
        %v519 = vlaneseq
        %v520 = vshrl.u32 %v519, 7
        %v521 = vlaneseq
        %v522 = vand.u32 %v521, 127
        %vm523 = vcmp.le.s32.totalorder %v522, %v520
        %v524 = vld [vmem:[%s1] sm:$0x1]
        %v525 = vld [vmem:[%s2] sm:$0x1]
        %vm526 = vcmask 261120
        %v527 = vsel %vm526, %v518, 0.0
        %528 = vadd.xlane.f32.xlu0 %v527
        %v529 = vpop.xlane.xlu0 %528
        %v530 = vrcp.pop 32.0
        %v531 = vmul.f32 %v529, %v530
        %v532 = vsub.f32 %v518, %v531
        %v533 = vmul.f32 %v532, %v532
        %v534 = vsel %vm526, %v533, 0.0
        %535 = vadd.xlane.f32.xlu0 %v534
        %v536 = vpop.xlane.xlu0 %535
        %v537 = vmul.f32 %v536, %v530
        %v538 = vadd.f32 %v537, 1e-05
        %v539 = vrsqrt.pop %v538
        %v540 = vmul.f32 %v532, %v539
        %v541 = vlaneseq
        %v542 = vshrl.u32 %v541, 7
        %v543 = vsub.s32 0, %v542
        %v544 = vrot.slane %v524, %v543
        %v545 = vmul.f32 %v540, %v544
        %v546 = vlaneseq
        %v547 = vshrl.u32 %v546, 7
        %v548 = vsub.s32 0, %v547
        %v549 = vrot.slane %v525, %v548
        %v550 = vadd.f32 %v545, %v549
        %v551 = vpack.c.bf16 %v550, %v550
        %v552 = vld [vmem:[%s3] sm:$0xf]
        %v553 = vld [vmem:[%s3 + $0x4] sm:$0xf]
        %v554 = vld [vmem:[%s3 + $0x8] sm:$0xf]
        %v555 = vld [vmem:[%s3 + $0xc] sm:$0xf]
        %v560 = vunpack.c.l.b16 %v552
        %v561 = vunpack.c.l.b16 %v553
        %v562 = vunpack.c.l.b16 %v554
        %v563 = vunpack.c.l.b16 %v555
        %v564 = vpack.c.b16 %v561, %v560
        %v565 = vpack.c.b16 %v563, %v562
        %v569 = vsel %vm526, %v551, 0
        %571 = vmatprep.subr.bf16.mxu0 0
        %572 = vmatpush1.bf16.msra.mxu0 %v564
        %573 = vmatprep.subr.bf16.mxu0 0
        %574 = vmatpush1.bf16.msra.mxu0 %v565
        %575 = vmatprep.subr.bf16.mxu0 0
        %576 = vmatpush1.bf16.msra.mxu0 0
        %577 = vmatprep.subr.bf16.mxu0 0
        %578 = vmatpush1.bf16.msra.mxu0 0
        %579 = vmatprep.subr.bf16.mxu0 0
        %580 = vmatpush1.bf16.msra.mxu0 0
        %581 = vmatprep.subr.bf16.mxu0 0
        %582 = vmatpush1.bf16.msra.mxu0 0
        %583 = vmatprep.subr.bf16.mxu0 0
        %584 = vmatpush1.bf16.msra.mxu0 0
        %585 = vmatprep.subr.bf16.mxu0 0
        %586 = vmatpush1.bf16.msra.mxu0 0
        %587 = vmatprep.subr.bf16.mxu0 0
        %588 = vmatpush1.bf16.msra.mxu0 0
        %589 = vmatprep.subr.bf16.mxu0 0
        %590 = vmatpush1.bf16.msra.mxu0 0
        %591 = vmatprep.subr.bf16.mxu0 0
        %592 = vmatpush1.bf16.msra.mxu0 0
        %593 = vmatprep.subr.bf16.mxu0 0
        %594 = vmatpush1.bf16.msra.mxu0 0
        %595 = vmatprep.subr.bf16.mxu0 0
        %596 = vmatpush1.bf16.msra.mxu0 0
        %597 = vmatprep.subr.bf16.mxu0 0
        %598 = vmatpush1.bf16.msra.mxu0 0
        %599 = vmatprep.subr.bf16.mxu0 0
        %600 = vmatpush1.bf16.msra.mxu0 0
        %601 = vmatprep.subr.bf16.mxu0 0
        %602 = vmatpush1.bf16.msra.mxu0 0
        %603 = vmatprep.mubr.bf16.mxu0 0
        %604 = vmatmul.mubr.bf16.gmra.mrb[0].mxu0 %v569
        %v605 = vpop.f32.mrb[0].mxu0
        %v606 = vadd.f32 0.0, %v605
        %v607 = vpop.f32.mrb[0].mxu0
        %v608 = vpop.f32.mrb[0].mxu0
        %v609 = vpop.f32.mrb[0].mxu0
        %610 = vdwg.mxu0
        %v611 = vpack.c.bf16 %v606, %v606
        %vm612 = vcmp.ge.s32.totalorder %v522, 0
        %vm613 = vcmp.lt.s32.totalorder %v522, 8
        %vm614 = vmand %vm612, %vm613
        %v615 = vsel %vm614, 1, 0
        %vm616 = vcmp.eq.s32.totalorder %v615, 1
        %v617 = vsel %vm616, %v606, 0.0
        %v618 = vpack.c.bf16 %v617, %v617
        %620 = vrot.lane.b32.xlu0 %v606, 64
        %v621 = vpop.permute.xlu0 %620
        %v623 = vsel %vm616, %v621, 0.0
        %v624 = vpack.c.bf16 %v623, %v623
        %626 = vrot.lane.b32.xlu0 %v611, 96
        %v627 = vpop.permute.xlu0 %626
        %v629 = vsel %vm526, %v618, 0
        %v632 = vsel %vm526, %v627, 0
        %634 = vmatprep.subr.bf16.mxu0 0
        %635 = vmatpush1.bf16.xpose.msra.mxu0 %v632
        %636 = vmatprep.subr.bf16.mxu0 0
        %637 = vmatpush1.bf16.xpose.msra.mxu0 0
        %638 = vmatprep.subr.bf16.mxu0 0
        %639 = vmatpush1.bf16.xpose.msra.mxu0 0
        %640 = vmatprep.subr.bf16.mxu0 0
        %641 = vmatpush1.bf16.xpose.msra.mxu0 0
        %642 = vmatprep.subr.bf16.mxu0 0
        %643 = vmatpush1.bf16.xpose.msra.mxu0 0
        %644 = vmatprep.subr.bf16.mxu0 0
        %645 = vmatpush1.bf16.xpose.msra.mxu0 0
        %646 = vmatprep.subr.bf16.mxu0 0
        %647 = vmatpush1.bf16.xpose.msra.mxu0 0
        %648 = vmatprep.subr.bf16.mxu0 0
        %649 = vmatpush1.bf16.xpose.msra.mxu0 0
        %650 = vmatprep.subr.bf16.mxu0 0
        %651 = vmatpush1.bf16.xpose.msra.mxu0 0
        %652 = vmatprep.subr.bf16.mxu0 0
        %653 = vmatpush1.bf16.xpose.msra.mxu0 0
        %654 = vmatprep.subr.bf16.mxu0 0
        %655 = vmatpush1.bf16.xpose.msra.mxu0 0
        %656 = vmatprep.subr.bf16.mxu0 0
        %657 = vmatpush1.bf16.xpose.msra.mxu0 0
        %658 = vmatprep.subr.bf16.mxu0 0
        %659 = vmatpush1.bf16.xpose.msra.mxu0 0
        %660 = vmatprep.subr.bf16.mxu0 0
        %661 = vmatpush1.bf16.xpose.msra.mxu0 0
        %662 = vmatprep.subr.bf16.mxu0 0
        %663 = vmatpush1.bf16.xpose.msra.mxu0 0
        %664 = vmatprep.subr.bf16.mxu0 0
        %665 = vmatpush1.bf16.xpose.msra.mxu0 0
        %666 = vmatprep.mubr.bf16.mxu0 0
        %667 = vmatmul.mubr.bf16.gmra.mrb[0].mxu0 %v629
        %v668 = vpop.f32.mrb[0].mxu0
        %v669 = vadd.f32 0.0, %v668
        %v670 = vpop.f32.mrb[0].mxu0
        %v671 = vpop.f32.mrb[0].mxu0
        %v672 = vpop.f32.mrb[0].mxu0
        %673 = vdwg.mxu0
        %v674 = vmul.f32 %v669, 0.17677669
        %v675 = vsel %vm523, %v674, -inf
        %vm676 = vcmask 64512
        %v677 = vsel %vm676, %v675, -inf
        %678 = vmax.xlane.f32.xlu0 %v677
        %v679 = vpop.xlane.xlu0 %678
        %v680 = vsub.f32 %v675, %v679
        %v681 = vmul.f32 %v680, 1.442695
        %v682 = vpow.pop %v681
        %v683 = vsel %vm676, %v682, 0.0
        %684 = vadd.xlane.f32.xlu0 %v683
        %v685 = vpop.xlane.xlu0 %684
        %v686 = vrcp.pop %v685
        %v687 = vmul.f32 %v682, %v686
        %v688 = vpack.c.bf16 %v687, %v687
        %vm689 = vcmp.ge.s32.totalorder %v522, 8
        %vm690 = vcmp.lt.s32.totalorder %v522, 16
        %vm691 = vmand %vm689, %vm690
        %v692 = vsel %vm691, 1, 0
        %vm693 = vcmp.eq.s32.totalorder %v692, 1
        %v694 = vsel %vm693, %v606, 0.0
        %v695 = vpack.c.bf16 %v694, %v694
        %v696 = vsel %vm693, %v621, 0.0
        %v697 = vpack.c.bf16 %v696, %v696
        %v699 = vsel %vm526, %v695, 0
        %701 = vmatprep.subr.bf16.mxu0 0
        %702 = vmatpush1.bf16.xpose.msra.mxu0 %v632
        %703 = vmatprep.subr.bf16.mxu0 0
        %704 = vmatpush1.bf16.xpose.msra.mxu0 0
        %705 = vmatprep.subr.bf16.mxu0 0
        %706 = vmatpush1.bf16.xpose.msra.mxu0 0
        %707 = vmatprep.subr.bf16.mxu0 0
        %708 = vmatpush1.bf16.xpose.msra.mxu0 0
        %709 = vmatprep.subr.bf16.mxu0 0
        %710 = vmatpush1.bf16.xpose.msra.mxu0 0
        %711 = vmatprep.subr.bf16.mxu0 0
        %712 = vmatpush1.bf16.xpose.msra.mxu0 0
        %713 = vmatprep.subr.bf16.mxu0 0
        %714 = vmatpush1.bf16.xpose.msra.mxu0 0
        %715 = vmatprep.subr.bf16.mxu0 0
        %716 = vmatpush1.bf16.xpose.msra.mxu0 0
        %717 = vmatprep.subr.bf16.mxu0 0
        %718 = vmatpush1.bf16.xpose.msra.mxu0 0
        %719 = vmatprep.subr.bf16.mxu0 0
        %720 = vmatpush1.bf16.xpose.msra.mxu0 0
        %721 = vmatprep.subr.bf16.mxu0 0
        %722 = vmatpush1.bf16.xpose.msra.mxu0 0
        %723 = vmatprep.subr.bf16.mxu0 0
        %724 = vmatpush1.bf16.xpose.msra.mxu0 0
        %725 = vmatprep.subr.bf16.mxu0 0
        %726 = vmatpush1.bf16.xpose.msra.mxu0 0
        %727 = vmatprep.subr.bf16.mxu0 0
        %728 = vmatpush1.bf16.xpose.msra.mxu0 0
        %729 = vmatprep.subr.bf16.mxu0 0
        %730 = vmatpush1.bf16.xpose.msra.mxu0 0
        %731 = vmatprep.subr.bf16.mxu0 0
        %732 = vmatpush1.bf16.xpose.msra.mxu0 0
        %733 = vmatprep.mubr.bf16.mxu0 0
        %734 = vmatmul.mubr.bf16.gmra.mrb[0].mxu0 %v699
        %v735 = vpop.f32.mrb[0].mxu0
        %v736 = vadd.f32 0.0, %v735
        %v737 = vpop.f32.mrb[0].mxu0
        %v738 = vpop.f32.mrb[0].mxu0
        %v739 = vpop.f32.mrb[0].mxu0
        %740 = vdwg.mxu0
        %v741 = vmul.f32 %v736, 0.17677669
        %v742 = vsel %vm523, %v741, -inf
        %v743 = vsel %vm676, %v742, -inf
        %744 = vmax.xlane.f32.xlu0 %v743
        %v745 = vpop.xlane.xlu0 %744
        %v746 = vsub.f32 %v742, %v745
        %v747 = vmul.f32 %v746, 1.442695
        %v748 = vpow.pop %v747
        %v749 = vsel %vm676, %v748, 0.0
        %750 = vadd.xlane.f32.xlu0 %v749
        %v751 = vpop.xlane.xlu0 %750
        %v752 = vrcp.pop %v751
        %v753 = vmul.f32 %v748, %v752
        %v754 = vpack.c.bf16 %v753, %v753
        %v756 = vsel %vm676, %v754, 0
        %vm758 = vcmask 1043456
        %v760 = vsel %vm758, %v697, 0
        %762 = vmatprep.subr.bf16.mxu0 0
        %763 = vmatpush1.bf16.msra.mxu0 %v760
        %764 = vmatprep.subr.bf16.mxu0 0
        %765 = vmatpush1.bf16.msra.mxu0 0
        %766 = vmatprep.subr.bf16.mxu0 0
        %767 = vmatpush1.bf16.msra.mxu0 0
        %768 = vmatprep.subr.bf16.mxu0 0
        %769 = vmatpush1.bf16.msra.mxu0 0
        %770 = vmatprep.subr.bf16.mxu0 0
        %771 = vmatpush1.bf16.msra.mxu0 0
        %772 = vmatprep.subr.bf16.mxu0 0
        %773 = vmatpush1.bf16.msra.mxu0 0
        %774 = vmatprep.subr.bf16.mxu0 0
        %775 = vmatpush1.bf16.msra.mxu0 0
        %776 = vmatprep.subr.bf16.mxu0 0
        %777 = vmatpush1.bf16.msra.mxu0 0
        %778 = vmatprep.subr.bf16.mxu0 0
        %779 = vmatpush1.bf16.msra.mxu0 0
        %780 = vmatprep.subr.bf16.mxu0 0
        %781 = vmatpush1.bf16.msra.mxu0 0
        %782 = vmatprep.subr.bf16.mxu0 0
        %783 = vmatpush1.bf16.msra.mxu0 0
        %784 = vmatprep.subr.bf16.mxu0 0
        %785 = vmatpush1.bf16.msra.mxu0 0
        %786 = vmatprep.subr.bf16.mxu0 0
        %787 = vmatpush1.bf16.msra.mxu0 0
        %788 = vmatprep.subr.bf16.mxu0 0
        %789 = vmatpush1.bf16.msra.mxu0 0
        %790 = vmatprep.subr.bf16.mxu0 0
        %791 = vmatpush1.bf16.msra.mxu0 0
        %792 = vmatprep.subr.bf16.mxu0 0
        %793 = vmatpush1.bf16.msra.mxu0 0
        %794 = vmatprep.mubr.bf16.mxu0 0
        %795 = vmatmul.mubr.bf16.gmra.mrb[0].mxu0 %v756
        %v796 = vpop.f32.mrb[0].mxu0
        %v797 = vadd.f32 0.0, %v796
        %v798 = vpop.f32.mrb[0].mxu0
        %v799 = vpop.f32.mrb[0].mxu0
        %v800 = vpop.f32.mrb[0].mxu0
        %801 = vdwg.mxu0
        %v803 = vsel %vm676, %v688, 0
        %v806 = vsel %vm758, %v624, 0
        %808 = vmatprep.subr.bf16.mxu0 0
        %809 = vmatpush1.bf16.msra.mxu0 %v806
        %810 = vmatprep.subr.bf16.mxu0 0
        %811 = vmatpush1.bf16.msra.mxu0 0
        %812 = vmatprep.subr.bf16.mxu0 0
        %813 = vmatpush1.bf16.msra.mxu0 0
        %814 = vmatprep.subr.bf16.mxu0 0
        %815 = vmatpush1.bf16.msra.mxu0 0
        %816 = vmatprep.subr.bf16.mxu0 0
        %817 = vmatpush1.bf16.msra.mxu0 0
        %818 = vmatprep.subr.bf16.mxu0 0
        %819 = vmatpush1.bf16.msra.mxu0 0
        %820 = vmatprep.subr.bf16.mxu0 0
        %821 = vmatpush1.bf16.msra.mxu0 0
        %822 = vmatprep.subr.bf16.mxu0 0
        %823 = vmatpush1.bf16.msra.mxu0 0
        %824 = vmatprep.subr.bf16.mxu0 0
        %825 = vmatpush1.bf16.msra.mxu0 0
        %826 = vmatprep.subr.bf16.mxu0 0
        %827 = vmatpush1.bf16.msra.mxu0 0
        %828 = vmatprep.subr.bf16.mxu0 0
        %829 = vmatpush1.bf16.msra.mxu0 0
        %830 = vmatprep.subr.bf16.mxu0 0
        %831 = vmatpush1.bf16.msra.mxu0 0
        %832 = vmatprep.subr.bf16.mxu0 0
        %833 = vmatpush1.bf16.msra.mxu0 0
        %834 = vmatprep.subr.bf16.mxu0 0
        %835 = vmatpush1.bf16.msra.mxu0 0
        %836 = vmatprep.subr.bf16.mxu0 0
        %837 = vmatpush1.bf16.msra.mxu0 0
        %838 = vmatprep.subr.bf16.mxu0 0
        %839 = vmatpush1.bf16.msra.mxu0 0
        %840 = vmatprep.mubr.bf16.mxu0 0
        %841 = vmatmul.mubr.bf16.gmra.mrb[0].mxu0 %v803
        %v842 = vpop.f32.mrb[0].mxu0
        %v843 = vadd.f32 %v797, %v842
        %v844 = vpop.f32.mrb[0].mxu0
        %v845 = vpop.f32.mrb[0].mxu0
        %v846 = vpop.f32.mrb[0].mxu0
        %847 = vdwg.mxu0
        %vm848 = vcmp.ge.s32.totalorder %v522, 16
        %vm849 = vcmp.lt.s32.totalorder %v522, 24
        %vm850 = vmand %vm848, %vm849
        %v851 = vsel %vm850, 1, 0
        %vm852 = vcmp.eq.s32.totalorder %v851, 1
        %v853 = vsel %vm852, %v606, 0.0
        %v854 = vpack.c.bf16 %v853, %v853
        %v855 = vsel %vm852, %v621, 0.0
        %v856 = vpack.c.bf16 %v855, %v855
        %v858 = vsel %vm526, %v854, 0
        %860 = vmatprep.subr.bf16.mxu0 0
        %861 = vmatpush1.bf16.xpose.msra.mxu0 %v632
        %862 = vmatprep.subr.bf16.mxu0 0
        %863 = vmatpush1.bf16.xpose.msra.mxu0 0
        %864 = vmatprep.subr.bf16.mxu0 0
        %865 = vmatpush1.bf16.xpose.msra.mxu0 0
        %866 = vmatprep.subr.bf16.mxu0 0
        %867 = vmatpush1.bf16.xpose.msra.mxu0 0
        %868 = vmatprep.subr.bf16.mxu0 0
        %869 = vmatpush1.bf16.xpose.msra.mxu0 0
        %870 = vmatprep.subr.bf16.mxu0 0
        %871 = vmatpush1.bf16.xpose.msra.mxu0 0
        %872 = vmatprep.subr.bf16.mxu0 0
        %873 = vmatpush1.bf16.xpose.msra.mxu0 0
        %874 = vmatprep.subr.bf16.mxu0 0
        %875 = vmatpush1.bf16.xpose.msra.mxu0 0
        %876 = vmatprep.subr.bf16.mxu0 0
        %877 = vmatpush1.bf16.xpose.msra.mxu0 0
        %878 = vmatprep.subr.bf16.mxu0 0
        %879 = vmatpush1.bf16.xpose.msra.mxu0 0
        %880 = vmatprep.subr.bf16.mxu0 0
        %881 = vmatpush1.bf16.xpose.msra.mxu0 0
        %882 = vmatprep.subr.bf16.mxu0 0
        %883 = vmatpush1.bf16.xpose.msra.mxu0 0
        %884 = vmatprep.subr.bf16.mxu0 0
        %885 = vmatpush1.bf16.xpose.msra.mxu0 0
        %886 = vmatprep.subr.bf16.mxu0 0
        %887 = vmatpush1.bf16.xpose.msra.mxu0 0
        %888 = vmatprep.subr.bf16.mxu0 0
        %889 = vmatpush1.bf16.xpose.msra.mxu0 0
        %890 = vmatprep.subr.bf16.mxu0 0
        %891 = vmatpush1.bf16.xpose.msra.mxu0 0
        %892 = vmatprep.mubr.bf16.mxu0 0
        %893 = vmatmul.mubr.bf16.gmra.mrb[0].mxu0 %v858
        %v894 = vpop.f32.mrb[0].mxu0
        %v895 = vadd.f32 0.0, %v894
        %v896 = vpop.f32.mrb[0].mxu0
        %v897 = vpop.f32.mrb[0].mxu0
        %v898 = vpop.f32.mrb[0].mxu0
        %899 = vdwg.mxu0
        %v900 = vmul.f32 %v895, 0.17677669
        %v901 = vsel %vm523, %v900, -inf
        %v902 = vsel %vm676, %v901, -inf
        %903 = vmax.xlane.f32.xlu0 %v902
        %v904 = vpop.xlane.xlu0 %903
        %v905 = vsub.f32 %v901, %v904
        %v906 = vmul.f32 %v905, 1.442695
        %v907 = vpow.pop %v906
        %v908 = vsel %vm676, %v907, 0.0
        %909 = vadd.xlane.f32.xlu0 %v908
        %v910 = vpop.xlane.xlu0 %909
        %v911 = vrcp.pop %v910
        %v912 = vmul.f32 %v907, %v911
        %v913 = vpack.c.bf16 %v912, %v912
        %v915 = vsel %vm676, %v913, 0
        %v918 = vsel %vm758, %v856, 0
        %920 = vmatprep.subr.bf16.mxu0 0
        %921 = vmatpush1.bf16.msra.mxu0 %v918
        %922 = vmatprep.subr.bf16.mxu0 0
        %923 = vmatpush1.bf16.msra.mxu0 0
        %924 = vmatprep.subr.bf16.mxu0 0
        %925 = vmatpush1.bf16.msra.mxu0 0
        %926 = vmatprep.subr.bf16.mxu0 0
        %927 = vmatpush1.bf16.msra.mxu0 0
        %928 = vmatprep.subr.bf16.mxu0 0
        %929 = vmatpush1.bf16.msra.mxu0 0
        %930 = vmatprep.subr.bf16.mxu0 0
        %931 = vmatpush1.bf16.msra.mxu0 0
        %932 = vmatprep.subr.bf16.mxu0 0
        %933 = vmatpush1.bf16.msra.mxu0 0
        %934 = vmatprep.subr.bf16.mxu0 0
        %935 = vmatpush1.bf16.msra.mxu0 0
        %936 = vmatprep.subr.bf16.mxu0 0
        %937 = vmatpush1.bf16.msra.mxu0 0
        %938 = vmatprep.subr.bf16.mxu0 0
        %939 = vmatpush1.bf16.msra.mxu0 0
        %940 = vmatprep.subr.bf16.mxu0 0
        %941 = vmatpush1.bf16.msra.mxu0 0
        %942 = vmatprep.subr.bf16.mxu0 0
        %943 = vmatpush1.bf16.msra.mxu0 0
        %944 = vmatprep.subr.bf16.mxu0 0
        %945 = vmatpush1.bf16.msra.mxu0 0
        %946 = vmatprep.subr.bf16.mxu0 0
        %947 = vmatpush1.bf16.msra.mxu0 0
        %948 = vmatprep.subr.bf16.mxu0 0
        %949 = vmatpush1.bf16.msra.mxu0 0
        %950 = vmatprep.subr.bf16.mxu0 0
        %951 = vmatpush1.bf16.msra.mxu0 0
        %952 = vmatprep.mubr.bf16.mxu0 0
        %953 = vmatmul.mubr.bf16.gmra.mrb[0].mxu0 %v915
        %v954 = vpop.f32.mrb[0].mxu0
        %v955 = vadd.f32 0.0, %v954
        %v956 = vpop.f32.mrb[0].mxu0
        %v957 = vpop.f32.mrb[0].mxu0
        %v958 = vpop.f32.mrb[0].mxu0
        %959 = vdwg.mxu0
        %v960 = vadd.f32 %v843, %v955
        %vm961 = vcmp.ge.s32.totalorder %v522, 24
        %vm962 = vcmp.lt.s32.totalorder %v522, 32
        %vm963 = vmand %vm961, %vm962
        %v964 = vsel %vm963, 1, 0
        %vm965 = vcmp.eq.s32.totalorder %v964, 1
        %v966 = vsel %vm965, %v606, 0.0
        %v967 = vpack.c.bf16 %v966, %v966
        %v968 = vsel %vm965, %v621, 0.0
        %v969 = vpack.c.bf16 %v968, %v968
        %v971 = vsel %vm526, %v967, 0
        %973 = vmatprep.subr.bf16.mxu0 0
        %974 = vmatpush1.bf16.xpose.msra.mxu0 %v632
        %975 = vmatprep.subr.bf16.mxu0 0
        %976 = vmatpush1.bf16.xpose.msra.mxu0 0
        %977 = vmatprep.subr.bf16.mxu0 0
        %978 = vmatpush1.bf16.xpose.msra.mxu0 0
        %979 = vmatprep.subr.bf16.mxu0 0
        %980 = vmatpush1.bf16.xpose.msra.mxu0 0
        %981 = vmatprep.subr.bf16.mxu0 0
        %982 = vmatpush1.bf16.xpose.msra.mxu0 0
        %983 = vmatprep.subr.bf16.mxu0 0
        %984 = vmatpush1.bf16.xpose.msra.mxu0 0
        %985 = vmatprep.subr.bf16.mxu0 0
        %986 = vmatpush1.bf16.xpose.msra.mxu0 0
        %987 = vmatprep.subr.bf16.mxu0 0
        %988 = vmatpush1.bf16.xpose.msra.mxu0 0
        %989 = vmatprep.subr.bf16.mxu0 0
        %990 = vmatpush1.bf16.xpose.msra.mxu0 0
        %991 = vmatprep.subr.bf16.mxu0 0
        %992 = vmatpush1.bf16.xpose.msra.mxu0 0
        %993 = vmatprep.subr.bf16.mxu0 0
        %994 = vmatpush1.bf16.xpose.msra.mxu0 0
        %995 = vmatprep.subr.bf16.mxu0 0
        %996 = vmatpush1.bf16.xpose.msra.mxu0 0
        %997 = vmatprep.subr.bf16.mxu0 0
        %998 = vmatpush1.bf16.xpose.msra.mxu0 0
        %999 = vmatprep.subr.bf16.mxu0 0
        %1000 = vmatpush1.bf16.xpose.msra.mxu0 0
        %1001 = vmatprep.subr.bf16.mxu0 0
        %1002 = vmatpush1.bf16.xpose.msra.mxu0 0
        %1003 = vmatprep.subr.bf16.mxu0 0
        %1004 = vmatpush1.bf16.xpose.msra.mxu0 0
        %1005 = vmatprep.mubr.bf16.mxu0 0
        %1006 = vmatmul.mubr.bf16.gmra.mrb[0].mxu0 %v971
        %v1007 = vpop.f32.mrb[0].mxu0
        %v1008 = vadd.f32 0.0, %v1007
        %v1009 = vpop.f32.mrb[0].mxu0
        %v1010 = vpop.f32.mrb[0].mxu0
        %v1011 = vpop.f32.mrb[0].mxu0
        %1012 = vdwg.mxu0
        %v1013 = vmul.f32 %v1008, 0.17677669
        %v1014 = vsel %vm523, %v1013, -inf
        %v1015 = vsel %vm676, %v1014, -inf
        %1016 = vmax.xlane.f32.xlu0 %v1015
        %v1017 = vpop.xlane.xlu0 %1016
        %v1018 = vsub.f32 %v1014, %v1017
        %v1019 = vmul.f32 %v1018, 1.442695
        %v1020 = vpow.pop %v1019
        %v1021 = vsel %vm676, %v1020, 0.0
        %1022 = vadd.xlane.f32.xlu0 %v1021
        %v1023 = vpop.xlane.xlu0 %1022
        %v1024 = vrcp.pop %v1023
        %v1025 = vmul.f32 %v1020, %v1024
        %v1026 = vpack.c.bf16 %v1025, %v1025
        %v1028 = vsel %vm676, %v1026, 0
        %v1031 = vsel %vm758, %v969, 0
        %1033 = vmatprep.subr.bf16.mxu0 0
        %1034 = vmatpush1.bf16.msra.mxu0 %v1031
        %1035 = vmatprep.subr.bf16.mxu0 0
        %1036 = vmatpush1.bf16.msra.mxu0 0
        %1037 = vmatprep.subr.bf16.mxu0 0
        %1038 = vmatpush1.bf16.msra.mxu0 0
        %1039 = vmatprep.subr.bf16.mxu0 0
        %1040 = vmatpush1.bf16.msra.mxu0 0
        %1041 = vmatprep.subr.bf16.mxu0 0
        %1042 = vmatpush1.bf16.msra.mxu0 0
        %1043 = vmatprep.subr.bf16.mxu0 0
        %1044 = vmatpush1.bf16.msra.mxu0 0
        %1045 = vmatprep.subr.bf16.mxu0 0
        %1046 = vmatpush1.bf16.msra.mxu0 0
        %1047 = vmatprep.subr.bf16.mxu0 0
        %1048 = vmatpush1.bf16.msra.mxu0 0
        %1049 = vmatprep.subr.bf16.mxu0 0
        %1050 = vmatpush1.bf16.msra.mxu0 0
        %1051 = vmatprep.subr.bf16.mxu0 0
        %1052 = vmatpush1.bf16.msra.mxu0 0
        %1053 = vmatprep.subr.bf16.mxu0 0
        %1054 = vmatpush1.bf16.msra.mxu0 0
        %1055 = vmatprep.subr.bf16.mxu0 0
        %1056 = vmatpush1.bf16.msra.mxu0 0
        %1057 = vmatprep.subr.bf16.mxu0 0
        %1058 = vmatpush1.bf16.msra.mxu0 0
        %1059 = vmatprep.subr.bf16.mxu0 0
        %1060 = vmatpush1.bf16.msra.mxu0 0
        %1061 = vmatprep.subr.bf16.mxu0 0
        %1062 = vmatpush1.bf16.msra.mxu0 0
        %1063 = vmatprep.subr.bf16.mxu0 0
        %1064 = vmatpush1.bf16.msra.mxu0 0
        %1065 = vmatprep.mubr.bf16.mxu0 0
        %1066 = vmatmul.mubr.bf16.gmra.mrb[0].mxu0 %v1028
        %v1067 = vpop.f32.mrb[0].mxu0
        %v1068 = vadd.f32 0.0, %v1067
        %v1069 = vpop.f32.mrb[0].mxu0
        %v1070 = vpop.f32.mrb[0].mxu0
        %v1071 = vpop.f32.mrb[0].mxu0
        %1072 = vdwg.mxu0
        %v1073 = vadd.f32 %v960, %v1068
        %v1074 = vpack.c.bf16 %v1073, %v1073
        %v1075 = vld [vmem:[%s4] sm:$0xf]
        %v1076 = vld [vmem:[%s4 + $0x4] sm:$0xf]
        %v1077 = vld [vmem:[%s4 + $0x8] sm:$0xf]
        %v1078 = vld [vmem:[%s4 + $0xc] sm:$0xf]
        %v1079 = vld [vmem:[%s5] sm:$0x1]
        %v1080 = vlaneseq
        %v1081 = vshrl.u32 %v1080, 7
        %v1082 = vsub.s32 0, %v1081
        %v1083 = vrot.slane %v1079, %v1082
        %v1088 = vunpack.c.l.b16 %v1075
        %v1089 = vunpack.c.l.b16 %v1076
        %v1090 = vunpack.c.l.b16 %v1077
        %v1091 = vunpack.c.l.b16 %v1078
        %v1092 = vpack.c.b16 %v1089, %v1088
        %v1093 = vpack.c.b16 %v1091, %v1090
        %v1097 = vsel %vm526, %v1074, 0
        %1099 = vmatprep.subr.bf16.mxu0 0
        %1100 = vmatpush1.bf16.msra.mxu0 %v1092
        %1101 = vmatprep.subr.bf16.mxu0 0
        %1102 = vmatpush1.bf16.msra.mxu0 %v1093
        %1103 = vmatprep.subr.bf16.mxu0 0
        %1104 = vmatpush1.bf16.msra.mxu0 0
        %1105 = vmatprep.subr.bf16.mxu0 0
        %1106 = vmatpush1.bf16.msra.mxu0 0
        %1107 = vmatprep.subr.bf16.mxu0 0
        %1108 = vmatpush1.bf16.msra.mxu0 0
        %1109 = vmatprep.subr.bf16.mxu0 0
        %1110 = vmatpush1.bf16.msra.mxu0 0
        %1111 = vmatprep.subr.bf16.mxu0 0
        %1112 = vmatpush1.bf16.msra.mxu0 0
        %1113 = vmatprep.subr.bf16.mxu0 0
        %1114 = vmatpush1.bf16.msra.mxu0 0
        %1115 = vmatprep.subr.bf16.mxu0 0
        %1116 = vmatpush1.bf16.msra.mxu0 0
        %1117 = vmatprep.subr.bf16.mxu0 0
        %1118 = vmatpush1.bf16.msra.mxu0 0
        %1119 = vmatprep.subr.bf16.mxu0 0
        %1120 = vmatpush1.bf16.msra.mxu0 0
        %1121 = vmatprep.subr.bf16.mxu0 0
        %1122 = vmatpush1.bf16.msra.mxu0 0
        %1123 = vmatprep.subr.bf16.mxu0 0
        %1124 = vmatpush1.bf16.msra.mxu0 0
        %1125 = vmatprep.subr.bf16.mxu0 0
        %1126 = vmatpush1.bf16.msra.mxu0 0
        %1127 = vmatprep.subr.bf16.mxu0 0
        %1128 = vmatpush1.bf16.msra.mxu0 0
        %1129 = vmatprep.subr.bf16.mxu0 0
        %1130 = vmatpush1.bf16.msra.mxu0 0
        %1131 = vmatprep.mubr.bf16.mxu0 0
        %1132 = vmatmul.mubr.bf16.gmra.mrb[0].mxu0 %v1097
        %v1133 = vpop.f32.mrb[0].mxu0
        %v1134 = vadd.f32 %v1083, %v1133
        %v1135 = vpop.f32.mrb[0].mxu0
        %v1136 = vpop.f32.mrb[0].mxu0
        %v1137 = vpop.f32.mrb[0].mxu0
        %1138 = vdwg.mxu0
        %v1139 = vadd.f32 %v518, %v1134
        %v1140 = vld [vmem:[%s6] sm:$0x1]
        %v1141 = vld [vmem:[%s7] sm:$0x1]
        %v1142 = vsel %vm526, %v1139, 0.0
        %1143 = vadd.xlane.f32.xlu0 %v1142
        %v1144 = vpop.xlane.xlu0 %1143
        %v1145 = vmul.f32 %v1144, %v530
        %v1146 = vsub.f32 %v1139, %v1145
        %v1147 = vmul.f32 %v1146, %v1146
        %v1148 = vsel %vm526, %v1147, 0.0
        %1149 = vadd.xlane.f32.xlu0 %v1148
        %v1150 = vpop.xlane.xlu0 %1149
        %v1151 = vmul.f32 %v1150, %v530
        %v1152 = vadd.f32 %v1151, 1e-05
        %v1153 = vrsqrt.pop %v1152
        %v1154 = vmul.f32 %v1146, %v1153
        %v1155 = vlaneseq
        %v1156 = vshrl.u32 %v1155, 7
        %v1157 = vsub.s32 0, %v1156
        %v1158 = vrot.slane %v1140, %v1157
        %v1159 = vmul.f32 %v1154, %v1158
        %v1160 = vlaneseq
        %v1161 = vshrl.u32 %v1160, 7
        %v1162 = vsub.s32 0, %v1161
        %v1163 = vrot.slane %v1141, %v1162
        %v1164 = vadd.f32 %v1159, %v1163
        %v1165 = vpack.c.bf16 %v1164, %v1164
        %v1166 = vld [vmem:[%s8] sm:$0xf]
        %v1167 = vld [vmem:[%s8 + $0x4] sm:$0xf]
        %v1168 = vld [vmem:[%s8 + $0x8] sm:$0xf]
        %v1169 = vld [vmem:[%s8 + $0xc] sm:$0xf]
        %v1170 = vld [vmem:[%s9] sm:$0x1]
        %v1171 = vlaneseq
        %v1172 = vshrl.u32 %v1171, 7
        %v1173 = vsub.s32 0, %v1172
        %v1174 = vrot.slane %v1170, %v1173
        %v1179 = vunpack.c.l.b16 %v1166
        %v1180 = vunpack.c.l.b16 %v1167
        %v1181 = vunpack.c.l.b16 %v1168
        %v1182 = vunpack.c.l.b16 %v1169
        %v1183 = vpack.c.b16 %v1180, %v1179
        %v1184 = vpack.c.b16 %v1182, %v1181
        %v1188 = vsel %vm526, %v1165, 0
        %1190 = vmatprep.subr.bf16.mxu0 0
        %1191 = vmatpush1.bf16.msra.mxu0 %v1183
        %1192 = vmatprep.subr.bf16.mxu0 0
        %1193 = vmatpush1.bf16.msra.mxu0 %v1184
        %1194 = vmatprep.subr.bf16.mxu0 0
        %1195 = vmatpush1.bf16.msra.mxu0 0
        %1196 = vmatprep.subr.bf16.mxu0 0
        %1197 = vmatpush1.bf16.msra.mxu0 0
        %1198 = vmatprep.subr.bf16.mxu0 0
        %1199 = vmatpush1.bf16.msra.mxu0 0
        %1200 = vmatprep.subr.bf16.mxu0 0
        %1201 = vmatpush1.bf16.msra.mxu0 0
        %1202 = vmatprep.subr.bf16.mxu0 0
        %1203 = vmatpush1.bf16.msra.mxu0 0
        %1204 = vmatprep.subr.bf16.mxu0 0
        %1205 = vmatpush1.bf16.msra.mxu0 0
        %1206 = vmatprep.subr.bf16.mxu0 0
        %1207 = vmatpush1.bf16.msra.mxu0 0
        %1208 = vmatprep.subr.bf16.mxu0 0
        %1209 = vmatpush1.bf16.msra.mxu0 0
        %1210 = vmatprep.subr.bf16.mxu0 0
        %1211 = vmatpush1.bf16.msra.mxu0 0
        %1212 = vmatprep.subr.bf16.mxu0 0
        %1213 = vmatpush1.bf16.msra.mxu0 0
        %1214 = vmatprep.subr.bf16.mxu0 0
        %1215 = vmatpush1.bf16.msra.mxu0 0
        %1216 = vmatprep.subr.bf16.mxu0 0
        %1217 = vmatpush1.bf16.msra.mxu0 0
        %1218 = vmatprep.subr.bf16.mxu0 0
        %1219 = vmatpush1.bf16.msra.mxu0 0
        %1220 = vmatprep.subr.bf16.mxu0 0
        %1221 = vmatpush1.bf16.msra.mxu0 0
        %1222 = vmatprep.mubr.bf16.mxu0 0
        %1223 = vmatmul.mubr.bf16.gmra.mrb[0].mxu0 %v1188
        %v1224 = vpop.f32.mrb[0].mxu0
        %v1225 = vadd.f32 %v1174, %v1224
        %v1226 = vpop.f32.mrb[0].mxu0
        %v1227 = vpop.f32.mrb[0].mxu0
        %v1228 = vpop.f32.mrb[0].mxu0
        %1229 = vdwg.mxu0
        %v1230 = vmax.f32 %v1225, 0.0
        %v1231 = vpack.c.bf16 %v1230, %v1230
        %v1232 = vld [vmem:[%s10] sm:$0xf]
        %v1233 = vld [vmem:[%s10 + $0x4] sm:$0xf]
        %v1234 = vld [vmem:[%s10 + $0x8] sm:$0xf]
        %v1235 = vld [vmem:[%s10 + $0xc] sm:$0xf]
        %v1236 = vld [vmem:[%s10 + $0x10] sm:$0xf]
        %v1237 = vld [vmem:[%s10 + $0x14] sm:$0xf]
        %v1238 = vld [vmem:[%s10 + $0x18] sm:$0xf]
        %v1239 = vld [vmem:[%s10 + $0x1c] sm:$0xf]
        %v1240 = vld [vmem:[%s10 + $0x20] sm:$0xf]
        %v1241 = vld [vmem:[%s10 + $0x24] sm:$0xf]
        %v1242 = vld [vmem:[%s10 + $0x28] sm:$0xf]
        %v1243 = vld [vmem:[%s10 + $0x2c] sm:$0xf]
        %v1244 = vld [vmem:[%s10 + $0x30] sm:$0xf]
        %v1245 = vld [vmem:[%s10 + $0x34] sm:$0xf]
        %v1246 = vld [vmem:[%s10 + $0x38] sm:$0xf]
        %v1247 = vld [vmem:[%s10 + $0x3c] sm:$0xf]
        %v1248 = vld [vmem:[%s11] sm:$0x1]
        %v1249 = vlaneseq
        %v1250 = vshrl.u32 %v1249, 7
        %v1251 = vsub.s32 0, %v1250
        %v1252 = vrot.slane %v1248, %v1251
        %v1269 = vunpack.c.l.b16 %v1232
        %v1270 = vunpack.c.l.b16 %v1233
        %v1271 = vunpack.c.l.b16 %v1234
        %v1272 = vunpack.c.l.b16 %v1235
        %v1273 = vunpack.c.l.b16 %v1236
        %v1274 = vunpack.c.l.b16 %v1237
        %v1275 = vunpack.c.l.b16 %v1238
        %v1276 = vunpack.c.l.b16 %v1239
        %v1277 = vunpack.c.l.b16 %v1240
        %v1278 = vunpack.c.l.b16 %v1241
        %v1279 = vunpack.c.l.b16 %v1242
        %v1280 = vunpack.c.l.b16 %v1243
        %v1281 = vunpack.c.l.b16 %v1244
        %v1282 = vunpack.c.l.b16 %v1245
        %v1283 = vunpack.c.l.b16 %v1246
        %v1284 = vunpack.c.l.b16 %v1247
        %v1285 = vpack.c.b16 %v1270, %v1269
        %v1286 = vpack.c.b16 %v1272, %v1271
        %v1287 = vpack.c.b16 %v1274, %v1273
        %v1288 = vpack.c.b16 %v1276, %v1275
        %v1289 = vpack.c.b16 %v1278, %v1277
        %v1290 = vpack.c.b16 %v1280, %v1279
        %v1291 = vpack.c.b16 %v1282, %v1281
        %v1292 = vpack.c.b16 %v1284, %v1283
        %1301 = vmatprep.subr.bf16.mxu0 0
        %1302 = vmatpush1.bf16.msra.mxu0 %v1285
        %1303 = vmatprep.subr.bf16.mxu0 0
        %1304 = vmatpush1.bf16.msra.mxu0 %v1286
        %1305 = vmatprep.subr.bf16.mxu0 0
        %1306 = vmatpush1.bf16.msra.mxu0 %v1287
        %1307 = vmatprep.subr.bf16.mxu0 0
        %1308 = vmatpush1.bf16.msra.mxu0 %v1288
        %1309 = vmatprep.subr.bf16.mxu0 0
        %1310 = vmatpush1.bf16.msra.mxu0 %v1289
        %1311 = vmatprep.subr.bf16.mxu0 0
        %1312 = vmatpush1.bf16.msra.mxu0 %v1290
        %1313 = vmatprep.subr.bf16.mxu0 0
        %1314 = vmatpush1.bf16.msra.mxu0 %v1291
        %1315 = vmatprep.subr.bf16.mxu0 0
        %1316 = vmatpush1.bf16.msra.mxu0 %v1292
        %1317 = vmatprep.subr.bf16.mxu0 0
        %1318 = vmatpush1.bf16.msra.mxu0 0
        %1319 = vmatprep.subr.bf16.mxu0 0
        %1320 = vmatpush1.bf16.msra.mxu0 0
        %1321 = vmatprep.subr.bf16.mxu0 0
        %1322 = vmatpush1.bf16.msra.mxu0 0
        %1323 = vmatprep.subr.bf16.mxu0 0
        %1324 = vmatpush1.bf16.msra.mxu0 0
        %1325 = vmatprep.subr.bf16.mxu0 0
        %1326 = vmatpush1.bf16.msra.mxu0 0
        %1327 = vmatprep.subr.bf16.mxu0 0
        %1328 = vmatpush1.bf16.msra.mxu0 0
        %1329 = vmatprep.subr.bf16.mxu0 0
        %1330 = vmatpush1.bf16.msra.mxu0 0
        %1331 = vmatprep.subr.bf16.mxu0 0
        %1332 = vmatpush1.bf16.msra.mxu0 0
        %1333 = vmatprep.mubr.bf16.mxu0 0
        %1334 = vmatmul.mubr.bf16.gmra.mrb[0].mxu0 %v1231
        %v1335 = vpop.f32.mrb[0].mxu0
        %v1336 = vadd.f32 %v1252, %v1335
        %v1337 = vpop.f32.mrb[0].mxu0
        %v1338 = vpop.f32.mrb[0].mxu0
        %v1339 = vpop.f32.mrb[0].mxu0
        %1340 = vdwg.mxu0
        %v1341 = vadd.f32 %v1139, %v1336
        %v1342 = vld [vmem:[%s1 + $0x1] sm:$0x1]
        %v1343 = vld [vmem:[%s2 + $0x1] sm:$0x1]
        %v1344 = vsel %vm526, %v1341, 0.0
        %1345 = vadd.xlane.f32.xlu0 %v1344
        %v1346 = vpop.xlane.xlu0 %1345
        %v1347 = vmul.f32 %v1346, %v530
        %v1348 = vsub.f32 %v1341, %v1347
        %v1349 = vmul.f32 %v1348, %v1348
        %v1350 = vsel %vm526, %v1349, 0.0
        %1351 = vadd.xlane.f32.xlu0 %v1350
        %v1352 = vpop.xlane.xlu0 %1351
        %v1353 = vmul.f32 %v1352, %v530
        %v1354 = vadd.f32 %v1353, 1e-05
        %v1355 = vrsqrt.pop %v1354
        %v1356 = vmul.f32 %v1348, %v1355
        %v1357 = vlaneseq
        %v1358 = vshrl.u32 %v1357, 7
        %v1359 = vsub.s32 0, %v1358
        %v1360 = vrot.slane %v1342, %v1359
        %v1361 = vmul.f32 %v1356, %v1360
        %v1362 = vlaneseq
        %v1363 = vshrl.u32 %v1362, 7
        %v1364 = vsub.s32 0, %v1363
        %v1365 = vrot.slane %v1343, %v1364
        %v1366 = vadd.f32 %v1361, %v1365
        %v1367 = vpack.c.bf16 %v1366, %v1366
        %s1368 = scalar_lea.vmem %s3, 16
        %v1369 = vld [vmem:[%s1368] sm:$0xf]
        %v1370 = vld [vmem:[%s1368 + $0x4] sm:$0xf]
        %v1371 = vld [vmem:[%s1368 + $0x8] sm:$0xf]
        %v1372 = vld [vmem:[%s1368 + $0xc] sm:$0xf]
        %v1377 = vunpack.c.l.b16 %v1369
        %v1378 = vunpack.c.l.b16 %v1370
        %v1379 = vunpack.c.l.b16 %v1371
        %v1380 = vunpack.c.l.b16 %v1372
        %v1381 = vpack.c.b16 %v1378, %v1377
        %v1382 = vpack.c.b16 %v1380, %v1379
        %v1386 = vsel %vm526, %v1367, 0
        %1388 = vmatprep.subr.bf16.mxu0 0
        %1389 = vmatpush1.bf16.msra.mxu0 %v1381
        %1390 = vmatprep.subr.bf16.mxu0 0
        %1391 = vmatpush1.bf16.msra.mxu0 %v1382
        %1392 = vmatprep.subr.bf16.mxu0 0
        %1393 = vmatpush1.bf16.msra.mxu0 0
        %1394 = vmatprep.subr.bf16.mxu0 0
        %1395 = vmatpush1.bf16.msra.mxu0 0
        %1396 = vmatprep.subr.bf16.mxu0 0
        %1397 = vmatpush1.bf16.msra.mxu0 0
        %1398 = vmatprep.subr.bf16.mxu0 0
        %1399 = vmatpush1.bf16.msra.mxu0 0
        %1400 = vmatprep.subr.bf16.mxu0 0
        %1401 = vmatpush1.bf16.msra.mxu0 0
        %1402 = vmatprep.subr.bf16.mxu0 0
        %1403 = vmatpush1.bf16.msra.mxu0 0
        %1404 = vmatprep.subr.bf16.mxu0 0
        %1405 = vmatpush1.bf16.msra.mxu0 0
        %1406 = vmatprep.subr.bf16.mxu0 0
        %1407 = vmatpush1.bf16.msra.mxu0 0
        %1408 = vmatprep.subr.bf16.mxu0 0
        %1409 = vmatpush1.bf16.msra.mxu0 0
        %1410 = vmatprep.subr.bf16.mxu0 0
        %1411 = vmatpush1.bf16.msra.mxu0 0
        %1412 = vmatprep.subr.bf16.mxu0 0
        %1413 = vmatpush1.bf16.msra.mxu0 0
        %1414 = vmatprep.subr.bf16.mxu0 0
        %1415 = vmatpush1.bf16.msra.mxu0 0
        %1416 = vmatprep.subr.bf16.mxu0 0
        %1417 = vmatpush1.bf16.msra.mxu0 0
        %1418 = vmatprep.subr.bf16.mxu0 0
        %1419 = vmatpush1.bf16.msra.mxu0 0
        %1420 = vmatprep.mubr.bf16.mxu0 0
        %1421 = vmatmul.mubr.bf16.gmra.mrb[0].mxu0 %v1386
        %v1422 = vpop.f32.mrb[0].mxu0
        %v1423 = vadd.f32 0.0, %v1422
        %v1424 = vpop.f32.mrb[0].mxu0
        %v1425 = vpop.f32.mrb[0].mxu0
        %v1426 = vpop.f32.mrb[0].mxu0
        %1427 = vdwg.mxu0
        %v1428 = vpack.c.bf16 %v1423, %v1423
        %v1429 = vsel %vm616, %v1423, 0.0
        %v1430 = vpack.c.bf16 %v1429, %v1429
        %1432 = vrot.lane.b32.xlu0 %v1423, 64
        %v1433 = vpop.permute.xlu0 %1432
        %v1435 = vsel %vm616, %v1433, 0.0
        %v1436 = vpack.c.bf16 %v1435, %v1435
        %1438 = vrot.lane.b32.xlu0 %v1428, 96
        %v1439 = vpop.permute.xlu0 %1438
        %v1441 = vsel %vm526, %v1430, 0
        %v1444 = vsel %vm526, %v1439, 0
        %1446 = vmatprep.subr.bf16.mxu0 0
        %1447 = vmatpush1.bf16.xpose.msra.mxu0 %v1444
        %1448 = vmatprep.subr.bf16.mxu0 0
        %1449 = vmatpush1.bf16.xpose.msra.mxu0 0
        %1450 = vmatprep.subr.bf16.mxu0 0
        %1451 = vmatpush1.bf16.xpose.msra.mxu0 0
        %1452 = vmatprep.subr.bf16.mxu0 0
        %1453 = vmatpush1.bf16.xpose.msra.mxu0 0
        %1454 = vmatprep.subr.bf16.mxu0 0
        %1455 = vmatpush1.bf16.xpose.msra.mxu0 0
        %1456 = vmatprep.subr.bf16.mxu0 0
        %1457 = vmatpush1.bf16.xpose.msra.mxu0 0
        %1458 = vmatprep.subr.bf16.mxu0 0
        %1459 = vmatpush1.bf16.xpose.msra.mxu0 0
        %1460 = vmatprep.subr.bf16.mxu0 0
        %1461 = vmatpush1.bf16.xpose.msra.mxu0 0
        %1462 = vmatprep.subr.bf16.mxu0 0
        %1463 = vmatpush1.bf16.xpose.msra.mxu0 0
        %1464 = vmatprep.subr.bf16.mxu0 0
        %1465 = vmatpush1.bf16.xpose.msra.mxu0 0
        %1466 = vmatprep.subr.bf16.mxu0 0
        %1467 = vmatpush1.bf16.xpose.msra.mxu0 0
        %1468 = vmatprep.subr.bf16.mxu0 0
        %1469 = vmatpush1.bf16.xpose.msra.mxu0 0
        %1470 = vmatprep.subr.bf16.mxu0 0
        %1471 = vmatpush1.bf16.xpose.msra.mxu0 0
        %1472 = vmatprep.subr.bf16.mxu0 0
        %1473 = vmatpush1.bf16.xpose.msra.mxu0 0
        %1474 = vmatprep.subr.bf16.mxu0 0
        %1475 = vmatpush1.bf16.xpose.msra.mxu0 0
        %1476 = vmatprep.subr.bf16.mxu0 0
        %1477 = vmatpush1.bf16.xpose.msra.mxu0 0
        %1478 = vmatprep.mubr.bf16.mxu0 0
        %1479 = vmatmul.mubr.bf16.gmra.mrb[0].mxu0 %v1441
        %v1480 = vpop.f32.mrb[0].mxu0
        %v1481 = vadd.f32 0.0, %v1480
        %v1482 = vpop.f32.mrb[0].mxu0
        %v1483 = vpop.f32.mrb[0].mxu0
        %v1484 = vpop.f32.mrb[0].mxu0
        %1485 = vdwg.mxu0
        %v1486 = vmul.f32 %v1481, 0.17677669
        %v1487 = vsel %vm523, %v1486, -inf
        %v1488 = vsel %vm676, %v1487, -inf
        %1489 = vmax.xlane.f32.xlu0 %v1488
        %v1490 = vpop.xlane.xlu0 %1489
        %v1491 = vsub.f32 %v1487, %v1490
        %v1492 = vmul.f32 %v1491, 1.442695
        %v1493 = vpow.pop %v1492
        %v1494 = vsel %vm676, %v1493, 0.0
        %1495 = vadd.xlane.f32.xlu0 %v1494
        %v1496 = vpop.xlane.xlu0 %1495
        %v1497 = vrcp.pop %v1496
        %v1498 = vmul.f32 %v1493, %v1497
        %v1499 = vpack.c.bf16 %v1498, %v1498
        %v1500 = vsel %vm693, %v1423, 0.0
        %v1501 = vpack.c.bf16 %v1500, %v1500
        %v1502 = vsel %vm693, %v1433, 0.0
        %v1503 = vpack.c.bf16 %v1502, %v1502
        %v1505 = vsel %vm526, %v1501, 0
        %1507 = vmatprep.subr.bf16.mxu0 0
        %1508 = vmatpush1.bf16.xpose.msra.mxu0 %v1444
        %1509 = vmatprep.subr.bf16.mxu0 0
        %1510 = vmatpush1.bf16.xpose.msra.mxu0 0
        %1511 = vmatprep.subr.bf16.mxu0 0
        %1512 = vmatpush1.bf16.xpose.msra.mxu0 0
        %1513 = vmatprep.subr.bf16.mxu0 0
        %1514 = vmatpush1.bf16.xpose.msra.mxu0 0
        %1515 = vmatprep.subr.bf16.mxu0 0
        %1516 = vmatpush1.bf16.xpose.msra.mxu0 0
        %1517 = vmatprep.subr.bf16.mxu0 0
        %1518 = vmatpush1.bf16.xpose.msra.mxu0 0
        %1519 = vmatprep.subr.bf16.mxu0 0
        %1520 = vmatpush1.bf16.xpose.msra.mxu0 0
        %1521 = vmatprep.subr.bf16.mxu0 0
        %1522 = vmatpush1.bf16.xpose.msra.mxu0 0
        %1523 = vmatprep.subr.bf16.mxu0 0
        %1524 = vmatpush1.bf16.xpose.msra.mxu0 0
        %1525 = vmatprep.subr.bf16.mxu0 0
        %1526 = vmatpush1.bf16.xpose.msra.mxu0 0
        %1527 = vmatprep.subr.bf16.mxu0 0
        %1528 = vmatpush1.bf16.xpose.msra.mxu0 0
        %1529 = vmatprep.subr.bf16.mxu0 0
        %1530 = vmatpush1.bf16.xpose.msra.mxu0 0
        %1531 = vmatprep.subr.bf16.mxu0 0
        %1532 = vmatpush1.bf16.xpose.msra.mxu0 0
        %1533 = vmatprep.subr.bf16.mxu0 0
        %1534 = vmatpush1.bf16.xpose.msra.mxu0 0
        %1535 = vmatprep.subr.bf16.mxu0 0
        %1536 = vmatpush1.bf16.xpose.msra.mxu0 0
        %1537 = vmatprep.subr.bf16.mxu0 0
        %1538 = vmatpush1.bf16.xpose.msra.mxu0 0
        %1539 = vmatprep.mubr.bf16.mxu0 0
        %1540 = vmatmul.mubr.bf16.gmra.mrb[0].mxu0 %v1505
        %v1541 = vpop.f32.mrb[0].mxu0
        %v1542 = vadd.f32 0.0, %v1541
        %v1543 = vpop.f32.mrb[0].mxu0
        %v1544 = vpop.f32.mrb[0].mxu0
        %v1545 = vpop.f32.mrb[0].mxu0
        %1546 = vdwg.mxu0
        %v1547 = vmul.f32 %v1542, 0.17677669
        %v1548 = vsel %vm523, %v1547, -inf
        %v1549 = vsel %vm676, %v1548, -inf
        %1550 = vmax.xlane.f32.xlu0 %v1549
        %v1551 = vpop.xlane.xlu0 %1550
        %v1552 = vsub.f32 %v1548, %v1551
        %v1553 = vmul.f32 %v1552, 1.442695
        %v1554 = vpow.pop %v1553
        %v1555 = vsel %vm676, %v1554, 0.0
        %1556 = vadd.xlane.f32.xlu0 %v1555
        %v1557 = vpop.xlane.xlu0 %1556
        %v1558 = vrcp.pop %v1557
        %v1559 = vmul.f32 %v1554, %v1558
        %v1560 = vpack.c.bf16 %v1559, %v1559
        %v1562 = vsel %vm676, %v1560, 0
        %v1565 = vsel %vm758, %v1503, 0
        %1567 = vmatprep.subr.bf16.mxu0 0
        %1568 = vmatpush1.bf16.msra.mxu0 %v1565
        %1569 = vmatprep.subr.bf16.mxu0 0
        %1570 = vmatpush1.bf16.msra.mxu0 0
        %1571 = vmatprep.subr.bf16.mxu0 0
        %1572 = vmatpush1.bf16.msra.mxu0 0
        %1573 = vmatprep.subr.bf16.mxu0 0
        %1574 = vmatpush1.bf16.msra.mxu0 0
        %1575 = vmatprep.subr.bf16.mxu0 0
        %1576 = vmatpush1.bf16.msra.mxu0 0
        %1577 = vmatprep.subr.bf16.mxu0 0
        %1578 = vmatpush1.bf16.msra.mxu0 0
        %1579 = vmatprep.subr.bf16.mxu0 0
        %1580 = vmatpush1.bf16.msra.mxu0 0
        %1581 = vmatprep.subr.bf16.mxu0 0
        %1582 = vmatpush1.bf16.msra.mxu0 0
        %1583 = vmatprep.subr.bf16.mxu0 0
        %1584 = vmatpush1.bf16.msra.mxu0 0
        %1585 = vmatprep.subr.bf16.mxu0 0
        %1586 = vmatpush1.bf16.msra.mxu0 0
        %1587 = vmatprep.subr.bf16.mxu0 0
        %1588 = vmatpush1.bf16.msra.mxu0 0
        %1589 = vmatprep.subr.bf16.mxu0 0
        %1590 = vmatpush1.bf16.msra.mxu0 0
        %1591 = vmatprep.subr.bf16.mxu0 0
        %1592 = vmatpush1.bf16.msra.mxu0 0
        %1593 = vmatprep.subr.bf16.mxu0 0
        %1594 = vmatpush1.bf16.msra.mxu0 0
        %1595 = vmatprep.subr.bf16.mxu0 0
        %1596 = vmatpush1.bf16.msra.mxu0 0
        %1597 = vmatprep.subr.bf16.mxu0 0
        %1598 = vmatpush1.bf16.msra.mxu0 0
        %1599 = vmatprep.mubr.bf16.mxu0 0
        %1600 = vmatmul.mubr.bf16.gmra.mrb[0].mxu0 %v1562
        %v1601 = vpop.f32.mrb[0].mxu0
        %v1602 = vadd.f32 0.0, %v1601
        %v1603 = vpop.f32.mrb[0].mxu0
        %v1604 = vpop.f32.mrb[0].mxu0
        %v1605 = vpop.f32.mrb[0].mxu0
        %1606 = vdwg.mxu0
        %v1608 = vsel %vm676, %v1499, 0
        %v1611 = vsel %vm758, %v1436, 0
        %1613 = vmatprep.subr.bf16.mxu0 0
        %1614 = vmatpush1.bf16.msra.mxu0 %v1611
        %1615 = vmatprep.subr.bf16.mxu0 0
        %1616 = vmatpush1.bf16.msra.mxu0 0
        %1617 = vmatprep.subr.bf16.mxu0 0
        %1618 = vmatpush1.bf16.msra.mxu0 0
        %1619 = vmatprep.subr.bf16.mxu0 0
        %1620 = vmatpush1.bf16.msra.mxu0 0
        %1621 = vmatprep.subr.bf16.mxu0 0
        %1622 = vmatpush1.bf16.msra.mxu0 0
        %1623 = vmatprep.subr.bf16.mxu0 0
        %1624 = vmatpush1.bf16.msra.mxu0 0
        %1625 = vmatprep.subr.bf16.mxu0 0
        %1626 = vmatpush1.bf16.msra.mxu0 0
        %1627 = vmatprep.subr.bf16.mxu0 0
        %1628 = vmatpush1.bf16.msra.mxu0 0
        %1629 = vmatprep.subr.bf16.mxu0 0
        %1630 = vmatpush1.bf16.msra.mxu0 0
        %1631 = vmatprep.subr.bf16.mxu0 0
        %1632 = vmatpush1.bf16.msra.mxu0 0
        %1633 = vmatprep.subr.bf16.mxu0 0
        %1634 = vmatpush1.bf16.msra.mxu0 0
        %1635 = vmatprep.subr.bf16.mxu0 0
        %1636 = vmatpush1.bf16.msra.mxu0 0
        %1637 = vmatprep.subr.bf16.mxu0 0
        %1638 = vmatpush1.bf16.msra.mxu0 0
        %1639 = vmatprep.subr.bf16.mxu0 0
        %1640 = vmatpush1.bf16.msra.mxu0 0
        %1641 = vmatprep.subr.bf16.mxu0 0
        %1642 = vmatpush1.bf16.msra.mxu0 0
        %1643 = vmatprep.subr.bf16.mxu0 0
        %1644 = vmatpush1.bf16.msra.mxu0 0
        %1645 = vmatprep.mubr.bf16.mxu0 0
        %1646 = vmatmul.mubr.bf16.gmra.mrb[0].mxu0 %v1608
        %v1647 = vpop.f32.mrb[0].mxu0
        %v1648 = vadd.f32 %v1602, %v1647
        %v1649 = vpop.f32.mrb[0].mxu0
        %v1650 = vpop.f32.mrb[0].mxu0
        %v1651 = vpop.f32.mrb[0].mxu0
        %1652 = vdwg.mxu0
        %v1653 = vsel %vm852, %v1423, 0.0
        %v1654 = vpack.c.bf16 %v1653, %v1653
        %v1655 = vsel %vm852, %v1433, 0.0
        %v1656 = vpack.c.bf16 %v1655, %v1655
        %v1658 = vsel %vm526, %v1654, 0
        %1660 = vmatprep.subr.bf16.mxu0 0
        %1661 = vmatpush1.bf16.xpose.msra.mxu0 %v1444
        %1662 = vmatprep.subr.bf16.mxu0 0
        %1663 = vmatpush1.bf16.xpose.msra.mxu0 0
        %1664 = vmatprep.subr.bf16.mxu0 0
        %1665 = vmatpush1.bf16.xpose.msra.mxu0 0
        %1666 = vmatprep.subr.bf16.mxu0 0
        %1667 = vmatpush1.bf16.xpose.msra.mxu0 0
        %1668 = vmatprep.subr.bf16.mxu0 0
        %1669 = vmatpush1.bf16.xpose.msra.mxu0 0
        %1670 = vmatprep.subr.bf16.mxu0 0
        %1671 = vmatpush1.bf16.xpose.msra.mxu0 0
        %1672 = vmatprep.subr.bf16.mxu0 0
        %1673 = vmatpush1.bf16.xpose.msra.mxu0 0
        %1674 = vmatprep.subr.bf16.mxu0 0
        %1675 = vmatpush1.bf16.xpose.msra.mxu0 0
        %1676 = vmatprep.subr.bf16.mxu0 0
        %1677 = vmatpush1.bf16.xpose.msra.mxu0 0
        %1678 = vmatprep.subr.bf16.mxu0 0
        %1679 = vmatpush1.bf16.xpose.msra.mxu0 0
        %1680 = vmatprep.subr.bf16.mxu0 0
        %1681 = vmatpush1.bf16.xpose.msra.mxu0 0
        %1682 = vmatprep.subr.bf16.mxu0 0
        %1683 = vmatpush1.bf16.xpose.msra.mxu0 0
        %1684 = vmatprep.subr.bf16.mxu0 0
        %1685 = vmatpush1.bf16.xpose.msra.mxu0 0
        %1686 = vmatprep.subr.bf16.mxu0 0
        %1687 = vmatpush1.bf16.xpose.msra.mxu0 0
        %1688 = vmatprep.subr.bf16.mxu0 0
        %1689 = vmatpush1.bf16.xpose.msra.mxu0 0
        %1690 = vmatprep.subr.bf16.mxu0 0
        %1691 = vmatpush1.bf16.xpose.msra.mxu0 0
        %1692 = vmatprep.mubr.bf16.mxu0 0
        %1693 = vmatmul.mubr.bf16.gmra.mrb[0].mxu0 %v1658
        %v1694 = vpop.f32.mrb[0].mxu0
        %v1695 = vadd.f32 0.0, %v1694
        %v1696 = vpop.f32.mrb[0].mxu0
        %v1697 = vpop.f32.mrb[0].mxu0
        %v1698 = vpop.f32.mrb[0].mxu0
        %1699 = vdwg.mxu0
        %v1700 = vmul.f32 %v1695, 0.17677669
        %v1701 = vsel %vm523, %v1700, -inf
        %v1702 = vsel %vm676, %v1701, -inf
        %1703 = vmax.xlane.f32.xlu0 %v1702
        %v1704 = vpop.xlane.xlu0 %1703
        %v1705 = vsub.f32 %v1701, %v1704
        %v1706 = vmul.f32 %v1705, 1.442695
        %v1707 = vpow.pop %v1706
        %v1708 = vsel %vm676, %v1707, 0.0
        %1709 = vadd.xlane.f32.xlu0 %v1708
        %v1710 = vpop.xlane.xlu0 %1709
        %v1711 = vrcp.pop %v1710
        %v1712 = vmul.f32 %v1707, %v1711
        %v1713 = vpack.c.bf16 %v1712, %v1712
        %v1715 = vsel %vm676, %v1713, 0
        %v1718 = vsel %vm758, %v1656, 0
        %1720 = vmatprep.subr.bf16.mxu0 0
        %1721 = vmatpush1.bf16.msra.mxu0 %v1718
        %1722 = vmatprep.subr.bf16.mxu0 0
        %1723 = vmatpush1.bf16.msra.mxu0 0
        %1724 = vmatprep.subr.bf16.mxu0 0
        %1725 = vmatpush1.bf16.msra.mxu0 0
        %1726 = vmatprep.subr.bf16.mxu0 0
        %1727 = vmatpush1.bf16.msra.mxu0 0
        %1728 = vmatprep.subr.bf16.mxu0 0
        %1729 = vmatpush1.bf16.msra.mxu0 0
        %1730 = vmatprep.subr.bf16.mxu0 0
        %1731 = vmatpush1.bf16.msra.mxu0 0
        %1732 = vmatprep.subr.bf16.mxu0 0
        %1733 = vmatpush1.bf16.msra.mxu0 0
        %1734 = vmatprep.subr.bf16.mxu0 0
        %1735 = vmatpush1.bf16.msra.mxu0 0
        %1736 = vmatprep.subr.bf16.mxu0 0
        %1737 = vmatpush1.bf16.msra.mxu0 0
        %1738 = vmatprep.subr.bf16.mxu0 0
        %1739 = vmatpush1.bf16.msra.mxu0 0
        %1740 = vmatprep.subr.bf16.mxu0 0
        %1741 = vmatpush1.bf16.msra.mxu0 0
        %1742 = vmatprep.subr.bf16.mxu0 0
        %1743 = vmatpush1.bf16.msra.mxu0 0
        %1744 = vmatprep.subr.bf16.mxu0 0
        %1745 = vmatpush1.bf16.msra.mxu0 0
        %1746 = vmatprep.subr.bf16.mxu0 0
        %1747 = vmatpush1.bf16.msra.mxu0 0
        %1748 = vmatprep.subr.bf16.mxu0 0
        %1749 = vmatpush1.bf16.msra.mxu0 0
        %1750 = vmatprep.subr.bf16.mxu0 0
        %1751 = vmatpush1.bf16.msra.mxu0 0
        %1752 = vmatprep.mubr.bf16.mxu0 0
        %1753 = vmatmul.mubr.bf16.gmra.mrb[0].mxu0 %v1715
        %v1754 = vpop.f32.mrb[0].mxu0
        %v1755 = vadd.f32 0.0, %v1754
        %v1756 = vpop.f32.mrb[0].mxu0
        %v1757 = vpop.f32.mrb[0].mxu0
        %v1758 = vpop.f32.mrb[0].mxu0
        %1759 = vdwg.mxu0
        %v1760 = vadd.f32 %v1648, %v1755
        %v1761 = vsel %vm965, %v1423, 0.0
        %v1762 = vpack.c.bf16 %v1761, %v1761
        %v1763 = vsel %vm965, %v1433, 0.0
        %v1764 = vpack.c.bf16 %v1763, %v1763
        %v1766 = vsel %vm526, %v1762, 0
        %1768 = vmatprep.subr.bf16.mxu0 0
        %1769 = vmatpush1.bf16.xpose.msra.mxu0 %v1444
        %1770 = vmatprep.subr.bf16.mxu0 0
        %1771 = vmatpush1.bf16.xpose.msra.mxu0 0
        %1772 = vmatprep.subr.bf16.mxu0 0
        %1773 = vmatpush1.bf16.xpose.msra.mxu0 0
        %1774 = vmatprep.subr.bf16.mxu0 0
        %1775 = vmatpush1.bf16.xpose.msra.mxu0 0
        %1776 = vmatprep.subr.bf16.mxu0 0
        %1777 = vmatpush1.bf16.xpose.msra.mxu0 0
        %1778 = vmatprep.subr.bf16.mxu0 0
        %1779 = vmatpush1.bf16.xpose.msra.mxu0 0
        %1780 = vmatprep.subr.bf16.mxu0 0
        %1781 = vmatpush1.bf16.xpose.msra.mxu0 0
        %1782 = vmatprep.subr.bf16.mxu0 0
        %1783 = vmatpush1.bf16.xpose.msra.mxu0 0
        %1784 = vmatprep.subr.bf16.mxu0 0
        %1785 = vmatpush1.bf16.xpose.msra.mxu0 0
        %1786 = vmatprep.subr.bf16.mxu0 0
        %1787 = vmatpush1.bf16.xpose.msra.mxu0 0
        %1788 = vmatprep.subr.bf16.mxu0 0
        %1789 = vmatpush1.bf16.xpose.msra.mxu0 0
        %1790 = vmatprep.subr.bf16.mxu0 0
        %1791 = vmatpush1.bf16.xpose.msra.mxu0 0
        %1792 = vmatprep.subr.bf16.mxu0 0
        %1793 = vmatpush1.bf16.xpose.msra.mxu0 0
        %1794 = vmatprep.subr.bf16.mxu0 0
        %1795 = vmatpush1.bf16.xpose.msra.mxu0 0
        %1796 = vmatprep.subr.bf16.mxu0 0
        %1797 = vmatpush1.bf16.xpose.msra.mxu0 0
        %1798 = vmatprep.subr.bf16.mxu0 0
        %1799 = vmatpush1.bf16.xpose.msra.mxu0 0
        %1800 = vmatprep.mubr.bf16.mxu0 0
        %1801 = vmatmul.mubr.bf16.gmra.mrb[0].mxu0 %v1766
        %v1802 = vpop.f32.mrb[0].mxu0
        %v1803 = vadd.f32 0.0, %v1802
        %v1804 = vpop.f32.mrb[0].mxu0
        %v1805 = vpop.f32.mrb[0].mxu0
        %v1806 = vpop.f32.mrb[0].mxu0
        %1807 = vdwg.mxu0
        %v1808 = vmul.f32 %v1803, 0.17677669
        %v1809 = vsel %vm523, %v1808, -inf
        %v1810 = vsel %vm676, %v1809, -inf
        %1811 = vmax.xlane.f32.xlu0 %v1810
        %v1812 = vpop.xlane.xlu0 %1811
        %v1813 = vsub.f32 %v1809, %v1812
        %v1814 = vmul.f32 %v1813, 1.442695
        %v1815 = vpow.pop %v1814
        %v1816 = vsel %vm676, %v1815, 0.0
        %1817 = vadd.xlane.f32.xlu0 %v1816
        %v1818 = vpop.xlane.xlu0 %1817
        %v1819 = vrcp.pop %v1818
        %v1820 = vmul.f32 %v1815, %v1819
        %v1821 = vpack.c.bf16 %v1820, %v1820
        %v1823 = vsel %vm676, %v1821, 0
        %v1826 = vsel %vm758, %v1764, 0
        %1828 = vmatprep.subr.bf16.mxu0 0
        %1829 = vmatpush1.bf16.msra.mxu0 %v1826
        %1830 = vmatprep.subr.bf16.mxu0 0
        %1831 = vmatpush1.bf16.msra.mxu0 0
        %1832 = vmatprep.subr.bf16.mxu0 0
        %1833 = vmatpush1.bf16.msra.mxu0 0
        %1834 = vmatprep.subr.bf16.mxu0 0
        %1835 = vmatpush1.bf16.msra.mxu0 0
        %1836 = vmatprep.subr.bf16.mxu0 0
        %1837 = vmatpush1.bf16.msra.mxu0 0
        %1838 = vmatprep.subr.bf16.mxu0 0
        %1839 = vmatpush1.bf16.msra.mxu0 0
        %1840 = vmatprep.subr.bf16.mxu0 0
        %1841 = vmatpush1.bf16.msra.mxu0 0
        %1842 = vmatprep.subr.bf16.mxu0 0
        %1843 = vmatpush1.bf16.msra.mxu0 0
        %1844 = vmatprep.subr.bf16.mxu0 0
        %1845 = vmatpush1.bf16.msra.mxu0 0
        %1846 = vmatprep.subr.bf16.mxu0 0
        %1847 = vmatpush1.bf16.msra.mxu0 0
        %1848 = vmatprep.subr.bf16.mxu0 0
        %1849 = vmatpush1.bf16.msra.mxu0 0
        %1850 = vmatprep.subr.bf16.mxu0 0
        %1851 = vmatpush1.bf16.msra.mxu0 0
        %1852 = vmatprep.subr.bf16.mxu0 0
        %1853 = vmatpush1.bf16.msra.mxu0 0
        %1854 = vmatprep.subr.bf16.mxu0 0
        %1855 = vmatpush1.bf16.msra.mxu0 0
        %1856 = vmatprep.subr.bf16.mxu0 0
        %1857 = vmatpush1.bf16.msra.mxu0 0
        %1858 = vmatprep.subr.bf16.mxu0 0
        %1859 = vmatpush1.bf16.msra.mxu0 0
        %1860 = vmatprep.mubr.bf16.mxu0 0
        %1861 = vmatmul.mubr.bf16.gmra.mrb[0].mxu0 %v1823
        %v1862 = vpop.f32.mrb[0].mxu0
        %v1863 = vadd.f32 0.0, %v1862
        %v1864 = vpop.f32.mrb[0].mxu0
        %v1865 = vpop.f32.mrb[0].mxu0
        %v1866 = vpop.f32.mrb[0].mxu0
        %1867 = vdwg.mxu0
        %v1868 = vadd.f32 %v1760, %v1863
        %v1869 = vpack.c.bf16 %v1868, %v1868
        %s1870 = scalar_lea.vmem %s4, 16
        %v1871 = vld [vmem:[%s1870] sm:$0xf]
        %v1872 = vld [vmem:[%s1870 + $0x4] sm:$0xf]
        %v1873 = vld [vmem:[%s1870 + $0x8] sm:$0xf]
        %v1874 = vld [vmem:[%s1870 + $0xc] sm:$0xf]
        %v1875 = vld [vmem:[%s5 + $0x1] sm:$0x1]
        %v1876 = vlaneseq
        %v1877 = vshrl.u32 %v1876, 7
        %v1878 = vsub.s32 0, %v1877
        %v1879 = vrot.slane %v1875, %v1878
        %v1884 = vunpack.c.l.b16 %v1871
        %v1885 = vunpack.c.l.b16 %v1872
        %v1886 = vunpack.c.l.b16 %v1873
        %v1887 = vunpack.c.l.b16 %v1874
        %v1888 = vpack.c.b16 %v1885, %v1884
        %v1889 = vpack.c.b16 %v1887, %v1886
        %v1893 = vsel %vm526, %v1869, 0
        %1895 = vmatprep.subr.bf16.mxu0 0
        %1896 = vmatpush1.bf16.msra.mxu0 %v1888
        %1897 = vmatprep.subr.bf16.mxu0 0
        %1898 = vmatpush1.bf16.msra.mxu0 %v1889
        %1899 = vmatprep.subr.bf16.mxu0 0
        %1900 = vmatpush1.bf16.msra.mxu0 0
        %1901 = vmatprep.subr.bf16.mxu0 0
        %1902 = vmatpush1.bf16.msra.mxu0 0
        %1903 = vmatprep.subr.bf16.mxu0 0
        %1904 = vmatpush1.bf16.msra.mxu0 0
        %1905 = vmatprep.subr.bf16.mxu0 0
        %1906 = vmatpush1.bf16.msra.mxu0 0
        %1907 = vmatprep.subr.bf16.mxu0 0
        %1908 = vmatpush1.bf16.msra.mxu0 0
        %1909 = vmatprep.subr.bf16.mxu0 0
        %1910 = vmatpush1.bf16.msra.mxu0 0
        %1911 = vmatprep.subr.bf16.mxu0 0
        %1912 = vmatpush1.bf16.msra.mxu0 0
        %1913 = vmatprep.subr.bf16.mxu0 0
        %1914 = vmatpush1.bf16.msra.mxu0 0
        %1915 = vmatprep.subr.bf16.mxu0 0
        %1916 = vmatpush1.bf16.msra.mxu0 0
        %1917 = vmatprep.subr.bf16.mxu0 0
        %1918 = vmatpush1.bf16.msra.mxu0 0
        %1919 = vmatprep.subr.bf16.mxu0 0
        %1920 = vmatpush1.bf16.msra.mxu0 0
        %1921 = vmatprep.subr.bf16.mxu0 0
        %1922 = vmatpush1.bf16.msra.mxu0 0
        %1923 = vmatprep.subr.bf16.mxu0 0
        %1924 = vmatpush1.bf16.msra.mxu0 0
        %1925 = vmatprep.subr.bf16.mxu0 0
        %1926 = vmatpush1.bf16.msra.mxu0 0
        %1927 = vmatprep.mubr.bf16.mxu0 0
        %1928 = vmatmul.mubr.bf16.gmra.mrb[0].mxu0 %v1893
        %v1929 = vpop.f32.mrb[0].mxu0
        %v1930 = vadd.f32 %v1879, %v1929
        %v1931 = vpop.f32.mrb[0].mxu0
        %v1932 = vpop.f32.mrb[0].mxu0
        %v1933 = vpop.f32.mrb[0].mxu0
        %1934 = vdwg.mxu0
        %v1935 = vadd.f32 %v1341, %v1930
        %v1936 = vld [vmem:[%s6 + $0x1] sm:$0x1]
        %v1937 = vld [vmem:[%s7 + $0x1] sm:$0x1]
        %v1938 = vsel %vm526, %v1935, 0.0
        %1939 = vadd.xlane.f32.xlu0 %v1938
        %v1940 = vpop.xlane.xlu0 %1939
        %v1941 = vmul.f32 %v1940, %v530
        %v1942 = vsub.f32 %v1935, %v1941
        %v1943 = vmul.f32 %v1942, %v1942
        %v1944 = vsel %vm526, %v1943, 0.0
        %1945 = vadd.xlane.f32.xlu0 %v1944
        %v1946 = vpop.xlane.xlu0 %1945
        %v1947 = vmul.f32 %v1946, %v530
        %v1948 = vadd.f32 %v1947, 1e-05
        %v1949 = vrsqrt.pop %v1948
        %v1950 = vmul.f32 %v1942, %v1949
        %v1951 = vlaneseq
        %v1952 = vshrl.u32 %v1951, 7
        %v1953 = vsub.s32 0, %v1952
        %v1954 = vrot.slane %v1936, %v1953
        %v1955 = vmul.f32 %v1950, %v1954
        %v1956 = vlaneseq
        %v1957 = vshrl.u32 %v1956, 7
        %v1958 = vsub.s32 0, %v1957
        %v1959 = vrot.slane %v1937, %v1958
        %v1960 = vadd.f32 %v1955, %v1959
        %v1961 = vpack.c.bf16 %v1960, %v1960
        %s1962 = scalar_lea.vmem %s8, 16
        %v1963 = vld [vmem:[%s1962] sm:$0xf]
        %v1964 = vld [vmem:[%s1962 + $0x4] sm:$0xf]
        %v1965 = vld [vmem:[%s1962 + $0x8] sm:$0xf]
        %v1966 = vld [vmem:[%s1962 + $0xc] sm:$0xf]
        %v1967 = vld [vmem:[%s9 + $0x1] sm:$0x1]
        %v1968 = vlaneseq
        %v1969 = vshrl.u32 %v1968, 7
        %v1970 = vsub.s32 0, %v1969
        %v1971 = vrot.slane %v1967, %v1970
        %v1976 = vunpack.c.l.b16 %v1963
        %v1977 = vunpack.c.l.b16 %v1964
        %v1978 = vunpack.c.l.b16 %v1965
        %v1979 = vunpack.c.l.b16 %v1966
        %v1980 = vpack.c.b16 %v1977, %v1976
        %v1981 = vpack.c.b16 %v1979, %v1978
        %v1985 = vsel %vm526, %v1961, 0
        %1987 = vmatprep.subr.bf16.mxu0 0
        %1988 = vmatpush1.bf16.msra.mxu0 %v1980
        %1989 = vmatprep.subr.bf16.mxu0 0
        %1990 = vmatpush1.bf16.msra.mxu0 %v1981
        %1991 = vmatprep.subr.bf16.mxu0 0
        %1992 = vmatpush1.bf16.msra.mxu0 0
        %1993 = vmatprep.subr.bf16.mxu0 0
        %1994 = vmatpush1.bf16.msra.mxu0 0
        %1995 = vmatprep.subr.bf16.mxu0 0
        %1996 = vmatpush1.bf16.msra.mxu0 0
        %1997 = vmatprep.subr.bf16.mxu0 0
        %1998 = vmatpush1.bf16.msra.mxu0 0
        %1999 = vmatprep.subr.bf16.mxu0 0
        %2000 = vmatpush1.bf16.msra.mxu0 0
        %2001 = vmatprep.subr.bf16.mxu0 0
        %2002 = vmatpush1.bf16.msra.mxu0 0
        %2003 = vmatprep.subr.bf16.mxu0 0
        %2004 = vmatpush1.bf16.msra.mxu0 0
        %2005 = vmatprep.subr.bf16.mxu0 0
        %2006 = vmatpush1.bf16.msra.mxu0 0
        %2007 = vmatprep.subr.bf16.mxu0 0
        %2008 = vmatpush1.bf16.msra.mxu0 0
        %2009 = vmatprep.subr.bf16.mxu0 0
        %2010 = vmatpush1.bf16.msra.mxu0 0
        %2011 = vmatprep.subr.bf16.mxu0 0
        %2012 = vmatpush1.bf16.msra.mxu0 0
        %2013 = vmatprep.subr.bf16.mxu0 0
        %2014 = vmatpush1.bf16.msra.mxu0 0
        %2015 = vmatprep.subr.bf16.mxu0 0
        %2016 = vmatpush1.bf16.msra.mxu0 0
        %2017 = vmatprep.subr.bf16.mxu0 0
        %2018 = vmatpush1.bf16.msra.mxu0 0
        %2019 = vmatprep.mubr.bf16.mxu0 0
        %2020 = vmatmul.mubr.bf16.gmra.mrb[0].mxu0 %v1985
        %v2021 = vpop.f32.mrb[0].mxu0
        %v2022 = vadd.f32 %v1971, %v2021
        %v2023 = vpop.f32.mrb[0].mxu0
        %v2024 = vpop.f32.mrb[0].mxu0
        %v2025 = vpop.f32.mrb[0].mxu0
        %2026 = vdwg.mxu0
        %v2027 = vmax.f32 %v2022, 0.0
        %v2028 = vpack.c.bf16 %v2027, %v2027
        %s2029 = scalar_lea.vmem %s10, 64
        %v2030 = vld [vmem:[%s2029] sm:$0xf]
        %v2031 = vld [vmem:[%s2029 + $0x4] sm:$0xf]
        %v2032 = vld [vmem:[%s2029 + $0x8] sm:$0xf]
        %v2033 = vld [vmem:[%s2029 + $0xc] sm:$0xf]
        %v2034 = vld [vmem:[%s2029 + $0x10] sm:$0xf]
        %v2035 = vld [vmem:[%s2029 + $0x14] sm:$0xf]
        %v2036 = vld [vmem:[%s2029 + $0x18] sm:$0xf]
        %v2037 = vld [vmem:[%s2029 + $0x1c] sm:$0xf]
        %v2038 = vld [vmem:[%s2029 + $0x20] sm:$0xf]
        %v2039 = vld [vmem:[%s2029 + $0x24] sm:$0xf]
        %v2040 = vld [vmem:[%s2029 + $0x28] sm:$0xf]
        %v2041 = vld [vmem:[%s2029 + $0x2c] sm:$0xf]
        %v2042 = vld [vmem:[%s2029 + $0x30] sm:$0xf]
        %v2043 = vld [vmem:[%s2029 + $0x34] sm:$0xf]
        %v2044 = vld [vmem:[%s2029 + $0x38] sm:$0xf]
        %v2045 = vld [vmem:[%s2029 + $0x3c] sm:$0xf]
        %v2046 = vld [vmem:[%s11 + $0x1] sm:$0x1]
        %v2047 = vlaneseq
        %v2048 = vshrl.u32 %v2047, 7
        %v2049 = vsub.s32 0, %v2048
        %v2050 = vrot.slane %v2046, %v2049
        %v2067 = vunpack.c.l.b16 %v2030
        %v2068 = vunpack.c.l.b16 %v2031
        %v2069 = vunpack.c.l.b16 %v2032
        %v2070 = vunpack.c.l.b16 %v2033
        %v2071 = vunpack.c.l.b16 %v2034
        %v2072 = vunpack.c.l.b16 %v2035
        %v2073 = vunpack.c.l.b16 %v2036
        %v2074 = vunpack.c.l.b16 %v2037
        %v2075 = vunpack.c.l.b16 %v2038
        %v2076 = vunpack.c.l.b16 %v2039
        %v2077 = vunpack.c.l.b16 %v2040
        %v2078 = vunpack.c.l.b16 %v2041
        %v2079 = vunpack.c.l.b16 %v2042
        %v2080 = vunpack.c.l.b16 %v2043
        %v2081 = vunpack.c.l.b16 %v2044
        %v2082 = vunpack.c.l.b16 %v2045
        %v2083 = vpack.c.b16 %v2068, %v2067
        %v2084 = vpack.c.b16 %v2070, %v2069
        %v2085 = vpack.c.b16 %v2072, %v2071
        %v2086 = vpack.c.b16 %v2074, %v2073
        %v2087 = vpack.c.b16 %v2076, %v2075
        %v2088 = vpack.c.b16 %v2078, %v2077
        %v2089 = vpack.c.b16 %v2080, %v2079
        %v2090 = vpack.c.b16 %v2082, %v2081
        %2099 = vmatprep.subr.bf16.mxu0 0
        %2100 = vmatpush1.bf16.msra.mxu0 %v2083
        %2101 = vmatprep.subr.bf16.mxu0 0
        %2102 = vmatpush1.bf16.msra.mxu0 %v2084
        %2103 = vmatprep.subr.bf16.mxu0 0
        %2104 = vmatpush1.bf16.msra.mxu0 %v2085
        %2105 = vmatprep.subr.bf16.mxu0 0
        %2106 = vmatpush1.bf16.msra.mxu0 %v2086
        %2107 = vmatprep.subr.bf16.mxu0 0
        %2108 = vmatpush1.bf16.msra.mxu0 %v2087
        %2109 = vmatprep.subr.bf16.mxu0 0
        %2110 = vmatpush1.bf16.msra.mxu0 %v2088
        %2111 = vmatprep.subr.bf16.mxu0 0
        %2112 = vmatpush1.bf16.msra.mxu0 %v2089
        %2113 = vmatprep.subr.bf16.mxu0 0
        %2114 = vmatpush1.bf16.msra.mxu0 %v2090
        %2115 = vmatprep.subr.bf16.mxu0 0
        %2116 = vmatpush1.bf16.msra.mxu0 0
        %2117 = vmatprep.subr.bf16.mxu0 0
        %2118 = vmatpush1.bf16.msra.mxu0 0
        %2119 = vmatprep.subr.bf16.mxu0 0
        %2120 = vmatpush1.bf16.msra.mxu0 0
        %2121 = vmatprep.subr.bf16.mxu0 0
        %2122 = vmatpush1.bf16.msra.mxu0 0
        %2123 = vmatprep.subr.bf16.mxu0 0
        %2124 = vmatpush1.bf16.msra.mxu0 0
        %2125 = vmatprep.subr.bf16.mxu0 0
        %2126 = vmatpush1.bf16.msra.mxu0 0
        %2127 = vmatprep.subr.bf16.mxu0 0
        %2128 = vmatpush1.bf16.msra.mxu0 0
        %2129 = vmatprep.subr.bf16.mxu0 0
        %2130 = vmatpush1.bf16.msra.mxu0 0
        %2131 = vmatprep.mubr.bf16.mxu0 0
        %2132 = vmatmul.mubr.bf16.gmra.mrb[0].mxu0 %v2028
        %v2133 = vpop.f32.mrb[0].mxu0
        %v2134 = vadd.f32 %v2050, %v2133
        %v2135 = vpop.f32.mrb[0].mxu0
        %v2136 = vpop.f32.mrb[0].mxu0
        %v2137 = vpop.f32.mrb[0].mxu0
        %2138 = vdwg.mxu0
        %v2139 = vadd.f32 %v1935, %v2134
        %v2140 = vld [vmem:[%s12] sm:$0x1]
        %v2141 = vld [vmem:[%s13] sm:$0x1]
        %v2142 = vsel %vm526, %v2139, 0.0
        %2143 = vadd.xlane.f32.xlu0 %v2142
        %v2144 = vpop.xlane.xlu0 %2143
        %v2145 = vmul.f32 %v2144, %v530
        %v2146 = vsub.f32 %v2139, %v2145
        %v2147 = vmul.f32 %v2146, %v2146
        %v2148 = vsel %vm526, %v2147, 0.0
        %2149 = vadd.xlane.f32.xlu0 %v2148
        %v2150 = vpop.xlane.xlu0 %2149
        %v2151 = vmul.f32 %v2150, %v530
        %v2152 = vadd.f32 %v2151, 1e-05
        %v2153 = vrsqrt.pop %v2152
        %v2154 = vmul.f32 %v2146, %v2153
        %v2156 = vlaneseq
        %v2157 = vshrl.u32 %v2156, 7
        %v2158 = vsub.s32 0, %v2157
        %v2159 = vrot.slane %v2140, %v2158
        %v2161 = vmul.f32 %v2154, %v2159
        %v2163 = vlaneseq
        %v2164 = vshrl.u32 %v2163, 7
        %v2165 = vsub.s32 0, %v2164
        %v2166 = vrot.slane %v2141, %v2165
        %v2168 = vadd.f32 %v2161, %v2166
        %v2169 = vpack.c.bf16 %v2168, %v2168
        %v2170 = vld [vmem:[%s14] sm:$0xf]
        %v2171 = vld [vmem:[%s14 + $0x4] sm:$0xf]
        %v2172 = vld [vmem:[%s14 + $0x8] sm:$0xf]
        %v2173 = vld [vmem:[%s14 + $0xc] sm:$0xf]
        %v2174 = vld [vmem:[%s15] sm:$0x1]
        %v2176 = vlaneseq
        %v2177 = vshrl.u32 %v2176, 7
        %v2178 = vsub.s32 0, %v2177
        %v2179 = vrot.slane %v2174, %v2178
        %v2185 = vunpack.c.l.b16 %v2170
        %v2186 = vunpack.c.l.b16 %v2171
        %v2187 = vunpack.c.l.b16 %v2172
        %v2188 = vunpack.c.l.b16 %v2173
        %v2189 = vpack.c.b16 %v2186, %v2185
        %v2190 = vpack.c.b16 %v2188, %v2187
        %v2194 = vsel %vm526, %v2169, 0
        %2196 = vmatprep.subr.bf16.mxu0 0
        %2197 = vmatpush1.bf16.msra.mxu0 %v2189
        %2198 = vmatprep.subr.bf16.mxu0 0
        %2199 = vmatpush1.bf16.msra.mxu0 %v2190
        %2200 = vmatprep.subr.bf16.mxu0 0
        %2201 = vmatpush1.bf16.msra.mxu0 0
        %2202 = vmatprep.subr.bf16.mxu0 0
        %2203 = vmatpush1.bf16.msra.mxu0 0
        %2204 = vmatprep.subr.bf16.mxu0 0
        %2205 = vmatpush1.bf16.msra.mxu0 0
        %2206 = vmatprep.subr.bf16.mxu0 0
        %2207 = vmatpush1.bf16.msra.mxu0 0
        %2208 = vmatprep.subr.bf16.mxu0 0
        %2209 = vmatpush1.bf16.msra.mxu0 0
        %2210 = vmatprep.subr.bf16.mxu0 0
        %2211 = vmatpush1.bf16.msra.mxu0 0
        %2212 = vmatprep.subr.bf16.mxu0 0
        %2213 = vmatpush1.bf16.msra.mxu0 0
        %2214 = vmatprep.subr.bf16.mxu0 0
        %2215 = vmatpush1.bf16.msra.mxu0 0
        %2216 = vmatprep.subr.bf16.mxu0 0
        %2217 = vmatpush1.bf16.msra.mxu0 0
        %2218 = vmatprep.subr.bf16.mxu0 0
        %2219 = vmatpush1.bf16.msra.mxu0 0
        %2220 = vmatprep.subr.bf16.mxu0 0
        %2221 = vmatpush1.bf16.msra.mxu0 0
        %2222 = vmatprep.subr.bf16.mxu0 0
        %2223 = vmatpush1.bf16.msra.mxu0 0
        %2224 = vmatprep.subr.bf16.mxu0 0
        %2225 = vmatpush1.bf16.msra.mxu0 0
        %2226 = vmatprep.subr.bf16.mxu0 0
        %2227 = vmatpush1.bf16.msra.mxu0 0
        %2228 = vmatprep.mubr.bf16.mxu0 0
        %2229 = vmatmul.mubr.bf16.gmra.mrb[0].mxu0 %v2194
        %v2230 = vpop.f32.mrb[0].mxu0
        %v2231 = vadd.f32 %v2179, %v2230
        %v2232 = vpop.f32.mrb[0].mxu0
        %v2233 = vpop.f32.mrb[0].mxu0
        %v2234 = vpop.f32.mrb[0].mxu0
        %2235 = vdwg.mxu0
        %2236 = vst [vmem:[%s512] sm:$0xff] %v2231
        %s2237 = sand.u32 %s379, 1
        %s2238 = scalar_lea.sflag [#allocation3], %s2237
        %s2239 = sand.u32 %s379, 1
        %s2240 = smul.addr %s2239, 8
        %s2241 = scalar_lea.vmem [#allocation2], %s2240
        // Predicated region
        $region85: #{tpu_custom_call.1} parent=83 // pred_check
          %p2242 = pneg %p389
        $region86: #{tpu_custom_call.1} parent=83 // pred_check_branch
          %2244 = sbr.rel (%p2242) target = $region88
        $region87: #{tpu_custom_call.1} parent=83 // pred_region
          %s2246 = ssub.s32 128, 128
          %2247 = vsyncadd %s2238, %s2246
          %s2248 = smul.addr %s30, 128
          %s2249 = scalar_lea.hbm %s16, %s2248
          %s2251 = sshll.u32 %s2241, 4
          %s2252 = int_to_ptr.vmem [resolvable:$true] %s2251
          %2254 = dma.vmem_to_hbm [thread:$0]  %s2252, 128, %s2249, %s2238
        $region88: #{tpu_custom_call.1} parent=83 // pred_fallthru
          _
      $region84: #{tpu_custom_call.1} parent=5 // pred_fallthru
        _
      %p2255 = scmp.le.s32.totalorder 2, %s25
      // Predicated region
      $region89: #{tpu_custom_call.1} parent=5 // pred_check
        %p2256 = pneg %p2255
      $region90: #{tpu_custom_call.1} parent=5 // pred_check_branch
        %2258 = sbr.rel (%p2256) target = $region92
      $region91: #{tpu_custom_call.1} parent=5 // pred_region
        %s2259 = ssub.s32 %s25, 2
        // Predicated region
        $region93: #{tpu_custom_call.1} parent=91 // pred_check
          %p2260 = pneg %p395
        $region94: #{tpu_custom_call.1} parent=91 // pred_check_branch
          %2262 = sbr.rel (%p2260) target = $region96
        $region95: #{tpu_custom_call.1} parent=91 // pred_region
          %s2263 = sand.u32 %s380, 1
          %s2264 = scalar_lea.sflag [#allocation3], %s2263
          %s2265 = sand.u32 %s380, 1
          %s2266 = smul.addr %s2265, 8
          %s2267 = scalar_lea.vmem [#allocation2], %s2266
          %2268 = dma.done %s2264, 128
        $region96: #{tpu_custom_call.1} parent=91 // pred_fallthru
          _
      $region92: #{tpu_custom_call.1} parent=5 // pred_fallthru
        _
    $region6: #{tpu_custom_call.1} parent=1 // loop_footer
      %s29 = sadd.s32 1, %s25
    $region7: #{tpu_custom_call.1} parent=1 // loop_footer_branch
      %24 = sbr.rel target = $region3
    $region8: #{tpu_custom_call.1} parent=1 // loop_exit
      _
    %2269 = vsyncpa [#allocation3], 1
    %s2270 = scalar_lea.sflag [#allocation3], 1
    %2271 = vsyncpa %s2270, 1

</llo_original>
